<compile_context>
chip_gen: v7x
topology: tpu7x:2x2x1
jax: 0.10.0
libtpu: 0.0.40
codegen_flags: <defaults>
</compile_context>

<pallas_src>
import jax
import jax.numpy as jnp
from jax import lax
from jax.experimental import pallas as pl
from jax.experimental.pallas import tpu as pltpu

# Small, self-consistent model dims (module defaults scaled down).
VOCAB = 50
VOCAB_PAD = 128        # lane-dense one-hot width (>= VOCAB)
EMB = 32               # embedding_dim
HID = 16               # hidden_size
D2 = 2 * HID           # bidirectional feature width
NUM_LAYERS = 2
NUM_CLASSES = 3
GATES = 8 * HID        # fwd+rev gates packed -> exactly 128 lanes
OUT_PAD = 128          # lane-dense logits output width (sliced to NUM_CLASSES)
BATCH_TILE = 8         # f32 sublane count
SEQ = 8                # example sequence length


# ----------------------------------------------------------------------------
# Fused kernel: embedding (one-hot MXU), 2 bidirectional LSTM layers, masked
# attention pooling, fc1/relu, layernorm, fc2.  Everything stays in VMEM/vregs.
# ----------------------------------------------------------------------------
def _fused_lstm_kernel(ids_ref, mask_ref, embw0_ref, whh0_ref,
                       wih1_ref, whh1_ref, fc1w_ref, fc2w_ref, vecs_ref,
                       out_ref):
    Bt, T = ids_ref.shape
    H = HID

    # ---- packed small parameter vectors: one (8,128) f32 block, sliced here ---
    vecs = vecs_ref[...]
    b0   = vecs[0:1, :]              # layer-0 gate bias (b_ih + b_hh), (1,128)
    b1   = vecs[1:2, :]              # layer-1 gate bias
    wa   = vecs[2:3, 0:D2]           # attention weight (1, 2H)
    ab   = vecs[3:4, 0:1]            # attention bias   (1, 1)
    bf1  = vecs[4:5, 0:H]            # fc1 bias         (1, H)
    g_ln = vecs[5:6, 0:H]            # layernorm gamma
    b_ln = vecs[6:7, 0:H]            # layernorm beta
    b2   = vecs[7:8, :]              # fc2 bias, zero-padded to 128 lanes

    # Lane masks for the packed gate layout [i_f i_r | f_f f_r | g_f g_r | o_f o_r]
    lane_g = lax.broadcasted_iota(jnp.int32, (Bt, GATES), 1)
    fwd_lane = (lane_g % D2) < H                    # forward-direction gate lanes
    lane_h = lax.broadcasted_iota(jnp.int32, (Bt, D2), 1)
    fwd_half = lane_h < H                           # forward half of a (2H) output

    def run_recurrence(gx_steps, whh):
        """Serial bidirectional LSTM recurrence.

        gx_steps[t]: (Bt, 128) input pre-activations with the bias added and the
        fwd/rev time alignment already resolved (fwd lanes from x[t], rev lanes
        from x[T-1-t]), so the serial loop carries no VMEM traffic / selects.
        Returns the per-time-step merged (Bt, 2H) outputs (register values).
        """
        h = jnp.zeros((Bt, D2), jnp.float32)
        c = jnp.zeros((Bt, D2), jnp.float32)
        h_steps = []
        # Fully unrolled: T is small & static (back off to lax.fori_loop when
        # BATCH_TILE is raised and vreg pressure grows).
        for t in range(T):
            g = gx_steps[t]
            if t > 0:                                # h == 0 at t == 0
                g = g + jnp.dot(h.astype(jnp.bfloat16), whh,
                                preferred_element_type=jnp.float32)
            sig = jax.nn.sigmoid(g)                  # one full-width EUP pass
            i_g = sig[:, 0 * D2:1 * D2]
            f_g = sig[:, 1 * D2:2 * D2]
            o_g = sig[:, 3 * D2:4 * D2]
            g_g = jnp.tanh(g[:, 2 * D2:3 * D2])      # tanh only on candidate lanes
            c = f_g * c + i_g * g_g
            h = o_g * jnp.tanh(c)
            h_steps.append(h)
        # Merge fwd (time t) and rev (time T-1-t) halves -- off the serial path.
        return [jnp.where(fwd_half, h_steps[t], h_steps[T - 1 - t])
                for t in range(T)]

    # -------------- layer 0: token ids -> bidirectional hidden ----------------
    # Embedding lookup fused with the layer-0 input projection (exact fusion):
    #   one_hot(id) @ (emb @ W_ih0)  ==  W_ih0 @ emb[id]
    ids = ids_ref[...]                               # (Bt, T) int32, batch-first
    vocab_iota = lax.broadcasted_iota(jnp.int32, (Bt, VOCAB_PAD), 1)
    embw0 = embw0_ref[...]                           # (VOCAB_PAD, 128) bf16
    gxf0 = []
    for t in range(T):
        onehot = jnp.where(ids[:, t:t + 1] == vocab_iota, 1.0, 0.0)
        gxf0.append(jnp.dot(onehot.astype(jnp.bfloat16), embw0,
                            preferred_element_type=jnp.float32))
    # Resolve fwd/rev time alignment once, in the parallel precompute.
    gx0_steps = [jnp.where(fwd_lane, gxf0[t], gxf0[T - 1 - t]) + b0
                 for t in range(T)]
    h1 = run_recurrence(gx0_steps, whh0_ref[...])
    # (inter-layer LSTM dropout: identity in eval mode)

    # -------------- layer 1: (Bt, 2H) per step -> bidirectional hidden --------
    wih1 = wih1_ref[...]                             # (2H, 128) bf16
    gxf1 = [jnp.dot(h1[t].astype(jnp.bfloat16), wih1,
                    preferred_element_type=jnp.float32) for t in range(T)]
    gx1_steps = [jnp.where(fwd_lane, gxf1[t], gxf1[T - 1 - t]) + b1
                 for t in range(T)]
    h2 = run_recurrence(gx1_steps, whh1_ref[...])

    # -------- masked attention pooling (softmax over the lane axis = T) -------
    lane_t = lax.broadcasted_iota(jnp.int32, (Bt, T), 1)
    s = jnp.zeros((Bt, T), jnp.float32)
    for t in range(T):
        col = jnp.sum(h2[t] * wa, axis=-1, keepdims=True) + ab   # (Bt, 1)
        s = jnp.where(lane_t == t, col, s)
    s = jnp.where(mask_ref[...] > 0, s, jnp.float32(-1e30))      # masked_fill(-inf)
    s = s - jnp.max(s, axis=-1, keepdims=True)
    e = jnp.exp(s)
    w = e / jnp.sum(e, axis=-1, keepdims=True)                   # (Bt, T)
    ctx = jnp.zeros((Bt, D2), jnp.float32)
    for t in range(T):
        ctx = ctx + w[:, t:t + 1] * h2[t]                        # (Bt, 2H)

    # ------- dropout(id) -> fc1 + relu -> layernorm -> dropout(id) -> fc2 -----
    x1 = jnp.dot(ctx.astype(jnp.bfloat16), fc1w_ref[...],
                 preferred_element_type=jnp.float32) + bf1
    x1 = jnp.maximum(x1, 0.0)                                    # (Bt, H)
    mu = jnp.mean(x1, axis=-1, keepdims=True)
    var = jnp.mean(jnp.square(x1 - mu), axis=-1, keepdims=True)
    xn = (x1 - mu) * lax.rsqrt(var + 1e-5) * g_ln + b_ln
    out_ref[...] = jnp.dot(xn.astype(jnp.bfloat16), fc2w_ref[...],
                           preferred_element_type=jnp.float32) + b2


def _fused_call(ids, mask, kp):
    Bp, T = ids.shape
    BT = BATCH_TILE
    assert Bp % BT == 0

    def wspec(a):
        return pl.BlockSpec(a.shape, lambda b: (0, 0))

    weights = (kp["embW0"], kp["whh0"], kp["wih1"], kp["whh1"],
               kp["fc1_w"], kp["fc2_w"], kp["vecs"])

    return pl.pallas_call(
        _fused_lstm_kernel,
        out_shape=jax.ShapeDtypeStruct((Bp, OUT_PAD), jnp.float32),
        grid_spec=pltpu.PrefetchScalarGridSpec(
            num_scalar_prefetch=0,
            grid=(Bp // BT,),                                  # batch tiles
            in_specs=[
                pl.BlockSpec((BT, T), lambda b: (b, 0)),       # token ids (batch-first)
                pl.BlockSpec((BT, T), lambda b: (b, 0)),       # attention mask (batch-first)
                *[wspec(w) for w in weights],
            ],
            out_specs=pl.BlockSpec((BT, OUT_PAD), lambda b: (b, 0)),
        ),
        compiler_params=pltpu.CompilerParams(
            dimension_semantics=("parallel",)),                # megacore / v7x friendly
    )(ids, mask, *weights)


# ----------------------------------------------------------------------------
# Full forward pass.  Only a tiny (B,T) int pad + the final (B,3) slice remain
# in XLA; everything else (embedding included) runs inside the single kernel.
# ----------------------------------------------------------------------------
def lstm_model_forward(params, input_ids, attention_mask):
    kp = params["kernel"]
    B, _ = input_ids.shape
    Bp = pl.cdiv(B, BATCH_TILE) * BATCH_TILE
    ids = input_ids.astype(jnp.int32)
    mask = attention_mask.astype(jnp.int32)
    if Bp != B:
        ids = jnp.pad(ids, ((0, Bp - B), (0, 0)))
        mask = jnp.pad(mask, ((0, Bp - B), (0, 0)))
    logits_pad = _fused_call(ids, mask, kp)                      # (Bp, 128)
    # TODO(synk): the final [:B, :NUM_CLASSES] slice stays in XLA; the kernel
    # keeps a lane-dense 128-wide store instead of a 3-wide masked store.
    return logits_pad[:B, :NUM_CLASSES]


# ----------------------------------------------------------------------------
# Parameter init: PyTorch-layout synthetic weights, packed for the kernel.
# ----------------------------------------------------------------------------
def _pack_bidir_weights(fwd, rev, d_in):
    """Pack per-direction PyTorch-layout LSTM weights into the gate-major,
    direction-minor (d_in,128) / (2H,128) / (1,128) kernel layout."""
    H = HID
    wih = jnp.zeros((d_in, GATES), jnp.float32)
    whh = jnp.zeros((D2, GATES), jnp.float32)         # block-diagonal per direction
    b = jnp.zeros((1, GATES), jnp.float32)
    for k in range(4):                                # PyTorch gate order i, f, g, o
        rows = slice(k * H, (k + 1) * H)
        cf = slice(2 * k * H, 2 * k * H + H)          # fwd columns of gate k
        cr = slice(2 * k * H + H, 2 * (k + 1) * H)    # rev columns of gate k
        wih = wih.at[:, cf].set(fwd["w_ih"][rows].T)
        wih = wih.at[:, cr].set(rev["w_ih"][rows].T)
        whh = whh.at[0:H, cf].set(fwd["w_hh"][rows].T)
        whh = whh.at[H:D2, cr].set(rev["w_hh"][rows].T)
        b = b.at[0, cf].set(fwd["b"][rows])
        b = b.at[0, cr].set(rev["b"][rows])
    return wih, whh, b


def init_params(key):
    keys = iter(jax.random.split(key, 64))

    def nrm(shape, scale=0.1):
        return (scale * jax.random.normal(next(keys), shape)).astype(jnp.float32)

    emb = nrm((VOCAB, EMB)).at[0].set(0.0)            # padding_idx = 0
    emb_pad = jnp.zeros((VOCAB_PAD, EMB), jnp.float32).at[:VOCAB].set(emb)

    packed = []
    d_in = EMB
    for _ in range(NUM_LAYERS):
        dirs = {}
        for d in ("f", "r"):                          # forward / reverse direction
            dirs[d] = {
                "w_ih": nrm((4 * HID, d_in)),         # PyTorch (4H, D_in)
                "w_hh": nrm((4 * HID, HID)),          # PyTorch (4H, H)
                "b": nrm((4 * HID,)) + nrm((4 * HID,)),   # b_ih + b_hh
            }
        packed.append(_pack_bidir_weights(dirs["f"], dirs["r"], d_in))
        d_in = D2                                     # next layer consumes bidir concat

    att_w = nrm((1, D2))
    att_b = nrm((1,))
    fc1_w = nrm((HID, D2))                            # PyTorch (out, in)
    fc1_b = nrm((HID,))
    fc2_w = nrm((NUM_CLASSES, HID))
    fc2_b = nrm((NUM_CLASSES,))

    # Fuse the embedding table into the layer-0 input projection (exact, in f32).
    embW0 = emb_pad @ packed[0][0]                    # (VOCAB_PAD, 128)

    # Pack the 8 tiny parameter vectors into one (8,128) f32 block (one DMA).
    vecs = jnp.zeros((8, 128), jnp.float32)
    vecs = vecs.at[0, :].set(packed[0][2][0])                  # b0
    vecs = vecs.at[1, :].set(packed[1][2][0])                  # b1
    vecs = vecs.at[2, :D2].set(att_w[0])                       # attention weight
    vecs = vecs.at[3, 0].set(att_b[0])                         # attention bias
    vecs = vecs.at[4, :HID].set(fc1_b)                         # fc1 bias
    vecs = vecs.at[5, :HID].set(1.0)                           # layernorm gamma
    vecs = vecs.at[6, :HID].set(0.0)                           # layernorm beta
    vecs = vecs.at[7, :NUM_CLASSES].set(fc2_b)                 # fc2 bias

    bf16 = jnp.bfloat16                               # MXU operands only; gate math f32
    kp = {
        "embW0": embW0.astype(bf16),
        "whh0": packed[0][1].astype(bf16),
        "wih1": packed[1][0].astype(bf16),
        "whh1": packed[1][1].astype(bf16),
        "fc1_w": fc1_w.T.astype(bf16),                          # (2H, H)
        "fc2_w": jnp.zeros((HID, OUT_PAD), jnp.float32)
                    .at[:, :NUM_CLASSES].set(fc2_w.T).astype(bf16),
        "vecs": vecs,
    }
    return {"kernel": kp}


if __name__ == "__main__":
    B, T = 2, SEQ
    key = jax.random.PRNGKey(0)
    k_ids, k_params = jax.random.split(key)

    params = init_params(k_params)

    # token ids in [1, VOCAB), with the second sequence padded after length 5
    input_ids = jax.random.randint(k_ids, (B, T), 1, VOCAB).astype(jnp.int32)
    lengths = jnp.array([T, 5], dtype=jnp.int32)
    pos = jnp.arange(T)[None, :]
    attention_mask = (pos < lengths[:, None]).astype(jnp.int32)   # (B, T)
    input_ids = jnp.where(attention_mask > 0, input_ids, 0)       # pad -> id 0

    logits = jax.jit(lstm_model_forward)(params, input_ids, attention_mask)
    logits = jax.block_until_ready(logits)

    assert logits.shape == (B, NUM_CLASSES), logits.shape
    assert bool(jnp.all(jnp.isfinite(logits)))
    print("KERNEL_OK")
</pallas_src>

<mosaic_0001>
module attributes {stable_mosaic.version = 11 : i64} {
  func.func @_fused_lstm_kernel(%arg0: i32, %arg1: memref<8x8xi32, #tpu.memory_space<vmem>>, %arg2: memref<8x8xi32, #tpu.memory_space<vmem>>, %arg3: memref<128x128xbf16, #tpu.memory_space<vmem>>, %arg4: memref<32x128xbf16, #tpu.memory_space<vmem>>, %arg5: memref<32x128xbf16, #tpu.memory_space<vmem>>, %arg6: memref<32x128xbf16, #tpu.memory_space<vmem>>, %arg7: memref<32x16xbf16, #tpu.memory_space<vmem>>, %arg8: memref<16x128xbf16, #tpu.memory_space<vmem>>, %arg9: memref<8x128xf32, #tpu.memory_space<vmem>>, %arg10: memref<8x128xf32, #tpu.memory_space<vmem>>) attributes {dimension_semantics = [#tpu.dimension_semantics<parallel>], iteration_bounds = array<i64: 1>, scalar_prefetch = 0 : i64, scratch_operands = 0 : i64, tpu.core_type = #tpu.core_type<tc>, window_params = [{transform_indices = @transform_0, window_bounds = array<i64: 8, 8>}, {transform_indices = @transform_1, window_bounds = array<i64: 8, 8>}, {pipeline_mode = #tpu.pipeline_mode<synchronous>, transform_indices = @transform_2, window_bounds = array<i64: 128, 128>}, {pipeline_mode = #tpu.pipeline_mode<synchronous>, transform_indices = @transform_3, window_bounds = array<i64: 32, 128>}, {pipeline_mode = #tpu.pipeline_mode<synchronous>, transform_indices = @transform_4, window_bounds = array<i64: 32, 128>}, {pipeline_mode = #tpu.pipeline_mode<synchronous>, transform_indices = @transform_5, window_bounds = array<i64: 32, 128>}, {pipeline_mode = #tpu.pipeline_mode<synchronous>, transform_indices = @transform_6, window_bounds = array<i64: 32, 16>}, {pipeline_mode = #tpu.pipeline_mode<synchronous>, transform_indices = @transform_7, window_bounds = array<i64: 16, 128>}, {pipeline_mode = #tpu.pipeline_mode<synchronous>, transform_indices = @transform_8, window_bounds = array<i64: 8, 128>}, {transform_indices = @transform_9, window_bounds = array<i64: 8, 128>}]} {
    %c0 = arith.constant 0 : index
    %c0_0 = arith.constant 0 : index
    %0 = vector.load %arg9[%c0, %c0_0] : memref<8x128xf32, #tpu.memory_space<vmem>>, vector<8x128xf32>
    %1 = vector.extract_strided_slice %0 {offsets = [0, 0], sizes = [1, 128], strides = [1, 1]} : vector<8x128xf32> to vector<1x128xf32>
    %2 = vector.extract_strided_slice %0 {offsets = [1, 0], sizes = [1, 128], strides = [1, 1]} : vector<8x128xf32> to vector<1x128xf32>
    %3 = vector.extract_strided_slice %0 {offsets = [2, 0], sizes = [1, 32], strides = [1, 1]} : vector<8x128xf32> to vector<1x32xf32>
    %4 = vector.extract_strided_slice %0 {offsets = [3, 0], sizes = [1, 1], strides = [1, 1]} : vector<8x128xf32> to vector<1x1xf32>
    %5 = vector.extract_strided_slice %0 {offsets = [4, 0], sizes = [1, 16], strides = [1, 1]} : vector<8x128xf32> to vector<1x16xf32>
    %6 = vector.extract_strided_slice %0 {offsets = [5, 0], sizes = [1, 16], strides = [1, 1]} : vector<8x128xf32> to vector<1x16xf32>
    %7 = vector.extract_strided_slice %0 {offsets = [6, 0], sizes = [1, 16], strides = [1, 1]} : vector<8x128xf32> to vector<1x16xf32>
    %8 = vector.extract_strided_slice %0 {offsets = [7, 0], sizes = [1, 128], strides = [1, 1]} : vector<8x128xf32> to vector<1x128xf32>
    %9 = tpu.iota {dimensions = array<i32: 1>} : vector<8x128xi32>
    %c32_i32 = arith.constant 32 : i32
    %c0_i32 = arith.constant 0 : i32
    %10 = arith.cmpi eq, %c32_i32, %c0_i32 : i32
    %c1_i32 = arith.constant 1 : i32
    %11 = arith.select %10, %c1_i32, %c32_i32 : i32
    %12 = vector.broadcast %11 : i32 to vector<8x128xi32>
    %13 = arith.remsi %9, %12 : vector<8x128xi32>
    %c0_i32_1 = arith.constant 0 : i32
    %14 = vector.broadcast %c0_i32_1 : i32 to vector<8x128xi32>
    %15 = arith.cmpi ne, %13, %14 : vector<8x128xi32>
    %c0_i32_2 = arith.constant 0 : i32
    %16 = vector.broadcast %c0_i32_2 : i32 to vector<8x128xi32>
    %17 = arith.cmpi slt, %13, %16 : vector<8x128xi32>
    %c0_i32_3 = arith.constant 0 : i32
    %18 = arith.cmpi slt, %11, %c0_i32_3 : i32
    %19 = vector.broadcast %18 : i1 to vector<8x128xi1>
    %20 = vector.broadcast %19 : vector<8x128xi1> to vector<8x128xi1>
    %21 = arith.xori %17, %20 : vector<8x128xi1>
    %22 = arith.andi %21, %15 : vector<8x128xi1>
    %23 = vector.broadcast %11 : i32 to vector<8x128xi32>
    %24 = arith.addi %13, %23 : vector<8x128xi32>
    %25 = arith.select %22, %24, %13 : vector<8x128xi1>, vector<8x128xi32>
    %c16_i32 = arith.constant 16 : i32
    %26 = vector.broadcast %c16_i32 : i32 to vector<8x128xi32>
    %27 = arith.cmpi slt, %25, %26 : vector<8x128xi32>
    %28 = tpu.iota {dimensions = array<i32: 1>} : vector<8x32xi32>
    %c16_i32_4 = arith.constant 16 : i32
    %29 = vector.broadcast %c16_i32_4 : i32 to vector<8x32xi32>
    %30 = arith.cmpi slt, %28, %29 : vector<8x32xi32>
    %c0_5 = arith.constant 0 : index
    %c0_6 = arith.constant 0 : index
    %31 = vector.load %arg1[%c0_5, %c0_6] : memref<8x8xi32, #tpu.memory_space<vmem>>, vector<8x8xi32>
    %32 = tpu.iota {dimensions = array<i32: 1>} : vector<8x128xi32>
    %c0_7 = arith.constant 0 : index
    %c0_8 = arith.constant 0 : index
    %33 = vector.load %arg3[%c0_7, %c0_8] : memref<128x128xbf16, #tpu.memory_space<vmem>>, vector<128x128xbf16>
    %34 = vector.extract_strided_slice %31 {offsets = [0, 0], sizes = [8, 1], strides = [1, 1]} : vector<8x8xi32> to vector<8x1xi32>
    %35 = vector.broadcast %34 : vector<8x1xi32> to vector<8x128xi32>
    %36 = arith.cmpi eq, %35, %32 : vector<8x128xi32>
    %cst = arith.constant 1.000000e+00 : f32
    %cst_9 = arith.constant 0.000000e+00 : f32
    %37 = vector.broadcast %cst : f32 to vector<8x128xf32>
    %38 = vector.broadcast %cst_9 : f32 to vector<8x128xf32>
    %39 = arith.select %36, %37, %38 : vector<8x128xi1>, vector<8x128xf32>
    %40 = arith.truncf %39 : vector<8x128xf32> to vector<8x128xbf16>
    %cst_10 = arith.constant dense<0.000000e+00> : vector<8x128xf32>
    %41 = tpu.matmul %40, %33, %cst_10 {dimension_numbers = #tpu.dot_dimension_numbers<[1], [0], [0], [1], [0, 0, 1, 1], [], []>} : vector<8x128xbf16>, vector<128x128xbf16>, vector<8x128xf32> -> vector<8x128xf32>
    %42 = vector.extract_strided_slice %31 {offsets = [0, 1], sizes = [8, 1], strides = [1, 1]} : vector<8x8xi32> to vector<8x1xi32>
    %43 = vector.broadcast %42 : vector<8x1xi32> to vector<8x128xi32>
    %44 = arith.cmpi eq, %43, %32 : vector<8x128xi32>
    %cst_11 = arith.constant 1.000000e+00 : f32
    %cst_12 = arith.constant 0.000000e+00 : f32
    %45 = vector.broadcast %cst_11 : f32 to vector<8x128xf32>
    %46 = vector.broadcast %cst_12 : f32 to vector<8x128xf32>
    %47 = arith.select %44, %45, %46 : vector<8x128xi1>, vector<8x128xf32>
    %48 = arith.truncf %47 : vector<8x128xf32> to vector<8x128xbf16>
    %cst_13 = arith.constant dense<0.000000e+00> : vector<8x128xf32>
    %49 = tpu.matmul %48, %33, %cst_13 {dimension_numbers = #tpu.dot_dimension_numbers<[1], [0], [0], [1], [0, 0, 1, 1], [], []>} : vector<8x128xbf16>, vector<128x128xbf16>, vector<8x128xf32> -> vector<8x128xf32>
    %50 = vector.extract_strided_slice %31 {offsets = [0, 2], sizes = [8, 1], strides = [1, 1]} : vector<8x8xi32> to vector<8x1xi32>
    %51 = vector.broadcast %50 : vector<8x1xi32> to vector<8x128xi32>
    %52 = arith.cmpi eq, %51, %32 : vector<8x128xi32>
    %cst_14 = arith.constant 1.000000e+00 : f32
    %cst_15 = arith.constant 0.000000e+00 : f32
    %53 = vector.broadcast %cst_14 : f32 to vector<8x128xf32>
    %54 = vector.broadcast %cst_15 : f32 to vector<8x128xf32>
    %55 = arith.select %52, %53, %54 : vector<8x128xi1>, vector<8x128xf32>
    %56 = arith.truncf %55 : vector<8x128xf32> to vector<8x128xbf16>
    %cst_16 = arith.constant dense<0.000000e+00> : vector<8x128xf32>
    %57 = tpu.matmul %56, %33, %cst_16 {dimension_numbers = #tpu.dot_dimension_numbers<[1], [0], [0], [1], [0, 0, 1, 1], [], []>} : vector<8x128xbf16>, vector<128x128xbf16>, vector<8x128xf32> -> vector<8x128xf32>
    %58 = vector.extract_strided_slice %31 {offsets = [0, 3], sizes = [8, 1], strides = [1, 1]} : vector<8x8xi32> to vector<8x1xi32>
    %59 = vector.broadcast %58 : vector<8x1xi32> to vector<8x128xi32>
    %60 = arith.cmpi eq, %59, %32 : vector<8x128xi32>
    %cst_17 = arith.constant 1.000000e+00 : f32
    %cst_18 = arith.constant 0.000000e+00 : f32
    %61 = vector.broadcast %cst_17 : f32 to vector<8x128xf32>
    %62 = vector.broadcast %cst_18 : f32 to vector<8x128xf32>
    %63 = arith.select %60, %61, %62 : vector<8x128xi1>, vector<8x128xf32>
    %64 = arith.truncf %63 : vector<8x128xf32> to vector<8x128xbf16>
    %cst_19 = arith.constant dense<0.000000e+00> : vector<8x128xf32>
    %65 = tpu.matmul %64, %33, %cst_19 {dimension_numbers = #tpu.dot_dimension_numbers<[1], [0], [0], [1], [0, 0, 1, 1], [], []>} : vector<8x128xbf16>, vector<128x128xbf16>, vector<8x128xf32> -> vector<8x128xf32>
    %66 = vector.extract_strided_slice %31 {offsets = [0, 4], sizes = [8, 1], strides = [1, 1]} : vector<8x8xi32> to vector<8x1xi32>
    %67 = vector.broadcast %66 : vector<8x1xi32> to vector<8x128xi32>
    %68 = arith.cmpi eq, %67, %32 : vector<8x128xi32>
    %cst_20 = arith.constant 1.000000e+00 : f32
    %cst_21 = arith.constant 0.000000e+00 : f32
    %69 = vector.broadcast %cst_20 : f32 to vector<8x128xf32>
    %70 = vector.broadcast %cst_21 : f32 to vector<8x128xf32>
    %71 = arith.select %68, %69, %70 : vector<8x128xi1>, vector<8x128xf32>
    %72 = arith.truncf %71 : vector<8x128xf32> to vector<8x128xbf16>
    %cst_22 = arith.constant dense<0.000000e+00> : vector<8x128xf32>
    %73 = tpu.matmul %72, %33, %cst_22 {dimension_numbers = #tpu.dot_dimension_numbers<[1], [0], [0], [1], [0, 0, 1, 1], [], []>} : vector<8x128xbf16>, vector<128x128xbf16>, vector<8x128xf32> -> vector<8x128xf32>
    %74 = vector.extract_strided_slice %31 {offsets = [0, 5], sizes = [8, 1], strides = [1, 1]} : vector<8x8xi32> to vector<8x1xi32>
    %75 = vector.broadcast %74 : vector<8x1xi32> to vector<8x128xi32>
    %76 = arith.cmpi eq, %75, %32 : vector<8x128xi32>
    %cst_23 = arith.constant 1.000000e+00 : f32
    %cst_24 = arith.constant 0.000000e+00 : f32
    %77 = vector.broadcast %cst_23 : f32 to vector<8x128xf32>
    %78 = vector.broadcast %cst_24 : f32 to vector<8x128xf32>
    %79 = arith.select %76, %77, %78 : vector<8x128xi1>, vector<8x128xf32>
    %80 = arith.truncf %79 : vector<8x128xf32> to vector<8x128xbf16>
    %cst_25 = arith.constant dense<0.000000e+00> : vector<8x128xf32>
    %81 = tpu.matmul %80, %33, %cst_25 {dimension_numbers = #tpu.dot_dimension_numbers<[1], [0], [0], [1], [0, 0, 1, 1], [], []>} : vector<8x128xbf16>, vector<128x128xbf16>, vector<8x128xf32> -> vector<8x128xf32>
    %82 = vector.extract_strided_slice %31 {offsets = [0, 6], sizes = [8, 1], strides = [1, 1]} : vector<8x8xi32> to vector<8x1xi32>
    %83 = vector.broadcast %82 : vector<8x1xi32> to vector<8x128xi32>
    %84 = arith.cmpi eq, %83, %32 : vector<8x128xi32>
    %cst_26 = arith.constant 1.000000e+00 : f32
    %cst_27 = arith.constant 0.000000e+00 : f32
    %85 = vector.broadcast %cst_26 : f32 to vector<8x128xf32>
    %86 = vector.broadcast %cst_27 : f32 to vector<8x128xf32>
    %87 = arith.select %84, %85, %86 : vector<8x128xi1>, vector<8x128xf32>
    %88 = arith.truncf %87 : vector<8x128xf32> to vector<8x128xbf16>
    %cst_28 = arith.constant dense<0.000000e+00> : vector<8x128xf32>
    %89 = tpu.matmul %88, %33, %cst_28 {dimension_numbers = #tpu.dot_dimension_numbers<[1], [0], [0], [1], [0, 0, 1, 1], [], []>} : vector<8x128xbf16>, vector<128x128xbf16>, vector<8x128xf32> -> vector<8x128xf32>
    %90 = vector.extract_strided_slice %31 {offsets = [0, 7], sizes = [8, 1], strides = [1, 1]} : vector<8x8xi32> to vector<8x1xi32>
    %91 = vector.broadcast %90 : vector<8x1xi32> to vector<8x128xi32>
    %92 = arith.cmpi eq, %91, %32 : vector<8x128xi32>
    %cst_29 = arith.constant 1.000000e+00 : f32
    %cst_30 = arith.constant 0.000000e+00 : f32
    %93 = vector.broadcast %cst_29 : f32 to vector<8x128xf32>
    %94 = vector.broadcast %cst_30 : f32 to vector<8x128xf32>
    %95 = arith.select %92, %93, %94 : vector<8x128xi1>, vector<8x128xf32>
    %96 = arith.truncf %95 : vector<8x128xf32> to vector<8x128xbf16>
    %cst_31 = arith.constant dense<0.000000e+00> : vector<8x128xf32>
    %97 = tpu.matmul %96, %33, %cst_31 {dimension_numbers = #tpu.dot_dimension_numbers<[1], [0], [0], [1], [0, 0, 1, 1], [], []>} : vector<8x128xbf16>, vector<128x128xbf16>, vector<8x128xf32> -> vector<8x128xf32>
    %98 = arith.select %27, %41, %97 : vector<8x128xi1>, vector<8x128xf32>
    %99 = vector.broadcast %1 : vector<1x128xf32> to vector<8x128xf32>
    %100 = arith.addf %98, %99 : vector<8x128xf32>
    %101 = arith.select %27, %49, %89 : vector<8x128xi1>, vector<8x128xf32>
    %102 = vector.broadcast %1 : vector<1x128xf32> to vector<8x128xf32>
    %103 = arith.addf %101, %102 : vector<8x128xf32>
    %104 = arith.select %27, %57, %81 : vector<8x128xi1>, vector<8x128xf32>
    %105 = vector.broadcast %1 : vector<1x128xf32> to vector<8x128xf32>
    %106 = arith.addf %104, %105 : vector<8x128xf32>
    %107 = arith.select %27, %65, %73 : vector<8x128xi1>, vector<8x128xf32>
    %108 = vector.broadcast %1 : vector<1x128xf32> to vector<8x128xf32>
    %109 = arith.addf %107, %108 : vector<8x128xf32>
    %110 = arith.select %27, %73, %65 : vector<8x128xi1>, vector<8x128xf32>
    %111 = vector.broadcast %1 : vector<1x128xf32> to vector<8x128xf32>
    %112 = arith.addf %110, %111 : vector<8x128xf32>
    %113 = arith.select %27, %81, %57 : vector<8x128xi1>, vector<8x128xf32>
    %114 = vector.broadcast %1 : vector<1x128xf32> to vector<8x128xf32>
    %115 = arith.addf %113, %114 : vector<8x128xf32>
    %116 = arith.select %27, %89, %49 : vector<8x128xi1>, vector<8x128xf32>
    %117 = vector.broadcast %1 : vector<1x128xf32> to vector<8x128xf32>
    %118 = arith.addf %116, %117 : vector<8x128xf32>
    %119 = arith.select %27, %97, %41 : vector<8x128xi1>, vector<8x128xf32>
    %120 = vector.broadcast %1 : vector<1x128xf32> to vector<8x128xf32>
    %121 = arith.addf %119, %120 : vector<8x128xf32>
    %c0_32 = arith.constant 0 : index
    %c0_33 = arith.constant 0 : index
    %122 = vector.load %arg4[%c0_32, %c0_33] : memref<32x128xbf16, #tpu.memory_space<vmem>>, vector<32x128xbf16>
    %cst_34 = arith.constant 0.000000e+00 : f32
    %123 = vector.broadcast %cst_34 : f32 to vector<8x32xf32>
    %124 = arith.negf %100 : vector<8x128xf32>
    %125 = math.exp %124 : vector<8x128xf32>
    %cst_35 = arith.constant 1.000000e+00 : f32
    %126 = vector.broadcast %cst_35 : f32 to vector<8x128xf32>
    %127 = arith.addf %126, %125 : vector<8x128xf32>
    %128 = arith.divf %126, %127 : vector<8x128xf32>
    %129 = vector.extract_strided_slice %128 {offsets = [0, 0], sizes = [8, 32], strides = [1, 1]} : vector<8x128xf32> to vector<8x32xf32>
    %130 = vector.extract_strided_slice %128 {offsets = [0, 32], sizes = [8, 32], strides = [1, 1]} : vector<8x128xf32> to vector<8x32xf32>
    %131 = vector.extract_strided_slice %128 {offsets = [0, 96], sizes = [8, 32], strides = [1, 1]} : vector<8x128xf32> to vector<8x32xf32>
    %132 = vector.extract_strided_slice %100 {offsets = [0, 64], sizes = [8, 32], strides = [1, 1]} : vector<8x128xf32> to vector<8x32xf32>
    %133 = math.tanh %132 : vector<8x32xf32>
    %134 = arith.mulf %130, %123 : vector<8x32xf32>
    %135 = arith.mulf %129, %133 : vector<8x32xf32>
    %136 = arith.addf %134, %135 : vector<8x32xf32>
    %137 = math.tanh %136 : vector<8x32xf32>
    %138 = arith.mulf %131, %137 : vector<8x32xf32>
    %139 = arith.truncf %138 : vector<8x32xf32> to vector<8x32xbf16>
    %cst_36 = arith.constant dense<0.000000e+00> : vector<8x128xf32>
    %140 = tpu.matmul %139, %122, %cst_36 {dimension_numbers = #tpu.dot_dimension_numbers<[1], [0], [0], [1], [0, 0, 1, 1], [], []>} : vector<8x32xbf16>, vector<32x128xbf16>, vector<8x128xf32> -> vector<8x128xf32>
    %141 = arith.addf %103, %140 : vector<8x128xf32>
    %142 = arith.negf %141 : vector<8x128xf32>
    %143 = math.exp %142 : vector<8x128xf32>
    %cst_37 = arith.constant 1.000000e+00 : f32
    %144 = vector.broadcast %cst_37 : f32 to vector<8x128xf32>
    %145 = arith.addf %144, %143 : vector<8x128xf32>
    %146 = arith.divf %144, %145 : vector<8x128xf32>
    %147 = vector.extract_strided_slice %146 {offsets = [0, 0], sizes = [8, 32], strides = [1, 1]} : vector<8x128xf32> to vector<8x32xf32>
    %148 = vector.extract_strided_slice %146 {offsets = [0, 32], sizes = [8, 32], strides = [1, 1]} : vector<8x128xf32> to vector<8x32xf32>
    %149 = vector.extract_strided_slice %146 {offsets = [0, 96], sizes = [8, 32], strides = [1, 1]} : vector<8x128xf32> to vector<8x32xf32>
    %150 = vector.extract_strided_slice %141 {offsets = [0, 64], sizes = [8, 32], strides = [1, 1]} : vector<8x128xf32> to vector<8x32xf32>
    %151 = math.tanh %150 : vector<8x32xf32>
    %152 = arith.mulf %148, %136 : vector<8x32xf32>
    %153 = arith.mulf %147, %151 : vector<8x32xf32>
    %154 = arith.addf %152, %153 : vector<8x32xf32>
    %155 = math.tanh %154 : vector<8x32xf32>
    %156 = arith.mulf %149, %155 : vector<8x32xf32>
    %157 = arith.truncf %156 : vector<8x32xf32> to vector<8x32xbf16>
    %cst_38 = arith.constant dense<0.000000e+00> : vector<8x128xf32>
    %158 = tpu.matmul %157, %122, %cst_38 {dimension_numbers = #tpu.dot_dimension_numbers<[1], [0], [0], [1], [0, 0, 1, 1], [], []>} : vector<8x32xbf16>, vector<32x128xbf16>, vector<8x128xf32> -> vector<8x128xf32>
    %159 = arith.addf %106, %158 : vector<8x128xf32>
    %160 = arith.negf %159 : vector<8x128xf32>
    %161 = math.exp %160 : vector<8x128xf32>
    %cst_39 = arith.constant 1.000000e+00 : f32
    %162 = vector.broadcast %cst_39 : f32 to vector<8x128xf32>
    %163 = arith.addf %162, %161 : vector<8x128xf32>
    %164 = arith.divf %162, %163 : vector<8x128xf32>
    %165 = vector.extract_strided_slice %164 {offsets = [0, 0], sizes = [8, 32], strides = [1, 1]} : vector<8x128xf32> to vector<8x32xf32>
    %166 = vector.extract_strided_slice %164 {offsets = [0, 32], sizes = [8, 32], strides = [1, 1]} : vector<8x128xf32> to vector<8x32xf32>
    %167 = vector.extract_strided_slice %164 {offsets = [0, 96], sizes = [8, 32], strides = [1, 1]} : vector<8x128xf32> to vector<8x32xf32>
    %168 = vector.extract_strided_slice %159 {offsets = [0, 64], sizes = [8, 32], strides = [1, 1]} : vector<8x128xf32> to vector<8x32xf32>
    %169 = math.tanh %168 : vector<8x32xf32>
    %170 = arith.mulf %166, %154 : vector<8x32xf32>
    %171 = arith.mulf %165, %169 : vector<8x32xf32>
    %172 = arith.addf %170, %171 : vector<8x32xf32>
    %173 = math.tanh %172 : vector<8x32xf32>
    %174 = arith.mulf %167, %173 : vector<8x32xf32>
    %175 = arith.truncf %174 : vector<8x32xf32> to vector<8x32xbf16>
    %cst_40 = arith.constant dense<0.000000e+00> : vector<8x128xf32>
    %176 = tpu.matmul %175, %122, %cst_40 {dimension_numbers = #tpu.dot_dimension_numbers<[1], [0], [0], [1], [0, 0, 1, 1], [], []>} : vector<8x32xbf16>, vector<32x128xbf16>, vector<8x128xf32> -> vector<8x128xf32>
    %177 = arith.addf %109, %176 : vector<8x128xf32>
    %178 = arith.negf %177 : vector<8x128xf32>
    %179 = math.exp %178 : vector<8x128xf32>
    %cst_41 = arith.constant 1.000000e+00 : f32
    %180 = vector.broadcast %cst_41 : f32 to vector<8x128xf32>
    %181 = arith.addf %180, %179 : vector<8x128xf32>
    %182 = arith.divf %180, %181 : vector<8x128xf32>
    %183 = vector.extract_strided_slice %182 {offsets = [0, 0], sizes = [8, 32], strides = [1, 1]} : vector<8x128xf32> to vector<8x32xf32>
    %184 = vector.extract_strided_slice %182 {offsets = [0, 32], sizes = [8, 32], strides = [1, 1]} : vector<8x128xf32> to vector<8x32xf32>
    %185 = vector.extract_strided_slice %182 {offsets = [0, 96], sizes = [8, 32], strides = [1, 1]} : vector<8x128xf32> to vector<8x32xf32>
    %186 = vector.extract_strided_slice %177 {offsets = [0, 64], sizes = [8, 32], strides = [1, 1]} : vector<8x128xf32> to vector<8x32xf32>
    %187 = math.tanh %186 : vector<8x32xf32>
    %188 = arith.mulf %184, %172 : vector<8x32xf32>
    %189 = arith.mulf %183, %187 : vector<8x32xf32>
    %190 = arith.addf %188, %189 : vector<8x32xf32>
    %191 = math.tanh %190 : vector<8x32xf32>
    %192 = arith.mulf %185, %191 : vector<8x32xf32>
    %193 = arith.truncf %192 : vector<8x32xf32> to vector<8x32xbf16>
    %cst_42 = arith.constant dense<0.000000e+00> : vector<8x128xf32>
    %194 = tpu.matmul %193, %122, %cst_42 {dimension_numbers = #tpu.dot_dimension_numbers<[1], [0], [0], [1], [0, 0, 1, 1], [], []>} : vector<8x32xbf16>, vector<32x128xbf16>, vector<8x128xf32> -> vector<8x128xf32>
    %195 = arith.addf %112, %194 : vector<8x128xf32>
    %196 = arith.negf %195 : vector<8x128xf32>
    %197 = math.exp %196 : vector<8x128xf32>
    %cst_43 = arith.constant 1.000000e+00 : f32
    %198 = vector.broadcast %cst_43 : f32 to vector<8x128xf32>
    %199 = arith.addf %198, %197 : vector<8x128xf32>
    %200 = arith.divf %198, %199 : vector<8x128xf32>
    %201 = vector.extract_strided_slice %200 {offsets = [0, 0], sizes = [8, 32], strides = [1, 1]} : vector<8x128xf32> to vector<8x32xf32>
    %202 = vector.extract_strided_slice %200 {offsets = [0, 32], sizes = [8, 32], strides = [1, 1]} : vector<8x128xf32> to vector<8x32xf32>
    %203 = vector.extract_strided_slice %200 {offsets = [0, 96], sizes = [8, 32], strides = [1, 1]} : vector<8x128xf32> to vector<8x32xf32>
    %204 = vector.extract_strided_slice %195 {offsets = [0, 64], sizes = [8, 32], strides = [1, 1]} : vector<8x128xf32> to vector<8x32xf32>
    %205 = math.tanh %204 : vector<8x32xf32>
    %206 = arith.mulf %202, %190 : vector<8x32xf32>
    %207 = arith.mulf %201, %205 : vector<8x32xf32>
    %208 = arith.addf %206, %207 : vector<8x32xf32>
    %209 = math.tanh %208 : vector<8x32xf32>
    %210 = arith.mulf %203, %209 : vector<8x32xf32>
    %211 = arith.truncf %210 : vector<8x32xf32> to vector<8x32xbf16>
    %cst_44 = arith.constant dense<0.000000e+00> : vector<8x128xf32>
    %212 = tpu.matmul %211, %122, %cst_44 {dimension_numbers = #tpu.dot_dimension_numbers<[1], [0], [0], [1], [0, 0, 1, 1], [], []>} : vector<8x32xbf16>, vector<32x128xbf16>, vector<8x128xf32> -> vector<8x128xf32>
    %213 = arith.addf %115, %212 : vector<8x128xf32>
    %214 = arith.negf %213 : vector<8x128xf32>
    %215 = math.exp %214 : vector<8x128xf32>
    %cst_45 = arith.constant 1.000000e+00 : f32
    %216 = vector.broadcast %cst_45 : f32 to vector<8x128xf32>
    %217 = arith.addf %216, %215 : vector<8x128xf32>
    %218 = arith.divf %216, %217 : vector<8x128xf32>
    %219 = vector.extract_strided_slice %218 {offsets = [0, 0], sizes = [8, 32], strides = [1, 1]} : vector<8x128xf32> to vector<8x32xf32>
    %220 = vector.extract_strided_slice %218 {offsets = [0, 32], sizes = [8, 32], strides = [1, 1]} : vector<8x128xf32> to vector<8x32xf32>
    %221 = vector.extract_strided_slice %218 {offsets = [0, 96], sizes = [8, 32], strides = [1, 1]} : vector<8x128xf32> to vector<8x32xf32>
    %222 = vector.extract_strided_slice %213 {offsets = [0, 64], sizes = [8, 32], strides = [1, 1]} : vector<8x128xf32> to vector<8x32xf32>
    %223 = math.tanh %222 : vector<8x32xf32>
    %224 = arith.mulf %220, %208 : vector<8x32xf32>
    %225 = arith.mulf %219, %223 : vector<8x32xf32>
    %226 = arith.addf %224, %225 : vector<8x32xf32>
    %227 = math.tanh %226 : vector<8x32xf32>
    %228 = arith.mulf %221, %227 : vector<8x32xf32>
    %229 = arith.truncf %228 : vector<8x32xf32> to vector<8x32xbf16>
    %cst_46 = arith.constant dense<0.000000e+00> : vector<8x128xf32>
    %230 = tpu.matmul %229, %122, %cst_46 {dimension_numbers = #tpu.dot_dimension_numbers<[1], [0], [0], [1], [0, 0, 1, 1], [], []>} : vector<8x32xbf16>, vector<32x128xbf16>, vector<8x128xf32> -> vector<8x128xf32>
    %231 = arith.addf %118, %230 : vector<8x128xf32>
    %232 = arith.negf %231 : vector<8x128xf32>
    %233 = math.exp %232 : vector<8x128xf32>
    %cst_47 = arith.constant 1.000000e+00 : f32
    %234 = vector.broadcast %cst_47 : f32 to vector<8x128xf32>
    %235 = arith.addf %234, %233 : vector<8x128xf32>
    %236 = arith.divf %234, %235 : vector<8x128xf32>
    %237 = vector.extract_strided_slice %236 {offsets = [0, 0], sizes = [8, 32], strides = [1, 1]} : vector<8x128xf32> to vector<8x32xf32>
    %238 = vector.extract_strided_slice %236 {offsets = [0, 32], sizes = [8, 32], strides = [1, 1]} : vector<8x128xf32> to vector<8x32xf32>
    %239 = vector.extract_strided_slice %236 {offsets = [0, 96], sizes = [8, 32], strides = [1, 1]} : vector<8x128xf32> to vector<8x32xf32>
    %240 = vector.extract_strided_slice %231 {offsets = [0, 64], sizes = [8, 32], strides = [1, 1]} : vector<8x128xf32> to vector<8x32xf32>
    %241 = math.tanh %240 : vector<8x32xf32>
    %242 = arith.mulf %238, %226 : vector<8x32xf32>
    %243 = arith.mulf %237, %241 : vector<8x32xf32>
    %244 = arith.addf %242, %243 : vector<8x32xf32>
    %245 = math.tanh %244 : vector<8x32xf32>
    %246 = arith.mulf %239, %245 : vector<8x32xf32>
    %247 = arith.truncf %246 : vector<8x32xf32> to vector<8x32xbf16>
    %cst_48 = arith.constant dense<0.000000e+00> : vector<8x128xf32>
    %248 = tpu.matmul %247, %122, %cst_48 {dimension_numbers = #tpu.dot_dimension_numbers<[1], [0], [0], [1], [0, 0, 1, 1], [], []>} : vector<8x32xbf16>, vector<32x128xbf16>, vector<8x128xf32> -> vector<8x128xf32>
    %249 = arith.addf %121, %248 : vector<8x128xf32>
    %250 = arith.negf %249 : vector<8x128xf32>
    %251 = math.exp %250 : vector<8x128xf32>
    %cst_49 = arith.constant 1.000000e+00 : f32
    %252 = vector.broadcast %cst_49 : f32 to vector<8x128xf32>
    %253 = arith.addf %252, %251 : vector<8x128xf32>
    %254 = arith.divf %252, %253 : vector<8x128xf32>
    %255 = vector.extract_strided_slice %254 {offsets = [0, 0], sizes = [8, 32], strides = [1, 1]} : vector<8x128xf32> to vector<8x32xf32>
    %256 = vector.extract_strided_slice %254 {offsets = [0, 32], sizes = [8, 32], strides = [1, 1]} : vector<8x128xf32> to vector<8x32xf32>
    %257 = vector.extract_strided_slice %254 {offsets = [0, 96], sizes = [8, 32], strides = [1, 1]} : vector<8x128xf32> to vector<8x32xf32>
    %258 = vector.extract_strided_slice %249 {offsets = [0, 64], sizes = [8, 32], strides = [1, 1]} : vector<8x128xf32> to vector<8x32xf32>
    %259 = math.tanh %258 : vector<8x32xf32>
    %260 = arith.mulf %256, %244 : vector<8x32xf32>
    %261 = arith.mulf %255, %259 : vector<8x32xf32>
    %262 = arith.addf %260, %261 : vector<8x32xf32>
    %263 = math.tanh %262 : vector<8x32xf32>
    %264 = arith.mulf %257, %263 : vector<8x32xf32>
    %265 = arith.select %30, %138, %264 : vector<8x32xi1>, vector<8x32xf32>
    %266 = arith.select %30, %156, %246 : vector<8x32xi1>, vector<8x32xf32>
    %267 = arith.select %30, %174, %228 : vector<8x32xi1>, vector<8x32xf32>
    %268 = arith.select %30, %192, %210 : vector<8x32xi1>, vector<8x32xf32>
    %269 = arith.select %30, %210, %192 : vector<8x32xi1>, vector<8x32xf32>
    %270 = arith.select %30, %228, %174 : vector<8x32xi1>, vector<8x32xf32>
    %271 = arith.select %30, %246, %156 : vector<8x32xi1>, vector<8x32xf32>
    %272 = arith.select %30, %264, %138 : vector<8x32xi1>, vector<8x32xf32>
    %c0_50 = arith.constant 0 : index
    %c0_51 = arith.constant 0 : index
    %273 = vector.load %arg5[%c0_50, %c0_51] : memref<32x128xbf16, #tpu.memory_space<vmem>>, vector<32x128xbf16>
    %274 = arith.truncf %265 : vector<8x32xf32> to vector<8x32xbf16>
    %cst_52 = arith.constant dense<0.000000e+00> : vector<8x128xf32>
    %275 = tpu.matmul %274, %273, %cst_52 {dimension_numbers = #tpu.dot_dimension_numbers<[1], [0], [0], [1], [0, 0, 1, 1], [], []>} : vector<8x32xbf16>, vector<32x128xbf16>, vector<8x128xf32> -> vector<8x128xf32>
    %276 = arith.truncf %266 : vector<8x32xf32> to vector<8x32xbf16>
    %cst_53 = arith.constant dense<0.000000e+00> : vector<8x128xf32>
    %277 = tpu.matmul %276, %273, %cst_53 {dimension_numbers = #tpu.dot_dimension_numbers<[1], [0], [0], [1], [0, 0, 1, 1], [], []>} : vector<8x32xbf16>, vector<32x128xbf16>, vector<8x128xf32> -> vector<8x128xf32>
    %278 = arith.truncf %267 : vector<8x32xf32> to vector<8x32xbf16>
    %cst_54 = arith.constant dense<0.000000e+00> : vector<8x128xf32>
    %279 = tpu.matmul %278, %273, %cst_54 {dimension_numbers = #tpu.dot_dimension_numbers<[1], [0], [0], [1], [0, 0, 1, 1], [], []>} : vector<8x32xbf16>, vector<32x128xbf16>, vector<8x128xf32> -> vector<8x128xf32>
    %280 = arith.truncf %268 : vector<8x32xf32> to vector<8x32xbf16>
    %cst_55 = arith.constant dense<0.000000e+00> : vector<8x128xf32>
    %281 = tpu.matmul %280, %273, %cst_55 {dimension_numbers = #tpu.dot_dimension_numbers<[1], [0], [0], [1], [0, 0, 1, 1], [], []>} : vector<8x32xbf16>, vector<32x128xbf16>, vector<8x128xf32> -> vector<8x128xf32>
    %282 = arith.truncf %269 : vector<8x32xf32> to vector<8x32xbf16>
    %cst_56 = arith.constant dense<0.000000e+00> : vector<8x128xf32>
    %283 = tpu.matmul %282, %273, %cst_56 {dimension_numbers = #tpu.dot_dimension_numbers<[1], [0], [0], [1], [0, 0, 1, 1], [], []>} : vector<8x32xbf16>, vector<32x128xbf16>, vector<8x128xf32> -> vector<8x128xf32>
    %284 = arith.truncf %270 : vector<8x32xf32> to vector<8x32xbf16>
    %cst_57 = arith.constant dense<0.000000e+00> : vector<8x128xf32>
    %285 = tpu.matmul %284, %273, %cst_57 {dimension_numbers = #tpu.dot_dimension_numbers<[1], [0], [0], [1], [0, 0, 1, 1], [], []>} : vector<8x32xbf16>, vector<32x128xbf16>, vector<8x128xf32> -> vector<8x128xf32>
    %286 = arith.truncf %271 : vector<8x32xf32> to vector<8x32xbf16>
    %cst_58 = arith.constant dense<0.000000e+00> : vector<8x128xf32>
    %287 = tpu.matmul %286, %273, %cst_58 {dimension_numbers = #tpu.dot_dimension_numbers<[1], [0], [0], [1], [0, 0, 1, 1], [], []>} : vector<8x32xbf16>, vector<32x128xbf16>, vector<8x128xf32> -> vector<8x128xf32>
    %288 = arith.truncf %272 : vector<8x32xf32> to vector<8x32xbf16>
    %cst_59 = arith.constant dense<0.000000e+00> : vector<8x128xf32>
    %289 = tpu.matmul %288, %273, %cst_59 {dimension_numbers = #tpu.dot_dimension_numbers<[1], [0], [0], [1], [0, 0, 1, 1], [], []>} : vector<8x32xbf16>, vector<32x128xbf16>, vector<8x128xf32> -> vector<8x128xf32>
    %290 = arith.select %27, %275, %289 : vector<8x128xi1>, vector<8x128xf32>
    %291 = vector.broadcast %2 : vector<1x128xf32> to vector<8x128xf32>
    %292 = arith.addf %290, %291 : vector<8x128xf32>
    %293 = arith.select %27, %277, %287 : vector<8x128xi1>, vector<8x128xf32>
    %294 = vector.broadcast %2 : vector<1x128xf32> to vector<8x128xf32>
    %295 = arith.addf %293, %294 : vector<8x128xf32>
    %296 = arith.select %27, %279, %285 : vector<8x128xi1>, vector<8x128xf32>
    %297 = vector.broadcast %2 : vector<1x128xf32> to vector<8x128xf32>
    %298 = arith.addf %296, %297 : vector<8x128xf32>
    %299 = arith.select %27, %281, %283 : vector<8x128xi1>, vector<8x128xf32>
    %300 = vector.broadcast %2 : vector<1x128xf32> to vector<8x128xf32>
    %301 = arith.addf %299, %300 : vector<8x128xf32>
    %302 = arith.select %27, %283, %281 : vector<8x128xi1>, vector<8x128xf32>
    %303 = vector.broadcast %2 : vector<1x128xf32> to vector<8x128xf32>
    %304 = arith.addf %302, %303 : vector<8x128xf32>
    %305 = arith.select %27, %285, %279 : vector<8x128xi1>, vector<8x128xf32>
    %306 = vector.broadcast %2 : vector<1x128xf32> to vector<8x128xf32>
    %307 = arith.addf %305, %306 : vector<8x128xf32>
    %308 = arith.select %27, %287, %277 : vector<8x128xi1>, vector<8x128xf32>
    %309 = vector.broadcast %2 : vector<1x128xf32> to vector<8x128xf32>
    %310 = arith.addf %308, %309 : vector<8x128xf32>
    %311 = arith.select %27, %289, %275 : vector<8x128xi1>, vector<8x128xf32>
    %312 = vector.broadcast %2 : vector<1x128xf32> to vector<8x128xf32>
    %313 = arith.addf %311, %312 : vector<8x128xf32>
    %c0_60 = arith.constant 0 : index
    %c0_61 = arith.constant 0 : index
    %314 = vector.load %arg6[%c0_60, %c0_61] : memref<32x128xbf16, #tpu.memory_space<vmem>>, vector<32x128xbf16>
    %cst_62 = arith.constant 0.000000e+00 : f32
    %315 = vector.broadcast %cst_62 : f32 to vector<8x32xf32>
    %316 = arith.negf %292 : vector<8x128xf32>
    %317 = math.exp %316 : vector<8x128xf32>
    %cst_63 = arith.constant 1.000000e+00 : f32
    %318 = vector.broadcast %cst_63 : f32 to vector<8x128xf32>
    %319 = arith.addf %318, %317 : vector<8x128xf32>
    %320 = arith.divf %318, %319 : vector<8x128xf32>
    %321 = vector.extract_strided_slice %320 {offsets = [0, 0], sizes = [8, 32], strides = [1, 1]} : vector<8x128xf32> to vector<8x32xf32>
    %322 = vector.extract_strided_slice %320 {offsets = [0, 32], sizes = [8, 32], strides = [1, 1]} : vector<8x128xf32> to vector<8x32xf32>
    %323 = vector.extract_strided_slice %320 {offsets = [0, 96], sizes = [8, 32], strides = [1, 1]} : vector<8x128xf32> to vector<8x32xf32>
    %324 = vector.extract_strided_slice %292 {offsets = [0, 64], sizes = [8, 32], strides = [1, 1]} : vector<8x128xf32> to vector<8x32xf32>
    %325 = math.tanh %324 : vector<8x32xf32>
    %326 = arith.mulf %322, %315 : vector<8x32xf32>
    %327 = arith.mulf %321, %325 : vector<8x32xf32>
    %328 = arith.addf %326, %327 : vector<8x32xf32>
    %329 = math.tanh %328 : vector<8x32xf32>
    %330 = arith.mulf %323, %329 : vector<8x32xf32>
    %331 = arith.truncf %330 : vector<8x32xf32> to vector<8x32xbf16>
    %cst_64 = arith.constant dense<0.000000e+00> : vector<8x128xf32>
    %332 = tpu.matmul %331, %314, %cst_64 {dimension_numbers = #tpu.dot_dimension_numbers<[1], [0], [0], [1], [0, 0, 1, 1], [], []>} : vector<8x32xbf16>, vector<32x128xbf16>, vector<8x128xf32> -> vector<8x128xf32>
    %333 = arith.addf %295, %332 : vector<8x128xf32>
    %334 = arith.negf %333 : vector<8x128xf32>
    %335 = math.exp %334 : vector<8x128xf32>
    %cst_65 = arith.constant 1.000000e+00 : f32
    %336 = vector.broadcast %cst_65 : f32 to vector<8x128xf32>
    %337 = arith.addf %336, %335 : vector<8x128xf32>
    %338 = arith.divf %336, %337 : vector<8x128xf32>
    %339 = vector.extract_strided_slice %338 {offsets = [0, 0], sizes = [8, 32], strides = [1, 1]} : vector<8x128xf32> to vector<8x32xf32>
    %340 = vector.extract_strided_slice %338 {offsets = [0, 32], sizes = [8, 32], strides = [1, 1]} : vector<8x128xf32> to vector<8x32xf32>
    %341 = vector.extract_strided_slice %338 {offsets = [0, 96], sizes = [8, 32], strides = [1, 1]} : vector<8x128xf32> to vector<8x32xf32>
    %342 = vector.extract_strided_slice %333 {offsets = [0, 64], sizes = [8, 32], strides = [1, 1]} : vector<8x128xf32> to vector<8x32xf32>
    %343 = math.tanh %342 : vector<8x32xf32>
    %344 = arith.mulf %340, %328 : vector<8x32xf32>
    %345 = arith.mulf %339, %343 : vector<8x32xf32>
    %346 = arith.addf %344, %345 : vector<8x32xf32>
    %347 = math.tanh %346 : vector<8x32xf32>
    %348 = arith.mulf %341, %347 : vector<8x32xf32>
    %349 = arith.truncf %348 : vector<8x32xf32> to vector<8x32xbf16>
    %cst_66 = arith.constant dense<0.000000e+00> : vector<8x128xf32>
    %350 = tpu.matmul %349, %314, %cst_66 {dimension_numbers = #tpu.dot_dimension_numbers<[1], [0], [0], [1], [0, 0, 1, 1], [], []>} : vector<8x32xbf16>, vector<32x128xbf16>, vector<8x128xf32> -> vector<8x128xf32>
    %351 = arith.addf %298, %350 : vector<8x128xf32>
    %352 = arith.negf %351 : vector<8x128xf32>
    %353 = math.exp %352 : vector<8x128xf32>
    %cst_67 = arith.constant 1.000000e+00 : f32
    %354 = vector.broadcast %cst_67 : f32 to vector<8x128xf32>
    %355 = arith.addf %354, %353 : vector<8x128xf32>
    %356 = arith.divf %354, %355 : vector<8x128xf32>
    %357 = vector.extract_strided_slice %356 {offsets = [0, 0], sizes = [8, 32], strides = [1, 1]} : vector<8x128xf32> to vector<8x32xf32>
    %358 = vector.extract_strided_slice %356 {offsets = [0, 32], sizes = [8, 32], strides = [1, 1]} : vector<8x128xf32> to vector<8x32xf32>
    %359 = vector.extract_strided_slice %356 {offsets = [0, 96], sizes = [8, 32], strides = [1, 1]} : vector<8x128xf32> to vector<8x32xf32>
    %360 = vector.extract_strided_slice %351 {offsets = [0, 64], sizes = [8, 32], strides = [1, 1]} : vector<8x128xf32> to vector<8x32xf32>
    %361 = math.tanh %360 : vector<8x32xf32>
    %362 = arith.mulf %358, %346 : vector<8x32xf32>
    %363 = arith.mulf %357, %361 : vector<8x32xf32>
    %364 = arith.addf %362, %363 : vector<8x32xf32>
    %365 = math.tanh %364 : vector<8x32xf32>
    %366 = arith.mulf %359, %365 : vector<8x32xf32>
    %367 = arith.truncf %366 : vector<8x32xf32> to vector<8x32xbf16>
    %cst_68 = arith.constant dense<0.000000e+00> : vector<8x128xf32>
    %368 = tpu.matmul %367, %314, %cst_68 {dimension_numbers = #tpu.dot_dimension_numbers<[1], [0], [0], [1], [0, 0, 1, 1], [], []>} : vector<8x32xbf16>, vector<32x128xbf16>, vector<8x128xf32> -> vector<8x128xf32>
    %369 = arith.addf %301, %368 : vector<8x128xf32>
    %370 = arith.negf %369 : vector<8x128xf32>
    %371 = math.exp %370 : vector<8x128xf32>
    %cst_69 = arith.constant 1.000000e+00 : f32
    %372 = vector.broadcast %cst_69 : f32 to vector<8x128xf32>
    %373 = arith.addf %372, %371 : vector<8x128xf32>
    %374 = arith.divf %372, %373 : vector<8x128xf32>
    %375 = vector.extract_strided_slice %374 {offsets = [0, 0], sizes = [8, 32], strides = [1, 1]} : vector<8x128xf32> to vector<8x32xf32>
    %376 = vector.extract_strided_slice %374 {offsets = [0, 32], sizes = [8, 32], strides = [1, 1]} : vector<8x128xf32> to vector<8x32xf32>
    %377 = vector.extract_strided_slice %374 {offsets = [0, 96], sizes = [8, 32], strides = [1, 1]} : vector<8x128xf32> to vector<8x32xf32>
    %378 = vector.extract_strided_slice %369 {offsets = [0, 64], sizes = [8, 32], strides = [1, 1]} : vector<8x128xf32> to vector<8x32xf32>
    %379 = math.tanh %378 : vector<8x32xf32>
    %380 = arith.mulf %376, %364 : vector<8x32xf32>
    %381 = arith.mulf %375, %379 : vector<8x32xf32>
    %382 = arith.addf %380, %381 : vector<8x32xf32>
    %383 = math.tanh %382 : vector<8x32xf32>
    %384 = arith.mulf %377, %383 : vector<8x32xf32>
    %385 = arith.truncf %384 : vector<8x32xf32> to vector<8x32xbf16>
    %cst_70 = arith.constant dense<0.000000e+00> : vector<8x128xf32>
    %386 = tpu.matmul %385, %314, %cst_70 {dimension_numbers = #tpu.dot_dimension_numbers<[1], [0], [0], [1], [0, 0, 1, 1], [], []>} : vector<8x32xbf16>, vector<32x128xbf16>, vector<8x128xf32> -> vector<8x128xf32>
    %387 = arith.addf %304, %386 : vector<8x128xf32>
    %388 = arith.negf %387 : vector<8x128xf32>
    %389 = math.exp %388 : vector<8x128xf32>
    %cst_71 = arith.constant 1.000000e+00 : f32
    %390 = vector.broadcast %cst_71 : f32 to vector<8x128xf32>
    %391 = arith.addf %390, %389 : vector<8x128xf32>
    %392 = arith.divf %390, %391 : vector<8x128xf32>
    %393 = vector.extract_strided_slice %392 {offsets = [0, 0], sizes = [8, 32], strides = [1, 1]} : vector<8x128xf32> to vector<8x32xf32>
    %394 = vector.extract_strided_slice %392 {offsets = [0, 32], sizes = [8, 32], strides = [1, 1]} : vector<8x128xf32> to vector<8x32xf32>
    %395 = vector.extract_strided_slice %392 {offsets = [0, 96], sizes = [8, 32], strides = [1, 1]} : vector<8x128xf32> to vector<8x32xf32>
    %396 = vector.extract_strided_slice %387 {offsets = [0, 64], sizes = [8, 32], strides = [1, 1]} : vector<8x128xf32> to vector<8x32xf32>
    %397 = math.tanh %396 : vector<8x32xf32>
    %398 = arith.mulf %394, %382 : vector<8x32xf32>
    %399 = arith.mulf %393, %397 : vector<8x32xf32>
    %400 = arith.addf %398, %399 : vector<8x32xf32>
    %401 = math.tanh %400 : vector<8x32xf32>
    %402 = arith.mulf %395, %401 : vector<8x32xf32>
    %403 = arith.truncf %402 : vector<8x32xf32> to vector<8x32xbf16>
    %cst_72 = arith.constant dense<0.000000e+00> : vector<8x128xf32>
    %404 = tpu.matmul %403, %314, %cst_72 {dimension_numbers = #tpu.dot_dimension_numbers<[1], [0], [0], [1], [0, 0, 1, 1], [], []>} : vector<8x32xbf16>, vector<32x128xbf16>, vector<8x128xf32> -> vector<8x128xf32>
    %405 = arith.addf %307, %404 : vector<8x128xf32>
    %406 = arith.negf %405 : vector<8x128xf32>
    %407 = math.exp %406 : vector<8x128xf32>
    %cst_73 = arith.constant 1.000000e+00 : f32
    %408 = vector.broadcast %cst_73 : f32 to vector<8x128xf32>
    %409 = arith.addf %408, %407 : vector<8x128xf32>
    %410 = arith.divf %408, %409 : vector<8x128xf32>
    %411 = vector.extract_strided_slice %410 {offsets = [0, 0], sizes = [8, 32], strides = [1, 1]} : vector<8x128xf32> to vector<8x32xf32>
    %412 = vector.extract_strided_slice %410 {offsets = [0, 32], sizes = [8, 32], strides = [1, 1]} : vector<8x128xf32> to vector<8x32xf32>
    %413 = vector.extract_strided_slice %410 {offsets = [0, 96], sizes = [8, 32], strides = [1, 1]} : vector<8x128xf32> to vector<8x32xf32>
    %414 = vector.extract_strided_slice %405 {offsets = [0, 64], sizes = [8, 32], strides = [1, 1]} : vector<8x128xf32> to vector<8x32xf32>
    %415 = math.tanh %414 : vector<8x32xf32>
    %416 = arith.mulf %412, %400 : vector<8x32xf32>
    %417 = arith.mulf %411, %415 : vector<8x32xf32>
    %418 = arith.addf %416, %417 : vector<8x32xf32>
    %419 = math.tanh %418 : vector<8x32xf32>
    %420 = arith.mulf %413, %419 : vector<8x32xf32>
    %421 = arith.truncf %420 : vector<8x32xf32> to vector<8x32xbf16>
    %cst_74 = arith.constant dense<0.000000e+00> : vector<8x128xf32>
    %422 = tpu.matmul %421, %314, %cst_74 {dimension_numbers = #tpu.dot_dimension_numbers<[1], [0], [0], [1], [0, 0, 1, 1], [], []>} : vector<8x32xbf16>, vector<32x128xbf16>, vector<8x128xf32> -> vector<8x128xf32>
    %423 = arith.addf %310, %422 : vector<8x128xf32>
    %424 = arith.negf %423 : vector<8x128xf32>
    %425 = math.exp %424 : vector<8x128xf32>
    %cst_75 = arith.constant 1.000000e+00 : f32
    %426 = vector.broadcast %cst_75 : f32 to vector<8x128xf32>
    %427 = arith.addf %426, %425 : vector<8x128xf32>
    %428 = arith.divf %426, %427 : vector<8x128xf32>
    %429 = vector.extract_strided_slice %428 {offsets = [0, 0], sizes = [8, 32], strides = [1, 1]} : vector<8x128xf32> to vector<8x32xf32>
    %430 = vector.extract_strided_slice %428 {offsets = [0, 32], sizes = [8, 32], strides = [1, 1]} : vector<8x128xf32> to vector<8x32xf32>
    %431 = vector.extract_strided_slice %428 {offsets = [0, 96], sizes = [8, 32], strides = [1, 1]} : vector<8x128xf32> to vector<8x32xf32>
    %432 = vector.extract_strided_slice %423 {offsets = [0, 64], sizes = [8, 32], strides = [1, 1]} : vector<8x128xf32> to vector<8x32xf32>
    %433 = math.tanh %432 : vector<8x32xf32>
    %434 = arith.mulf %430, %418 : vector<8x32xf32>
    %435 = arith.mulf %429, %433 : vector<8x32xf32>
    %436 = arith.addf %434, %435 : vector<8x32xf32>
    %437 = math.tanh %436 : vector<8x32xf32>
    %438 = arith.mulf %431, %437 : vector<8x32xf32>
    %439 = arith.truncf %438 : vector<8x32xf32> to vector<8x32xbf16>
    %cst_76 = arith.constant dense<0.000000e+00> : vector<8x128xf32>
    %440 = tpu.matmul %439, %314, %cst_76 {dimension_numbers = #tpu.dot_dimension_numbers<[1], [0], [0], [1], [0, 0, 1, 1], [], []>} : vector<8x32xbf16>, vector<32x128xbf16>, vector<8x128xf32> -> vector<8x128xf32>
    %441 = arith.addf %313, %440 : vector<8x128xf32>
    %442 = arith.negf %441 : vector<8x128xf32>
    %443 = math.exp %442 : vector<8x128xf32>
    %cst_77 = arith.constant 1.000000e+00 : f32
    %444 = vector.broadcast %cst_77 : f32 to vector<8x128xf32>
    %445 = arith.addf %444, %443 : vector<8x128xf32>
    %446 = arith.divf %444, %445 : vector<8x128xf32>
    %447 = vector.extract_strided_slice %446 {offsets = [0, 0], sizes = [8, 32], strides = [1, 1]} : vector<8x128xf32> to vector<8x32xf32>
    %448 = vector.extract_strided_slice %446 {offsets = [0, 32], sizes = [8, 32], strides = [1, 1]} : vector<8x128xf32> to vector<8x32xf32>
    %449 = vector.extract_strided_slice %446 {offsets = [0, 96], sizes = [8, 32], strides = [1, 1]} : vector<8x128xf32> to vector<8x32xf32>
    %450 = vector.extract_strided_slice %441 {offsets = [0, 64], sizes = [8, 32], strides = [1, 1]} : vector<8x128xf32> to vector<8x32xf32>
    %451 = math.tanh %450 : vector<8x32xf32>
    %452 = arith.mulf %448, %436 : vector<8x32xf32>
    %453 = arith.mulf %447, %451 : vector<8x32xf32>
    %454 = arith.addf %452, %453 : vector<8x32xf32>
    %455 = math.tanh %454 : vector<8x32xf32>
    %456 = arith.mulf %449, %455 : vector<8x32xf32>
    %457 = arith.select %30, %330, %456 : vector<8x32xi1>, vector<8x32xf32>
    %458 = arith.select %30, %348, %438 : vector<8x32xi1>, vector<8x32xf32>
    %459 = arith.select %30, %366, %420 : vector<8x32xi1>, vector<8x32xf32>
    %460 = arith.select %30, %384, %402 : vector<8x32xi1>, vector<8x32xf32>
    %461 = arith.select %30, %402, %384 : vector<8x32xi1>, vector<8x32xf32>
    %462 = arith.select %30, %420, %366 : vector<8x32xi1>, vector<8x32xf32>
    %463 = arith.select %30, %438, %348 : vector<8x32xi1>, vector<8x32xf32>
    %464 = arith.select %30, %456, %330 : vector<8x32xi1>, vector<8x32xf32>
    %465 = tpu.iota {dimensions = array<i32: 1>} : vector<8x8xi32>
    %cst_78 = arith.constant 0.000000e+00 : f32
    %466 = vector.broadcast %cst_78 : f32 to vector<8x8xf32>
    %467 = vector.broadcast %3 : vector<1x32xf32> to vector<8x32xf32>
    %468 = arith.mulf %457, %467 : vector<8x32xf32>
    %cst_79 = arith.constant dense<0.000000e+00> : vector<8xf32>
    %469 = vector.multi_reduction <add>, %468, %cst_79 [1] : vector<8x32xf32> to vector<8xf32>
    %470 = vector.shape_cast %469 : vector<8xf32> to vector<8x1xf32>
    %471 = vector.broadcast %4 : vector<1x1xf32> to vector<8x1xf32>
    %472 = arith.addf %470, %471 : vector<8x1xf32>
    %c0_i32_80 = arith.constant 0 : i32
    %473 = vector.broadcast %c0_i32_80 : i32 to vector<8x8xi32>
    %474 = arith.cmpi eq, %465, %473 : vector<8x8xi32>
    %475 = vector.shape_cast %472 : vector<8x1xf32> to vector<8x1xf32>
    %476 = vector.broadcast %475 : vector<8x1xf32> to vector<8x8xf32>
    %477 = arith.select %474, %476, %466 : vector<8x8xi1>, vector<8x8xf32>
    %478 = vector.broadcast %3 : vector<1x32xf32> to vector<8x32xf32>
    %479 = arith.mulf %458, %478 : vector<8x32xf32>
    %cst_81 = arith.constant dense<0.000000e+00> : vector<8xf32>
    %480 = vector.multi_reduction <add>, %479, %cst_81 [1] : vector<8x32xf32> to vector<8xf32>
    %481 = vector.shape_cast %480 : vector<8xf32> to vector<8x1xf32>
    %482 = vector.broadcast %4 : vector<1x1xf32> to vector<8x1xf32>
    %483 = arith.addf %481, %482 : vector<8x1xf32>
    %c1_i32_82 = arith.constant 1 : i32
    %484 = vector.broadcast %c1_i32_82 : i32 to vector<8x8xi32>
    %485 = arith.cmpi eq, %465, %484 : vector<8x8xi32>
    %486 = vector.shape_cast %483 : vector<8x1xf32> to vector<8x1xf32>
    %487 = vector.broadcast %486 : vector<8x1xf32> to vector<8x8xf32>
    %488 = arith.select %485, %487, %477 : vector<8x8xi1>, vector<8x8xf32>
    %489 = vector.broadcast %3 : vector<1x32xf32> to vector<8x32xf32>
    %490 = arith.mulf %459, %489 : vector<8x32xf32>
    %cst_83 = arith.constant dense<0.000000e+00> : vector<8xf32>
    %491 = vector.multi_reduction <add>, %490, %cst_83 [1] : vector<8x32xf32> to vector<8xf32>
    %492 = vector.shape_cast %491 : vector<8xf32> to vector<8x1xf32>
    %493 = vector.broadcast %4 : vector<1x1xf32> to vector<8x1xf32>
    %494 = arith.addf %492, %493 : vector<8x1xf32>
    %c2_i32 = arith.constant 2 : i32
    %495 = vector.broadcast %c2_i32 : i32 to vector<8x8xi32>
    %496 = arith.cmpi eq, %465, %495 : vector<8x8xi32>
    %497 = vector.shape_cast %494 : vector<8x1xf32> to vector<8x1xf32>
    %498 = vector.broadcast %497 : vector<8x1xf32> to vector<8x8xf32>
    %499 = arith.select %496, %498, %488 : vector<8x8xi1>, vector<8x8xf32>
    %500 = vector.broadcast %3 : vector<1x32xf32> to vector<8x32xf32>
    %501 = arith.mulf %460, %500 : vector<8x32xf32>
    %cst_84 = arith.constant dense<0.000000e+00> : vector<8xf32>
    %502 = vector.multi_reduction <add>, %501, %cst_84 [1] : vector<8x32xf32> to vector<8xf32>
    %503 = vector.shape_cast %502 : vector<8xf32> to vector<8x1xf32>
    %504 = vector.broadcast %4 : vector<1x1xf32> to vector<8x1xf32>
    %505 = arith.addf %503, %504 : vector<8x1xf32>
    %c3_i32 = arith.constant 3 : i32
    %506 = vector.broadcast %c3_i32 : i32 to vector<8x8xi32>
    %507 = arith.cmpi eq, %465, %506 : vector<8x8xi32>
    %508 = vector.shape_cast %505 : vector<8x1xf32> to vector<8x1xf32>
    %509 = vector.broadcast %508 : vector<8x1xf32> to vector<8x8xf32>
    %510 = arith.select %507, %509, %499 : vector<8x8xi1>, vector<8x8xf32>
    %511 = vector.broadcast %3 : vector<1x32xf32> to vector<8x32xf32>
    %512 = arith.mulf %461, %511 : vector<8x32xf32>
    %cst_85 = arith.constant dense<0.000000e+00> : vector<8xf32>
    %513 = vector.multi_reduction <add>, %512, %cst_85 [1] : vector<8x32xf32> to vector<8xf32>
    %514 = vector.shape_cast %513 : vector<8xf32> to vector<8x1xf32>
    %515 = vector.broadcast %4 : vector<1x1xf32> to vector<8x1xf32>
    %516 = arith.addf %514, %515 : vector<8x1xf32>
    %c4_i32 = arith.constant 4 : i32
    %517 = vector.broadcast %c4_i32 : i32 to vector<8x8xi32>
    %518 = arith.cmpi eq, %465, %517 : vector<8x8xi32>
    %519 = vector.shape_cast %516 : vector<8x1xf32> to vector<8x1xf32>
    %520 = vector.broadcast %519 : vector<8x1xf32> to vector<8x8xf32>
    %521 = arith.select %518, %520, %510 : vector<8x8xi1>, vector<8x8xf32>
    %522 = vector.broadcast %3 : vector<1x32xf32> to vector<8x32xf32>
    %523 = arith.mulf %462, %522 : vector<8x32xf32>
    %cst_86 = arith.constant dense<0.000000e+00> : vector<8xf32>
    %524 = vector.multi_reduction <add>, %523, %cst_86 [1] : vector<8x32xf32> to vector<8xf32>
    %525 = vector.shape_cast %524 : vector<8xf32> to vector<8x1xf32>
    %526 = vector.broadcast %4 : vector<1x1xf32> to vector<8x1xf32>
    %527 = arith.addf %525, %526 : vector<8x1xf32>
    %c5_i32 = arith.constant 5 : i32
    %528 = vector.broadcast %c5_i32 : i32 to vector<8x8xi32>
    %529 = arith.cmpi eq, %465, %528 : vector<8x8xi32>
    %530 = vector.shape_cast %527 : vector<8x1xf32> to vector<8x1xf32>
    %531 = vector.broadcast %530 : vector<8x1xf32> to vector<8x8xf32>
    %532 = arith.select %529, %531, %521 : vector<8x8xi1>, vector<8x8xf32>
    %533 = vector.broadcast %3 : vector<1x32xf32> to vector<8x32xf32>
    %534 = arith.mulf %463, %533 : vector<8x32xf32>
    %cst_87 = arith.constant dense<0.000000e+00> : vector<8xf32>
    %535 = vector.multi_reduction <add>, %534, %cst_87 [1] : vector<8x32xf32> to vector<8xf32>
    %536 = vector.shape_cast %535 : vector<8xf32> to vector<8x1xf32>
    %537 = vector.broadcast %4 : vector<1x1xf32> to vector<8x1xf32>
    %538 = arith.addf %536, %537 : vector<8x1xf32>
    %c6_i32 = arith.constant 6 : i32
    %539 = vector.broadcast %c6_i32 : i32 to vector<8x8xi32>
    %540 = arith.cmpi eq, %465, %539 : vector<8x8xi32>
    %541 = vector.shape_cast %538 : vector<8x1xf32> to vector<8x1xf32>
    %542 = vector.broadcast %541 : vector<8x1xf32> to vector<8x8xf32>
    %543 = arith.select %540, %542, %532 : vector<8x8xi1>, vector<8x8xf32>
    %544 = vector.broadcast %3 : vector<1x32xf32> to vector<8x32xf32>
    %545 = arith.mulf %464, %544 : vector<8x32xf32>
    %cst_88 = arith.constant dense<0.000000e+00> : vector<8xf32>
    %546 = vector.multi_reduction <add>, %545, %cst_88 [1] : vector<8x32xf32> to vector<8xf32>
    %547 = vector.shape_cast %546 : vector<8xf32> to vector<8x1xf32>
    %548 = vector.broadcast %4 : vector<1x1xf32> to vector<8x1xf32>
    %549 = arith.addf %547, %548 : vector<8x1xf32>
    %c7_i32 = arith.constant 7 : i32
    %550 = vector.broadcast %c7_i32 : i32 to vector<8x8xi32>
    %551 = arith.cmpi eq, %465, %550 : vector<8x8xi32>
    %552 = vector.shape_cast %549 : vector<8x1xf32> to vector<8x1xf32>
    %553 = vector.broadcast %552 : vector<8x1xf32> to vector<8x8xf32>
    %554 = arith.select %551, %553, %543 : vector<8x8xi1>, vector<8x8xf32>
    %c0_89 = arith.constant 0 : index
    %c0_90 = arith.constant 0 : index
    %555 = vector.load %arg2[%c0_89, %c0_90] : memref<8x8xi32, #tpu.memory_space<vmem>>, vector<8x8xi32>
    %c0_i32_91 = arith.constant 0 : i32
    %556 = vector.broadcast %c0_i32_91 : i32 to vector<8x8xi32>
    %557 = arith.cmpi sgt, %555, %556 : vector<8x8xi32>
    %cst_92 = arith.constant -1.000000e+30 : f32
    %558 = vector.broadcast %cst_92 : f32 to vector<8x8xf32>
    %559 = arith.select %557, %554, %558 : vector<8x8xi1>, vector<8x8xf32>
    %cst_93 = arith.constant dense<0xFF800000> : vector<8xf32>
    %560 = vector.multi_reduction <maximumf>, %559, %cst_93 [1] : vector<8x8xf32> to vector<8xf32>
    %561 = vector.shape_cast %560 : vector<8xf32> to vector<8x1xf32>
    %562 = vector.broadcast %561 : vector<8x1xf32> to vector<8x8xf32>
    %563 = arith.subf %559, %562 : vector<8x8xf32>
    %564 = math.exp %563 : vector<8x8xf32>
    %cst_94 = arith.constant dense<0.000000e+00> : vector<8xf32>
    %565 = vector.multi_reduction <add>, %564, %cst_94 [1] : vector<8x8xf32> to vector<8xf32>
    %566 = vector.shape_cast %565 : vector<8xf32> to vector<8x1xf32>
    %567 = vector.broadcast %566 : vector<8x1xf32> to vector<8x8xf32>
    %568 = arith.divf %564, %567 : vector<8x8xf32>
    %cst_95 = arith.constant 0.000000e+00 : f32
    %569 = vector.broadcast %cst_95 : f32 to vector<8x32xf32>
    %570 = vector.extract_strided_slice %568 {offsets = [0, 0], sizes = [8, 1], strides = [1, 1]} : vector<8x8xf32> to vector<8x1xf32>
    %571 = vector.broadcast %570 : vector<8x1xf32> to vector<8x32xf32>
    %572 = arith.mulf %571, %457 : vector<8x32xf32>
    %573 = arith.addf %569, %572 : vector<8x32xf32>
    %574 = vector.extract_strided_slice %568 {offsets = [0, 1], sizes = [8, 1], strides = [1, 1]} : vector<8x8xf32> to vector<8x1xf32>
    %575 = vector.broadcast %574 : vector<8x1xf32> to vector<8x32xf32>
    %576 = arith.mulf %575, %458 : vector<8x32xf32>
    %577 = arith.addf %573, %576 : vector<8x32xf32>
    %578 = vector.extract_strided_slice %568 {offsets = [0, 2], sizes = [8, 1], strides = [1, 1]} : vector<8x8xf32> to vector<8x1xf32>
    %579 = vector.broadcast %578 : vector<8x1xf32> to vector<8x32xf32>
    %580 = arith.mulf %579, %459 : vector<8x32xf32>
    %581 = arith.addf %577, %580 : vector<8x32xf32>
    %582 = vector.extract_strided_slice %568 {offsets = [0, 3], sizes = [8, 1], strides = [1, 1]} : vector<8x8xf32> to vector<8x1xf32>
    %583 = vector.broadcast %582 : vector<8x1xf32> to vector<8x32xf32>
    %584 = arith.mulf %583, %460 : vector<8x32xf32>
    %585 = arith.addf %581, %584 : vector<8x32xf32>
    %586 = vector.extract_strided_slice %568 {offsets = [0, 4], sizes = [8, 1], strides = [1, 1]} : vector<8x8xf32> to vector<8x1xf32>
    %587 = vector.broadcast %586 : vector<8x1xf32> to vector<8x32xf32>
    %588 = arith.mulf %587, %461 : vector<8x32xf32>
    %589 = arith.addf %585, %588 : vector<8x32xf32>
    %590 = vector.extract_strided_slice %568 {offsets = [0, 5], sizes = [8, 1], strides = [1, 1]} : vector<8x8xf32> to vector<8x1xf32>
    %591 = vector.broadcast %590 : vector<8x1xf32> to vector<8x32xf32>
    %592 = arith.mulf %591, %462 : vector<8x32xf32>
    %593 = arith.addf %589, %592 : vector<8x32xf32>
    %594 = vector.extract_strided_slice %568 {offsets = [0, 6], sizes = [8, 1], strides = [1, 1]} : vector<8x8xf32> to vector<8x1xf32>
    %595 = vector.broadcast %594 : vector<8x1xf32> to vector<8x32xf32>
    %596 = arith.mulf %595, %463 : vector<8x32xf32>
    %597 = arith.addf %593, %596 : vector<8x32xf32>
    %598 = vector.extract_strided_slice %568 {offsets = [0, 7], sizes = [8, 1], strides = [1, 1]} : vector<8x8xf32> to vector<8x1xf32>
    %599 = vector.broadcast %598 : vector<8x1xf32> to vector<8x32xf32>
    %600 = arith.mulf %599, %464 : vector<8x32xf32>
    %601 = arith.addf %597, %600 : vector<8x32xf32>
    %602 = arith.truncf %601 : vector<8x32xf32> to vector<8x32xbf16>
    %c0_96 = arith.constant 0 : index
    %c0_97 = arith.constant 0 : index
    %603 = vector.load %arg7[%c0_96, %c0_97] : memref<32x16xbf16, #tpu.memory_space<vmem>>, vector<32x16xbf16>
    %cst_98 = arith.constant dense<0.000000e+00> : vector<8x16xf32>
    %604 = tpu.matmul %602, %603, %cst_98 {dimension_numbers = #tpu.dot_dimension_numbers<[1], [0], [0], [1], [0, 0, 1, 1], [], []>} : vector<8x32xbf16>, vector<32x16xbf16>, vector<8x16xf32> -> vector<8x16xf32>
    %605 = vector.broadcast %5 : vector<1x16xf32> to vector<8x16xf32>
    %606 = arith.addf %604, %605 : vector<8x16xf32>
    %cst_99 = arith.constant 0.000000e+00 : f32
    %607 = vector.broadcast %cst_99 : f32 to vector<8x16xf32>
    %608 = arith.maximumf %606, %607 : vector<8x16xf32>
    %cst_100 = arith.constant dense<0.000000e+00> : vector<8xf32>
    %609 = vector.multi_reduction <add>, %608, %cst_100 [1] : vector<8x16xf32> to vector<8xf32>
    %610 = vector.shape_cast %609 : vector<8xf32> to vector<8x1xf32>
    %cst_101 = arith.constant 1.600000e+01 : f32
    %611 = vector.broadcast %cst_101 : f32 to vector<8x1xf32>
    %612 = arith.divf %610, %611 : vector<8x1xf32>
    %613 = vector.broadcast %612 : vector<8x1xf32> to vector<8x16xf32>
    %614 = arith.subf %608, %613 : vector<8x16xf32>
    %615 = arith.mulf %614, %614 : vector<8x16xf32>
    %cst_102 = arith.constant dense<0.000000e+00> : vector<8xf32>
    %616 = vector.multi_reduction <add>, %615, %cst_102 [1] : vector<8x16xf32> to vector<8xf32>
    %617 = vector.shape_cast %616 : vector<8xf32> to vector<8x1xf32>
    %cst_103 = arith.constant 1.600000e+01 : f32
    %618 = vector.broadcast %cst_103 : f32 to vector<8x1xf32>
    %619 = arith.divf %617, %618 : vector<8x1xf32>
    %620 = vector.broadcast %612 : vector<8x1xf32> to vector<8x16xf32>
    %621 = arith.subf %608, %620 : vector<8x16xf32>
    %cst_104 = arith.constant 9.99999974E-6 : f32
    %622 = vector.broadcast %cst_104 : f32 to vector<8x1xf32>
    %623 = arith.addf %619, %622 : vector<8x1xf32>
    %624 = math.rsqrt %623 : vector<8x1xf32>
    %625 = vector.broadcast %624 : vector<8x1xf32> to vector<8x16xf32>
    %626 = arith.mulf %621, %625 : vector<8x16xf32>
    %627 = vector.broadcast %6 : vector<1x16xf32> to vector<8x16xf32>
    %628 = arith.mulf %626, %627 : vector<8x16xf32>
    %629 = vector.broadcast %7 : vector<1x16xf32> to vector<8x16xf32>
    %630 = arith.addf %628, %629 : vector<8x16xf32>
    %631 = arith.truncf %630 : vector<8x16xf32> to vector<8x16xbf16>
    %c0_105 = arith.constant 0 : index
    %c0_106 = arith.constant 0 : index
    %632 = vector.load %arg8[%c0_105, %c0_106] : memref<16x128xbf16, #tpu.memory_space<vmem>>, vector<16x128xbf16>
    %cst_107 = arith.constant dense<0.000000e+00> : vector<8x128xf32>
    %633 = tpu.matmul %631, %632, %cst_107 {dimension_numbers = #tpu.dot_dimension_numbers<[1], [0], [0], [1], [0, 0, 1, 1], [], []>} : vector<8x16xbf16>, vector<16x128xbf16>, vector<8x128xf32> -> vector<8x128xf32>
    %634 = vector.broadcast %8 : vector<1x128xf32> to vector<8x128xf32>
    %635 = arith.addf %633, %634 : vector<8x128xf32>
    %c0_108 = arith.constant 0 : index
    %c0_109 = arith.constant 0 : index
    %636 = vector.load %arg10[%c0_108, %c0_109] : memref<8x128xf32, #tpu.memory_space<vmem>>, vector<8x128xf32>
    tpu.vector_store %arg10[%c0_108, %c0_109], %635 {strides = array<i32>} : memref<8x128xf32, #tpu.memory_space<vmem>>, vector<8x128xf32>,
    return
  }
  func.func @transform_0(%arg0: i32) -> (i32, i32) {
    %c0_i32 = arith.constant 0 : i32
    %c0_i32_0 = arith.constant 0 : i32
    return %arg0, %c0_i32 : i32, i32
  }
  func.func @transform_1(%arg0: i32) -> (i32, i32) {
    %c0_i32 = arith.constant 0 : i32
    %c0_i32_0 = arith.constant 0 : i32
    return %arg0, %c0_i32 : i32, i32
  }
  func.func @transform_2(%arg0: i32) -> (i32, i32) {
    %c0_i32 = arith.constant 0 : i32
    %c0_i32_0 = arith.constant 0 : i32
    %c0_i32_1 = arith.constant 0 : i32
    return %c0_i32, %c0_i32_0 : i32, i32
  }
  func.func @transform_3(%arg0: i32) -> (i32, i32) {
    %c0_i32 = arith.constant 0 : i32
    %c0_i32_0 = arith.constant 0 : i32
    %c0_i32_1 = arith.constant 0 : i32
    return %c0_i32, %c0_i32_0 : i32, i32
  }
  func.func @transform_4(%arg0: i32) -> (i32, i32) {
    %c0_i32 = arith.constant 0 : i32
    %c0_i32_0 = arith.constant 0 : i32
    %c0_i32_1 = arith.constant 0 : i32
    return %c0_i32, %c0_i32_0 : i32, i32
  }
  func.func @transform_5(%arg0: i32) -> (i32, i32) {
    %c0_i32 = arith.constant 0 : i32
    %c0_i32_0 = arith.constant 0 : i32
    %c0_i32_1 = arith.constant 0 : i32
    return %c0_i32, %c0_i32_0 : i32, i32
  }
  func.func @transform_6(%arg0: i32) -> (i32, i32) {
    %c0_i32 = arith.constant 0 : i32
    %c0_i32_0 = arith.constant 0 : i32
    %c0_i32_1 = arith.constant 0 : i32
    return %c0_i32, %c0_i32_0 : i32, i32
  }
  func.func @transform_7(%arg0: i32) -> (i32, i32) {
    %c0_i32 = arith.constant 0 : i32
    %c0_i32_0 = arith.constant 0 : i32
    %c0_i32_1 = arith.constant 0 : i32
    return %c0_i32, %c0_i32_0 : i32, i32
  }
  func.func @transform_8(%arg0: i32) -> (i32, i32) {
    %c0_i32 = arith.constant 0 : i32
    %c0_i32_0 = arith.constant 0 : i32
    %c0_i32_1 = arith.constant 0 : i32
    return %c0_i32, %c0_i32_0 : i32, i32
  }
  func.func @transform_9(%arg0: i32) -> (i32, i32) {
    %c0_i32 = arith.constant 0 : i32
    %c0_i32_0 = arith.constant 0 : i32
    return %arg0, %c0_i32 : i32, i32
  }
}

</mosaic_0001>

<llo_original>
// kernel: lstm_model_forward.1
$region0: #{lstm_model_forward.1}
  #allocation0 [shape = 'u32[]', space=smem, size = 0x4, offset = 0x4, fixed_abs, tag = 'smem constant byte address 0x4 - core index']
  #allocation1 [shape = 'u32[144,128]{1,0:T(1,128)}', space=vmem, size = 0x12000, scoped, tag = 'internal scratch']
  %s0 = inlined_call_operand.vmem [shape: s32[8,8], index: 0, kind: input, shape index: {}]
  %s1 = inlined_call_operand.vmem [shape: s32[8,8], index: 1, kind: input, shape index: {}]
  %s2 = inlined_call_operand.hbm [shape: bf16[128,128], index: 2, kind: input, shape index: {}]
  %s3 = inlined_call_operand.vmem [shape: bf16[32,128], index: 3, kind: input, shape index: {}]
  %s4 = inlined_call_operand.vmem [shape: bf16[32,128], index: 4, kind: input, shape index: {}]
  %s5 = inlined_call_operand.vmem [shape: bf16[32,128], index: 5, kind: input, shape index: {}]
  %s6 = inlined_call_operand.vmem [shape: bf16[32,16], index: 6, kind: input, shape index: {}]
  %s7 = inlined_call_operand.hbm [shape: bf16[16,128], index: 7, kind: input, shape index: {}]
  %s8 = inlined_call_operand.vmem [shape: f32[8,128], index: 8, kind: input, shape index: {}]
  %s9 = inlined_call_operand.vmem [shape: f32[8,128], index: 9, kind: output, shape index: {}]
  %s10 = sld [smem:[#allocation0]]
  $region54: #{lstm_model_forward.1} parent=0
    _
  %s12 = ssub.s32 1, %s10
  %s13 = scalar_select 0, %s12, %s10
  $region1: #{lstm_model_forward.1} parent=0
    #allocation2 [shape = 'u8[32768]{0}', space=vmem, size = 0x8000, scoped, tag = 'input window, operand 2, single buffered']
    #allocation3 [shape = 's32[1]{0}', space=sflag, size = 0x4, scoped, tag = 'scoped memory for lstm_model_forward.1']
    #allocation4 [shape = 'u8[4096]{0}', space=vmem, size = 0x1000, scoped, tag = 'input window, operand 7, single buffered']
    #allocation5 [shape = 's32[1]{0}', space=sflag, size = 0x4, scoped, tag = 'scoped memory for lstm_model_forward.1']
    %14 = vsyncpa [#allocation3], 0
    %15 = vsyncpa [#allocation5], 0
    // Predicated region
    $region2: #{lstm_model_forward.1} parent=1 // pred_check
      _
    $region3: #{lstm_model_forward.1} parent=1 // pred_check_branch
      %17 = sbr.rel (0) target = $region5
    $region4: #{lstm_model_forward.1} parent=1 // pred_region
      _
    $region5: #{lstm_model_forward.1} parent=1 // pred_fallthru
      _
    // Predicated region
    $region6: #{lstm_model_forward.1} parent=1 // pred_check
      _
    $region7: #{lstm_model_forward.1} parent=1 // pred_check_branch
      %19 = sbr.rel (0) target = $region9
    $region8: #{lstm_model_forward.1} parent=1 // pred_region
      _
    $region9: #{lstm_model_forward.1} parent=1 // pred_fallthru
      _
    // Predicated region
    $region10: #{lstm_model_forward.1} parent=1 // pred_check
      _
    $region11: #{lstm_model_forward.1} parent=1 // pred_check_branch
      %21 = sbr.rel (0) target = $region13
    $region12: #{lstm_model_forward.1} parent=1 // pred_region
      %s23 = ssub.s32 1024, 1024
      %24 = vsyncadd [#allocation3], %s23
      %s25 = sshll.u32 [#allocation2], 4
      %s26 = int_to_ptr.vmem [resolvable:$true] %s25
      %31 = dma.hbm_to_vmem [thread:$0]  %s2, 1024, %s26, [#allocation3], 64, 64, 4
    $region13: #{lstm_model_forward.1} parent=1 // pred_fallthru
      _
    // Predicated region
    $region14: #{lstm_model_forward.1} parent=1 // pred_check
      _
    $region15: #{lstm_model_forward.1} parent=1 // pred_check_branch
      %33 = sbr.rel (0) target = $region17
    $region16: #{lstm_model_forward.1} parent=1 // pred_region
      _
    $region17: #{lstm_model_forward.1} parent=1 // pred_fallthru
      _
    // Predicated region
    $region18: #{lstm_model_forward.1} parent=1 // pred_check
      _
    $region19: #{lstm_model_forward.1} parent=1 // pred_check_branch
      %35 = sbr.rel (0) target = $region21
    $region20: #{lstm_model_forward.1} parent=1 // pred_region
      _
    $region21: #{lstm_model_forward.1} parent=1 // pred_fallthru
      _
    // Predicated region
    $region22: #{lstm_model_forward.1} parent=1 // pred_check
      _
    $region23: #{lstm_model_forward.1} parent=1 // pred_check_branch
      %37 = sbr.rel (0) target = $region25
    $region24: #{lstm_model_forward.1} parent=1 // pred_region
      _
    $region25: #{lstm_model_forward.1} parent=1 // pred_fallthru
      _
    // Predicated region
    $region26: #{lstm_model_forward.1} parent=1 // pred_check
      _
    $region27: #{lstm_model_forward.1} parent=1 // pred_check_branch
      %39 = sbr.rel (0) target = $region29
    $region28: #{lstm_model_forward.1} parent=1 // pred_region
      _
    $region29: #{lstm_model_forward.1} parent=1 // pred_fallthru
      _
    // Predicated region
    $region30: #{lstm_model_forward.1} parent=1 // pred_check
      _
    $region31: #{lstm_model_forward.1} parent=1 // pred_check_branch
      %41 = sbr.rel (0) target = $region33
    $region32: #{lstm_model_forward.1} parent=1 // pred_region
      %s43 = ssub.s32 128, 128
      %44 = vsyncadd [#allocation5], %s43
      %s45 = sshll.u32 [#allocation4], 4
      %s46 = int_to_ptr.vmem [resolvable:$true] %s45
      %51 = dma.hbm_to_vmem [thread:$0]  %s7, 128, %s46, [#allocation5], 64, 64, 4
    $region33: #{lstm_model_forward.1} parent=1 // pred_fallthru
      _
    // Predicated region
    $region34: #{lstm_model_forward.1} parent=1 // pred_check
      _
    $region35: #{lstm_model_forward.1} parent=1 // pred_check_branch
      %53 = sbr.rel (0) target = $region37
    $region36: #{lstm_model_forward.1} parent=1 // pred_region
      _
    $region37: #{lstm_model_forward.1} parent=1 // pred_fallthru
      _
    // Predicated region
    $region38: #{lstm_model_forward.1} parent=1 // pred_check
      _
    $region39: #{lstm_model_forward.1} parent=1 // pred_check_branch
      %55 = sbr.rel (0) target = $region41
    $region40: #{lstm_model_forward.1} parent=1 // pred_region
      %56 = dma.done [#allocation3], 1024
    $region41: #{lstm_model_forward.1} parent=1 // pred_fallthru
      _
    // Predicated region
    $region42: #{lstm_model_forward.1} parent=1 // pred_check
      _
    $region43: #{lstm_model_forward.1} parent=1 // pred_check_branch
      %58 = sbr.rel (0) target = $region45
    $region44: #{lstm_model_forward.1} parent=1 // pred_region
      %59 = dma.done [#allocation5], 128
    $region45: #{lstm_model_forward.1} parent=1 // pred_fallthru
      _
    %v61 = vld [vmem:[%s8] sm:$0xff]
    %v62 = vlaneseq
    %v63 = vand.u32 %v62, 127
    %vm64 = vcmp.lt.s32.totalorder %v63, 0
    %v65 = vsub.s32 0, %v63
    %v66 = vsel %vm64, %v65, %v63
    %v67 = vshrl.u32 %v66, 5
    %v68 = vand.u32 %v66, 31
    %v69 = vsub.s32 0, %v68
    %v70 = vsel %vm64, %v69, %v68
    %vm71 = vcmp.ne.s32.totalorder %v70, 0
    %vm72 = vcmp.lt.s32.totalorder %v70, 0
    %vm73 = vmand %vm72, %vm71
    %v74 = vadd.s32 %v70, 32
    %v75 = vsel %vm73, %v74, %v70
    %vm76 = vcmp.lt.s32.totalorder %v75, 16
    %vm77 = vcmp.lt.s32.totalorder %v63, 16
    %v78 = vld [vmem:[%s0] sm:$0xff]
    %v79 = vld [vmem:[#allocation2] sm:$0xf]
    %v80 = vld [vmem:[#allocation2 + $0x4] sm:$0xf]
    %v81 = vld [vmem:[#allocation2 + $0x8] sm:$0xf]
    %v82 = vld [vmem:[#allocation2 + $0xc] sm:$0xf]
    %v83 = vld [vmem:[#allocation2 + $0x10] sm:$0xf]
    %v84 = vld [vmem:[#allocation2 + $0x14] sm:$0xf]
    %v85 = vld [vmem:[#allocation2 + $0x18] sm:$0xf]
    %v86 = vld [vmem:[#allocation2 + $0x1c] sm:$0xf]
    %v87 = vld [vmem:[#allocation2 + $0x20] sm:$0xf]
    %v88 = vld [vmem:[#allocation2 + $0x24] sm:$0xf]
    %v89 = vld [vmem:[#allocation2 + $0x28] sm:$0xf]
    %v90 = vld [vmem:[#allocation2 + $0x2c] sm:$0xf]
    %v91 = vld [vmem:[#allocation2 + $0x30] sm:$0xf]
    %v92 = vld [vmem:[#allocation2 + $0x34] sm:$0xf]
    %v93 = vld [vmem:[#allocation2 + $0x38] sm:$0xf]
    %v94 = vld [vmem:[#allocation2 + $0x3c] sm:$0xf]
    %95 = vset.pattern.permute.xlu0 0
    %96 = vperm.xlu0 %95, %v78
    %v97 = vpop.permute.xlu0 %96
    %vm98 = vcmp.eq.s32.totalorder %v97, %v63
    %v99 = vsel %vm98, 1.0, 0.0
    %v100 = vpack.c.bf16 %v99, %v99
    %v117 = vunpack.c.l.b16 %v79
    %v118 = vunpack.c.l.b16 %v80
    %v119 = vunpack.c.l.b16 %v81
    %v120 = vunpack.c.l.b16 %v82
    %v121 = vunpack.c.l.b16 %v83
    %v122 = vunpack.c.l.b16 %v84
    %v123 = vunpack.c.l.b16 %v85
    %v124 = vunpack.c.l.b16 %v86
    %v125 = vunpack.c.l.b16 %v87
    %v126 = vunpack.c.l.b16 %v88
    %v127 = vunpack.c.l.b16 %v89
    %v128 = vunpack.c.l.b16 %v90
    %v129 = vunpack.c.l.b16 %v91
    %v130 = vunpack.c.l.b16 %v92
    %v131 = vunpack.c.l.b16 %v93
    %v132 = vunpack.c.l.b16 %v94
    %v133 = vpack.c.b16 %v118, %v117
    %v134 = vpack.c.b16 %v120, %v119
    %v135 = vpack.c.b16 %v122, %v121
    %v136 = vpack.c.b16 %v124, %v123
    %v137 = vpack.c.b16 %v126, %v125
    %v138 = vpack.c.b16 %v128, %v127
    %v139 = vpack.c.b16 %v130, %v129
    %v140 = vpack.c.b16 %v132, %v131
    %149 = vmatprep.subr.bf16.mxu0 0
    %150 = vmatpush1.bf16.msra.mxu0 %v133
    %151 = vmatprep.subr.bf16.mxu0 0
    %152 = vmatpush1.bf16.msra.mxu0 %v134
    %153 = vmatprep.subr.bf16.mxu0 0
    %154 = vmatpush1.bf16.msra.mxu0 %v135
    %155 = vmatprep.subr.bf16.mxu0 0
    %156 = vmatpush1.bf16.msra.mxu0 %v136
    %157 = vmatprep.subr.bf16.mxu0 0
    %158 = vmatpush1.bf16.msra.mxu0 %v137
    %159 = vmatprep.subr.bf16.mxu0 0
    %160 = vmatpush1.bf16.msra.mxu0 %v138
    %161 = vmatprep.subr.bf16.mxu0 0
    %162 = vmatpush1.bf16.msra.mxu0 %v139
    %163 = vmatprep.subr.bf16.mxu0 0
    %164 = vmatpush1.bf16.msra.mxu0 %v140
    %165 = vmatprep.subr.bf16.mxu0 0
    %166 = vmatpush1.bf16.msra.mxu0 0
    %167 = vmatprep.subr.bf16.mxu0 0
    %168 = vmatpush1.bf16.msra.mxu0 0
    %169 = vmatprep.subr.bf16.mxu0 0
    %170 = vmatpush1.bf16.msra.mxu0 0
    %171 = vmatprep.subr.bf16.mxu0 0
    %172 = vmatpush1.bf16.msra.mxu0 0
    %173 = vmatprep.subr.bf16.mxu0 0
    %174 = vmatpush1.bf16.msra.mxu0 0
    %175 = vmatprep.subr.bf16.mxu0 0
    %176 = vmatpush1.bf16.msra.mxu0 0
    %177 = vmatprep.subr.bf16.mxu0 0
    %178 = vmatpush1.bf16.msra.mxu0 0
    %179 = vmatprep.subr.bf16.mxu0 0
    %180 = vmatpush1.bf16.msra.mxu0 0
    %181 = vmatprep.mubr.bf16.mxu0 0
    %182 = vmatmul.mubr.bf16.gmra.mrb[0].mxu0 %v100
    %v183 = vpop.f32.mrb[0].mxu0
    %v184 = vadd.f32 0.0, %v183
    %v185 = vpop.f32.mrb[0].mxu0
    %v186 = vpop.f32.mrb[0].mxu0
    %v187 = vpop.f32.mrb[0].mxu0
    %188 = vdwg.mxu0
    %189 = vset.pattern.permute.xlu0 1
    %190 = vperm.xlu0 %189, %v78
    %v191 = vpop.permute.xlu0 %190
    %vm192 = vcmp.eq.s32.totalorder %v191, %v63
    %v193 = vsel %vm192, 1.0, 0.0
    %v194 = vpack.c.bf16 %v193, %v193
    %195 = vmatprep.subr.bf16.mxu0 0
    %196 = vmatpush1.bf16.msra.mxu0 %v133
    %197 = vmatprep.subr.bf16.mxu0 0
    %198 = vmatpush1.bf16.msra.mxu0 %v134
    %199 = vmatprep.subr.bf16.mxu0 0
    %200 = vmatpush1.bf16.msra.mxu0 %v135
    %201 = vmatprep.subr.bf16.mxu0 0
    %202 = vmatpush1.bf16.msra.mxu0 %v136
    %203 = vmatprep.subr.bf16.mxu0 0
    %204 = vmatpush1.bf16.msra.mxu0 %v137
    %205 = vmatprep.subr.bf16.mxu0 0
    %206 = vmatpush1.bf16.msra.mxu0 %v138
    %207 = vmatprep.subr.bf16.mxu0 0
    %208 = vmatpush1.bf16.msra.mxu0 %v139
    %209 = vmatprep.subr.bf16.mxu0 0
    %210 = vmatpush1.bf16.msra.mxu0 %v140
    %211 = vmatprep.subr.bf16.mxu0 0
    %212 = vmatpush1.bf16.msra.mxu0 0
    %213 = vmatprep.subr.bf16.mxu0 0
    %214 = vmatpush1.bf16.msra.mxu0 0
    %215 = vmatprep.subr.bf16.mxu0 0
    %216 = vmatpush1.bf16.msra.mxu0 0
    %217 = vmatprep.subr.bf16.mxu0 0
    %218 = vmatpush1.bf16.msra.mxu0 0
    %219 = vmatprep.subr.bf16.mxu0 0
    %220 = vmatpush1.bf16.msra.mxu0 0
    %221 = vmatprep.subr.bf16.mxu0 0
    %222 = vmatpush1.bf16.msra.mxu0 0
    %223 = vmatprep.subr.bf16.mxu0 0
    %224 = vmatpush1.bf16.msra.mxu0 0
    %225 = vmatprep.subr.bf16.mxu0 0
    %226 = vmatpush1.bf16.msra.mxu0 0
    %227 = vmatprep.mubr.bf16.mxu0 0
    %228 = vmatmul.mubr.bf16.gmra.mrb[0].mxu0 %v194
    %v229 = vpop.f32.mrb[0].mxu0
    %v230 = vadd.f32 0.0, %v229
    %v231 = vpop.f32.mrb[0].mxu0
    %v232 = vpop.f32.mrb[0].mxu0
    %v233 = vpop.f32.mrb[0].mxu0
    %234 = vdwg.mxu0
    %235 = vset.pattern.permute.xlu0 2
    %236 = vperm.xlu0 %235, %v78
    %v237 = vpop.permute.xlu0 %236
    %vm238 = vcmp.eq.s32.totalorder %v237, %v63
    %v239 = vsel %vm238, 1.0, 0.0
    %v240 = vpack.c.bf16 %v239, %v239
    %241 = vmatprep.subr.bf16.mxu0 0
    %242 = vmatpush1.bf16.msra.mxu0 %v133
    %243 = vmatprep.subr.bf16.mxu0 0
    %244 = vmatpush1.bf16.msra.mxu0 %v134
    %245 = vmatprep.subr.bf16.mxu0 0
    %246 = vmatpush1.bf16.msra.mxu0 %v135
    %247 = vmatprep.subr.bf16.mxu0 0
    %248 = vmatpush1.bf16.msra.mxu0 %v136
    %249 = vmatprep.subr.bf16.mxu0 0
    %250 = vmatpush1.bf16.msra.mxu0 %v137
    %251 = vmatprep.subr.bf16.mxu0 0
    %252 = vmatpush1.bf16.msra.mxu0 %v138
    %253 = vmatprep.subr.bf16.mxu0 0
    %254 = vmatpush1.bf16.msra.mxu0 %v139
    %255 = vmatprep.subr.bf16.mxu0 0
    %256 = vmatpush1.bf16.msra.mxu0 %v140
    %257 = vmatprep.subr.bf16.mxu0 0
    %258 = vmatpush1.bf16.msra.mxu0 0
    %259 = vmatprep.subr.bf16.mxu0 0
    %260 = vmatpush1.bf16.msra.mxu0 0
    %261 = vmatprep.subr.bf16.mxu0 0
    %262 = vmatpush1.bf16.msra.mxu0 0
    %263 = vmatprep.subr.bf16.mxu0 0
    %264 = vmatpush1.bf16.msra.mxu0 0
    %265 = vmatprep.subr.bf16.mxu0 0
    %266 = vmatpush1.bf16.msra.mxu0 0
    %267 = vmatprep.subr.bf16.mxu0 0
    %268 = vmatpush1.bf16.msra.mxu0 0
    %269 = vmatprep.subr.bf16.mxu0 0
    %270 = vmatpush1.bf16.msra.mxu0 0
    %271 = vmatprep.subr.bf16.mxu0 0
    %272 = vmatpush1.bf16.msra.mxu0 0
    %273 = vmatprep.mubr.bf16.mxu0 0
    %274 = vmatmul.mubr.bf16.gmra.mrb[0].mxu0 %v240
    %v275 = vpop.f32.mrb[0].mxu0
    %v276 = vadd.f32 0.0, %v275
    %v277 = vpop.f32.mrb[0].mxu0
    %v278 = vpop.f32.mrb[0].mxu0
    %v279 = vpop.f32.mrb[0].mxu0
    %280 = vdwg.mxu0
    %281 = vset.pattern.permute.xlu0 3
    %282 = vperm.xlu0 %281, %v78
    %v283 = vpop.permute.xlu0 %282
    %vm284 = vcmp.eq.s32.totalorder %v283, %v63
    %v285 = vsel %vm284, 1.0, 0.0
    %v286 = vpack.c.bf16 %v285, %v285
    %287 = vmatprep.subr.bf16.mxu0 0
    %288 = vmatpush1.bf16.msra.mxu0 %v133
    %289 = vmatprep.subr.bf16.mxu0 0
    %290 = vmatpush1.bf16.msra.mxu0 %v134
    %291 = vmatprep.subr.bf16.mxu0 0
    %292 = vmatpush1.bf16.msra.mxu0 %v135
    %293 = vmatprep.subr.bf16.mxu0 0
    %294 = vmatpush1.bf16.msra.mxu0 %v136
    %295 = vmatprep.subr.bf16.mxu0 0
    %296 = vmatpush1.bf16.msra.mxu0 %v137
    %297 = vmatprep.subr.bf16.mxu0 0
    %298 = vmatpush1.bf16.msra.mxu0 %v138
    %299 = vmatprep.subr.bf16.mxu0 0
    %300 = vmatpush1.bf16.msra.mxu0 %v139
    %301 = vmatprep.subr.bf16.mxu0 0
    %302 = vmatpush1.bf16.msra.mxu0 %v140
    %303 = vmatprep.subr.bf16.mxu0 0
    %304 = vmatpush1.bf16.msra.mxu0 0
    %305 = vmatprep.subr.bf16.mxu0 0
    %306 = vmatpush1.bf16.msra.mxu0 0
    %307 = vmatprep.subr.bf16.mxu0 0
    %308 = vmatpush1.bf16.msra.mxu0 0
    %309 = vmatprep.subr.bf16.mxu0 0
    %310 = vmatpush1.bf16.msra.mxu0 0
    %311 = vmatprep.subr.bf16.mxu0 0
    %312 = vmatpush1.bf16.msra.mxu0 0
    %313 = vmatprep.subr.bf16.mxu0 0
    %314 = vmatpush1.bf16.msra.mxu0 0
    %315 = vmatprep.subr.bf16.mxu0 0
    %316 = vmatpush1.bf16.msra.mxu0 0
    %317 = vmatprep.subr.bf16.mxu0 0
    %318 = vmatpush1.bf16.msra.mxu0 0
    %319 = vmatprep.mubr.bf16.mxu0 0
    %320 = vmatmul.mubr.bf16.gmra.mrb[0].mxu0 %v286
    %v321 = vpop.f32.mrb[0].mxu0
    %v322 = vadd.f32 0.0, %v321
    %v323 = vpop.f32.mrb[0].mxu0
    %v324 = vpop.f32.mrb[0].mxu0
    %v325 = vpop.f32.mrb[0].mxu0
    %326 = vdwg.mxu0
    %327 = vset.pattern.permute.xlu0 4
    %328 = vperm.xlu0 %327, %v78
    %v329 = vpop.permute.xlu0 %328
    %vm330 = vcmp.eq.s32.totalorder %v329, %v63
    %v331 = vsel %vm330, 1.0, 0.0
    %v332 = vpack.c.bf16 %v331, %v331
    %333 = vmatprep.subr.bf16.mxu0 0
    %334 = vmatpush1.bf16.msra.mxu0 %v133
    %335 = vmatprep.subr.bf16.mxu0 0
    %336 = vmatpush1.bf16.msra.mxu0 %v134
    %337 = vmatprep.subr.bf16.mxu0 0
    %338 = vmatpush1.bf16.msra.mxu0 %v135
    %339 = vmatprep.subr.bf16.mxu0 0
    %340 = vmatpush1.bf16.msra.mxu0 %v136
    %341 = vmatprep.subr.bf16.mxu0 0
    %342 = vmatpush1.bf16.msra.mxu0 %v137
    %343 = vmatprep.subr.bf16.mxu0 0
    %344 = vmatpush1.bf16.msra.mxu0 %v138
    %345 = vmatprep.subr.bf16.mxu0 0
    %346 = vmatpush1.bf16.msra.mxu0 %v139
    %347 = vmatprep.subr.bf16.mxu0 0
    %348 = vmatpush1.bf16.msra.mxu0 %v140
    %349 = vmatprep.subr.bf16.mxu0 0
    %350 = vmatpush1.bf16.msra.mxu0 0
    %351 = vmatprep.subr.bf16.mxu0 0
    %352 = vmatpush1.bf16.msra.mxu0 0
    %353 = vmatprep.subr.bf16.mxu0 0
    %354 = vmatpush1.bf16.msra.mxu0 0
    %355 = vmatprep.subr.bf16.mxu0 0
    %356 = vmatpush1.bf16.msra.mxu0 0
    %357 = vmatprep.subr.bf16.mxu0 0
    %358 = vmatpush1.bf16.msra.mxu0 0
    %359 = vmatprep.subr.bf16.mxu0 0
    %360 = vmatpush1.bf16.msra.mxu0 0
    %361 = vmatprep.subr.bf16.mxu0 0
    %362 = vmatpush1.bf16.msra.mxu0 0
    %363 = vmatprep.subr.bf16.mxu0 0
    %364 = vmatpush1.bf16.msra.mxu0 0
    %365 = vmatprep.mubr.bf16.mxu0 0
    %366 = vmatmul.mubr.bf16.gmra.mrb[0].mxu0 %v332
    %v367 = vpop.f32.mrb[0].mxu0
    %v368 = vadd.f32 0.0, %v367
    %v369 = vpop.f32.mrb[0].mxu0
    %v370 = vpop.f32.mrb[0].mxu0
    %v371 = vpop.f32.mrb[0].mxu0
    %372 = vdwg.mxu0
    %373 = vset.pattern.permute.xlu0 5
    %374 = vperm.xlu0 %373, %v78
    %v375 = vpop.permute.xlu0 %374
    %vm376 = vcmp.eq.s32.totalorder %v375, %v63
    %v377 = vsel %vm376, 1.0, 0.0
    %v378 = vpack.c.bf16 %v377, %v377
    %379 = vmatprep.subr.bf16.mxu0 0
    %380 = vmatpush1.bf16.msra.mxu0 %v133
    %381 = vmatprep.subr.bf16.mxu0 0
    %382 = vmatpush1.bf16.msra.mxu0 %v134
    %383 = vmatprep.subr.bf16.mxu0 0
    %384 = vmatpush1.bf16.msra.mxu0 %v135
    %385 = vmatprep.subr.bf16.mxu0 0
    %386 = vmatpush1.bf16.msra.mxu0 %v136
    %387 = vmatprep.subr.bf16.mxu0 0
    %388 = vmatpush1.bf16.msra.mxu0 %v137
    %389 = vmatprep.subr.bf16.mxu0 0
    %390 = vmatpush1.bf16.msra.mxu0 %v138
    %391 = vmatprep.subr.bf16.mxu0 0
    %392 = vmatpush1.bf16.msra.mxu0 %v139
    %393 = vmatprep.subr.bf16.mxu0 0
    %394 = vmatpush1.bf16.msra.mxu0 %v140
    %395 = vmatprep.subr.bf16.mxu0 0
    %396 = vmatpush1.bf16.msra.mxu0 0
    %397 = vmatprep.subr.bf16.mxu0 0
    %398 = vmatpush1.bf16.msra.mxu0 0
    %399 = vmatprep.subr.bf16.mxu0 0
    %400 = vmatpush1.bf16.msra.mxu0 0
    %401 = vmatprep.subr.bf16.mxu0 0
    %402 = vmatpush1.bf16.msra.mxu0 0
    %403 = vmatprep.subr.bf16.mxu0 0
    %404 = vmatpush1.bf16.msra.mxu0 0
    %405 = vmatprep.subr.bf16.mxu0 0
    %406 = vmatpush1.bf16.msra.mxu0 0
    %407 = vmatprep.subr.bf16.mxu0 0
    %408 = vmatpush1.bf16.msra.mxu0 0
    %409 = vmatprep.subr.bf16.mxu0 0
    %410 = vmatpush1.bf16.msra.mxu0 0
    %411 = vmatprep.mubr.bf16.mxu0 0
    %412 = vmatmul.mubr.bf16.gmra.mrb[0].mxu0 %v378
    %v413 = vpop.f32.mrb[0].mxu0
    %v414 = vadd.f32 0.0, %v413
    %v415 = vpop.f32.mrb[0].mxu0
    %v416 = vpop.f32.mrb[0].mxu0
    %v417 = vpop.f32.mrb[0].mxu0
    %418 = vdwg.mxu0
    %419 = vset.pattern.permute.xlu0 6
    %420 = vperm.xlu0 %419, %v78
    %v421 = vpop.permute.xlu0 %420
    %vm422 = vcmp.eq.s32.totalorder %v421, %v63
    %v423 = vsel %vm422, 1.0, 0.0
    %v424 = vpack.c.bf16 %v423, %v423
    %425 = vmatprep.subr.bf16.mxu0 0
    %426 = vmatpush1.bf16.msra.mxu0 %v133
    %427 = vmatprep.subr.bf16.mxu0 0
    %428 = vmatpush1.bf16.msra.mxu0 %v134
    %429 = vmatprep.subr.bf16.mxu0 0
    %430 = vmatpush1.bf16.msra.mxu0 %v135
    %431 = vmatprep.subr.bf16.mxu0 0
    %432 = vmatpush1.bf16.msra.mxu0 %v136
    %433 = vmatprep.subr.bf16.mxu0 0
    %434 = vmatpush1.bf16.msra.mxu0 %v137
    %435 = vmatprep.subr.bf16.mxu0 0
    %436 = vmatpush1.bf16.msra.mxu0 %v138
    %437 = vmatprep.subr.bf16.mxu0 0
    %438 = vmatpush1.bf16.msra.mxu0 %v139
    %439 = vmatprep.subr.bf16.mxu0 0
    %440 = vmatpush1.bf16.msra.mxu0 %v140
    %441 = vmatprep.subr.bf16.mxu0 0
    %442 = vmatpush1.bf16.msra.mxu0 0
    %443 = vmatprep.subr.bf16.mxu0 0
    %444 = vmatpush1.bf16.msra.mxu0 0
    %445 = vmatprep.subr.bf16.mxu0 0
    %446 = vmatpush1.bf16.msra.mxu0 0
    %447 = vmatprep.subr.bf16.mxu0 0
    %448 = vmatpush1.bf16.msra.mxu0 0
    %449 = vmatprep.subr.bf16.mxu0 0
    %450 = vmatpush1.bf16.msra.mxu0 0
    %451 = vmatprep.subr.bf16.mxu0 0
    %452 = vmatpush1.bf16.msra.mxu0 0
    %453 = vmatprep.subr.bf16.mxu0 0
    %454 = vmatpush1.bf16.msra.mxu0 0
    %455 = vmatprep.subr.bf16.mxu0 0
    %456 = vmatpush1.bf16.msra.mxu0 0
    %457 = vmatprep.mubr.bf16.mxu0 0
    %458 = vmatmul.mubr.bf16.gmra.mrb[0].mxu0 %v424
    %v459 = vpop.f32.mrb[0].mxu0
    %v460 = vadd.f32 0.0, %v459
    %v461 = vpop.f32.mrb[0].mxu0
    %v462 = vpop.f32.mrb[0].mxu0
    %v463 = vpop.f32.mrb[0].mxu0
    %464 = vdwg.mxu0
    %465 = vset.pattern.permute.xlu0 7
    %466 = vperm.xlu0 %465, %v78
    %v467 = vpop.permute.xlu0 %466
    %vm468 = vcmp.eq.s32.totalorder %v467, %v63
    %v469 = vsel %vm468, 1.0, 0.0
    %v470 = vpack.c.bf16 %v469, %v469
    %471 = vmatprep.subr.bf16.mxu0 0
    %472 = vmatpush1.bf16.msra.mxu0 %v133
    %473 = vmatprep.subr.bf16.mxu0 0
    %474 = vmatpush1.bf16.msra.mxu0 %v134
    %475 = vmatprep.subr.bf16.mxu0 0
    %476 = vmatpush1.bf16.msra.mxu0 %v135
    %477 = vmatprep.subr.bf16.mxu0 0
    %478 = vmatpush1.bf16.msra.mxu0 %v136
    %479 = vmatprep.subr.bf16.mxu0 0
    %480 = vmatpush1.bf16.msra.mxu0 %v137
    %481 = vmatprep.subr.bf16.mxu0 0
    %482 = vmatpush1.bf16.msra.mxu0 %v138
    %483 = vmatprep.subr.bf16.mxu0 0
    %484 = vmatpush1.bf16.msra.mxu0 %v139
    %485 = vmatprep.subr.bf16.mxu0 0
    %486 = vmatpush1.bf16.msra.mxu0 %v140
    %487 = vmatprep.subr.bf16.mxu0 0
    %488 = vmatpush1.bf16.msra.mxu0 0
    %489 = vmatprep.subr.bf16.mxu0 0
    %490 = vmatpush1.bf16.msra.mxu0 0
    %491 = vmatprep.subr.bf16.mxu0 0
    %492 = vmatpush1.bf16.msra.mxu0 0
    %493 = vmatprep.subr.bf16.mxu0 0
    %494 = vmatpush1.bf16.msra.mxu0 0
    %495 = vmatprep.subr.bf16.mxu0 0
    %496 = vmatpush1.bf16.msra.mxu0 0
    %497 = vmatprep.subr.bf16.mxu0 0
    %498 = vmatpush1.bf16.msra.mxu0 0
    %499 = vmatprep.subr.bf16.mxu0 0
    %500 = vmatpush1.bf16.msra.mxu0 0
    %501 = vmatprep.subr.bf16.mxu0 0
    %502 = vmatpush1.bf16.msra.mxu0 0
    %503 = vmatprep.mubr.bf16.mxu0 0
    %504 = vmatmul.mubr.bf16.gmra.mrb[0].mxu0 %v470
    %v505 = vpop.f32.mrb[0].mxu0
    %v506 = vadd.f32 0.0, %v505
    %v507 = vpop.f32.mrb[0].mxu0
    %v508 = vpop.f32.mrb[0].mxu0
    %v509 = vpop.f32.mrb[0].mxu0
    %510 = vdwg.mxu0
    %v511 = vsel %vm76, %v184, %v506
    %v512 = vlaneseq
    %v513 = vshrl.u32 %v512, 7
    %v514 = vsub.s32 0, %v513
    %v515 = vrot.slane %v61, %v514
    %v516 = vadd.f32 %v511, %v515
    %v517 = vsel %vm76, %v230, %v460
    %v518 = vadd.f32 %v517, %v515
    %v519 = vsel %vm76, %v276, %v414
    %v520 = vadd.f32 %v519, %v515
    %v521 = vsel %vm76, %v322, %v368
    %v522 = vadd.f32 %v521, %v515
    %v523 = vsel %vm76, %v368, %v322
    %v524 = vadd.f32 %v523, %v515
    %v525 = vsel %vm76, %v414, %v276
    %v526 = vadd.f32 %v525, %v515
    %v527 = vsel %vm76, %v460, %v230
    %v528 = vadd.f32 %v527, %v515
    %v529 = vsel %vm76, %v506, %v184
    %v530 = vadd.f32 %v529, %v515
    %v531 = vld [vmem:[%s3] sm:$0xf]
    %v532 = vld [vmem:[%s3 + $0x4] sm:$0xf]
    %v533 = vld [vmem:[%s3 + $0x8] sm:$0xf]
    %v534 = vld [vmem:[%s3 + $0xc] sm:$0xf]
    %v535 = vxor.u32 %v516, 2147483648
    %v536 = vmul.f32 %v535, 1.442695
    %v537 = vpow.pop %v536
    %v538 = vadd.f32 %v537, 1.0
    %v539 = vrcp.pop %v538
    %v540 = vmul.f32 1.0, %v539
    %v541 = vtanh.pop %v516
    %v542 = vmul.f32 %v540, 0.0
    %544 = vrot.lane.b32.xlu0 %v541, 64
    %v545 = vpop.permute.xlu0 %544
    %v547 = vmul.f32 %v540, %v545
    %549 = vrot.lane.b32.xlu0 %v547, 32
    %v550 = vpop.permute.xlu0 %549
    %v552 = vadd.f32 %v542, %v550
    %v553 = vtanh.pop %v552
    %555 = vrot.lane.b32.xlu0 %v553, 64
    %v556 = vpop.permute.xlu0 %555
    %v558 = vmul.f32 %v540, %v556
    %v559 = vpack.c.bf16 %v558, %v558
    %561 = vrot.lane.b32.xlu0 %v559, 32
    %v562 = vpop.permute.xlu0 %561
    %v567 = vunpack.c.l.b16 %v531
    %v568 = vunpack.c.l.b16 %v532
    %v569 = vunpack.c.l.b16 %v533
    %v570 = vunpack.c.l.b16 %v534
    %v571 = vpack.c.b16 %v568, %v567
    %v572 = vpack.c.b16 %v570, %v569
    %vm575 = vcmask 261120
    %v577 = vsel %vm575, %v562, 0
    %579 = vmatprep.subr.bf16.mxu0 0
    %580 = vmatpush1.bf16.msra.mxu0 %v571
    %581 = vmatprep.subr.bf16.mxu0 0
    %582 = vmatpush1.bf16.msra.mxu0 %v572
    %583 = vmatprep.subr.bf16.mxu0 0
    %584 = vmatpush1.bf16.msra.mxu0 0
    %585 = vmatprep.subr.bf16.mxu0 0
    %586 = vmatpush1.bf16.msra.mxu0 0
    %587 = vmatprep.subr.bf16.mxu0 0
    %588 = vmatpush1.bf16.msra.mxu0 0
    %589 = vmatprep.subr.bf16.mxu0 0
    %590 = vmatpush1.bf16.msra.mxu0 0
    %591 = vmatprep.subr.bf16.mxu0 0
    %592 = vmatpush1.bf16.msra.mxu0 0
    %593 = vmatprep.subr.bf16.mxu0 0
    %594 = vmatpush1.bf16.msra.mxu0 0
    %595 = vmatprep.subr.bf16.mxu0 0
    %596 = vmatpush1.bf16.msra.mxu0 0
    %597 = vmatprep.subr.bf16.mxu0 0
    %598 = vmatpush1.bf16.msra.mxu0 0
    %599 = vmatprep.subr.bf16.mxu0 0
    %600 = vmatpush1.bf16.msra.mxu0 0
    %601 = vmatprep.subr.bf16.mxu0 0
    %602 = vmatpush1.bf16.msra.mxu0 0
    %603 = vmatprep.subr.bf16.mxu0 0
    %604 = vmatpush1.bf16.msra.mxu0 0
    %605 = vmatprep.subr.bf16.mxu0 0
    %606 = vmatpush1.bf16.msra.mxu0 0
    %607 = vmatprep.subr.bf16.mxu0 0
    %608 = vmatpush1.bf16.msra.mxu0 0
    %609 = vmatprep.subr.bf16.mxu0 0
    %610 = vmatpush1.bf16.msra.mxu0 0
    %611 = vmatprep.mubr.bf16.mxu0 0
    %612 = vmatmul.mubr.bf16.gmra.mrb[0].mxu0 %v577
    %v613 = vpop.f32.mrb[0].mxu0
    %v614 = vadd.f32 0.0, %v613
    %v615 = vpop.f32.mrb[0].mxu0
    %v616 = vpop.f32.mrb[0].mxu0
    %v617 = vpop.f32.mrb[0].mxu0
    %618 = vdwg.mxu0
    %v619 = vadd.f32 %v518, %v614
    %v620 = vxor.u32 %v619, 2147483648
    %v621 = vmul.f32 %v620, 1.442695
    %v622 = vpow.pop %v621
    %v623 = vadd.f32 %v622, 1.0
    %v624 = vrcp.pop %v623
    %v625 = vmul.f32 1.0, %v624
    %v626 = vtanh.pop %v619
    %v627 = vmul.f32 %v625, %v552
    %629 = vrot.lane.b32.xlu0 %v626, 64
    %v630 = vpop.permute.xlu0 %629
    %v632 = vmul.f32 %v625, %v630
    %634 = vrot.lane.b32.xlu0 %v632, 32
    %v635 = vpop.permute.xlu0 %634
    %v637 = vadd.f32 %v627, %v635
    %v638 = vtanh.pop %v637
    %640 = vrot.lane.b32.xlu0 %v638, 64
    %v641 = vpop.permute.xlu0 %640
    %v643 = vmul.f32 %v625, %v641
    %v644 = vpack.c.bf16 %v643, %v643
    %646 = vrot.lane.b32.xlu0 %v644, 32
    %v647 = vpop.permute.xlu0 %646
    %v649 = vsel %vm575, %v647, 0
    %651 = vmatprep.subr.bf16.mxu0 0
    %652 = vmatpush1.bf16.msra.mxu0 %v571
    %653 = vmatprep.subr.bf16.mxu0 0
    %654 = vmatpush1.bf16.msra.mxu0 %v572
    %655 = vmatprep.subr.bf16.mxu0 0
    %656 = vmatpush1.bf16.msra.mxu0 0
    %657 = vmatprep.subr.bf16.mxu0 0
    %658 = vmatpush1.bf16.msra.mxu0 0
    %659 = vmatprep.subr.bf16.mxu0 0
    %660 = vmatpush1.bf16.msra.mxu0 0
    %661 = vmatprep.subr.bf16.mxu0 0
    %662 = vmatpush1.bf16.msra.mxu0 0
    %663 = vmatprep.subr.bf16.mxu0 0
    %664 = vmatpush1.bf16.msra.mxu0 0
    %665 = vmatprep.subr.bf16.mxu0 0
    %666 = vmatpush1.bf16.msra.mxu0 0
    %667 = vmatprep.subr.bf16.mxu0 0
    %668 = vmatpush1.bf16.msra.mxu0 0
    %669 = vmatprep.subr.bf16.mxu0 0
    %670 = vmatpush1.bf16.msra.mxu0 0
    %671 = vmatprep.subr.bf16.mxu0 0
    %672 = vmatpush1.bf16.msra.mxu0 0
    %673 = vmatprep.subr.bf16.mxu0 0
    %674 = vmatpush1.bf16.msra.mxu0 0
    %675 = vmatprep.subr.bf16.mxu0 0
    %676 = vmatpush1.bf16.msra.mxu0 0
    %677 = vmatprep.subr.bf16.mxu0 0
    %678 = vmatpush1.bf16.msra.mxu0 0
    %679 = vmatprep.subr.bf16.mxu0 0
    %680 = vmatpush1.bf16.msra.mxu0 0
    %681 = vmatprep.subr.bf16.mxu0 0
    %682 = vmatpush1.bf16.msra.mxu0 0
    %683 = vmatprep.mubr.bf16.mxu0 0
    %684 = vmatmul.mubr.bf16.gmra.mrb[0].mxu0 %v649
    %v685 = vpop.f32.mrb[0].mxu0
    %v686 = vadd.f32 0.0, %v685
    %v687 = vpop.f32.mrb[0].mxu0
    %v688 = vpop.f32.mrb[0].mxu0
    %v689 = vpop.f32.mrb[0].mxu0
    %690 = vdwg.mxu0
    %v691 = vadd.f32 %v520, %v686
    %v692 = vxor.u32 %v691, 2147483648
    %v693 = vmul.f32 %v692, 1.442695
    %v694 = vpow.pop %v693
    %v695 = vadd.f32 %v694, 1.0
    %v696 = vrcp.pop %v695
    %v697 = vmul.f32 1.0, %v696
    %v698 = vtanh.pop %v691
    %v699 = vmul.f32 %v697, %v637
    %701 = vrot.lane.b32.xlu0 %v698, 64
    %v702 = vpop.permute.xlu0 %701
    %v704 = vmul.f32 %v697, %v702
    %706 = vrot.lane.b32.xlu0 %v704, 32
    %v707 = vpop.permute.xlu0 %706
    %v709 = vadd.f32 %v699, %v707
    %v710 = vtanh.pop %v709
    %712 = vrot.lane.b32.xlu0 %v710, 64
    %v713 = vpop.permute.xlu0 %712
    %v715 = vmul.f32 %v697, %v713
    %v716 = vpack.c.bf16 %v715, %v715
    %718 = vrot.lane.b32.xlu0 %v716, 32
    %v719 = vpop.permute.xlu0 %718
    %v721 = vsel %vm575, %v719, 0
    %723 = vmatprep.subr.bf16.mxu0 0
    %724 = vmatpush1.bf16.msra.mxu0 %v571
    %725 = vmatprep.subr.bf16.mxu0 0
    %726 = vmatpush1.bf16.msra.mxu0 %v572
    %727 = vmatprep.subr.bf16.mxu0 0
    %728 = vmatpush1.bf16.msra.mxu0 0
    %729 = vmatprep.subr.bf16.mxu0 0
    %730 = vmatpush1.bf16.msra.mxu0 0
    %731 = vmatprep.subr.bf16.mxu0 0
    %732 = vmatpush1.bf16.msra.mxu0 0
    %733 = vmatprep.subr.bf16.mxu0 0
    %734 = vmatpush1.bf16.msra.mxu0 0
    %735 = vmatprep.subr.bf16.mxu0 0
    %736 = vmatpush1.bf16.msra.mxu0 0
    %737 = vmatprep.subr.bf16.mxu0 0
    %738 = vmatpush1.bf16.msra.mxu0 0
    %739 = vmatprep.subr.bf16.mxu0 0
    %740 = vmatpush1.bf16.msra.mxu0 0
    %741 = vmatprep.subr.bf16.mxu0 0
    %742 = vmatpush1.bf16.msra.mxu0 0
    %743 = vmatprep.subr.bf16.mxu0 0
    %744 = vmatpush1.bf16.msra.mxu0 0
    %745 = vmatprep.subr.bf16.mxu0 0
    %746 = vmatpush1.bf16.msra.mxu0 0
    %747 = vmatprep.subr.bf16.mxu0 0
    %748 = vmatpush1.bf16.msra.mxu0 0
    %749 = vmatprep.subr.bf16.mxu0 0
    %750 = vmatpush1.bf16.msra.mxu0 0
    %751 = vmatprep.subr.bf16.mxu0 0
    %752 = vmatpush1.bf16.msra.mxu0 0
    %753 = vmatprep.subr.bf16.mxu0 0
    %754 = vmatpush1.bf16.msra.mxu0 0
    %755 = vmatprep.mubr.bf16.mxu0 0
    %756 = vmatmul.mubr.bf16.gmra.mrb[0].mxu0 %v721
    %v757 = vpop.f32.mrb[0].mxu0
    %v758 = vadd.f32 0.0, %v757
    %v759 = vpop.f32.mrb[0].mxu0
    %v760 = vpop.f32.mrb[0].mxu0
    %v761 = vpop.f32.mrb[0].mxu0
    %762 = vdwg.mxu0
    %v763 = vadd.f32 %v522, %v758
    %v764 = vxor.u32 %v763, 2147483648
    %v765 = vmul.f32 %v764, 1.442695
    %v766 = vpow.pop %v765
    %v767 = vadd.f32 %v766, 1.0
    %v768 = vrcp.pop %v767
    %v769 = vmul.f32 1.0, %v768
    %v770 = vtanh.pop %v763
    %v771 = vmul.f32 %v769, %v709
    %773 = vrot.lane.b32.xlu0 %v770, 64
    %v774 = vpop.permute.xlu0 %773
    %v776 = vmul.f32 %v769, %v774
    %778 = vrot.lane.b32.xlu0 %v776, 32
    %v779 = vpop.permute.xlu0 %778
    %v781 = vadd.f32 %v771, %v779
    %v782 = vtanh.pop %v781
    %784 = vrot.lane.b32.xlu0 %v782, 64
    %v785 = vpop.permute.xlu0 %784
    %v787 = vmul.f32 %v769, %v785
    %v788 = vpack.c.bf16 %v787, %v787
    %790 = vrot.lane.b32.xlu0 %v788, 32
    %v791 = vpop.permute.xlu0 %790
    %v793 = vsel %vm575, %v791, 0
    %795 = vmatprep.subr.bf16.mxu0 0
    %796 = vmatpush1.bf16.msra.mxu0 %v571
    %797 = vmatprep.subr.bf16.mxu0 0
    %798 = vmatpush1.bf16.msra.mxu0 %v572
    %799 = vmatprep.subr.bf16.mxu0 0
    %800 = vmatpush1.bf16.msra.mxu0 0
    %801 = vmatprep.subr.bf16.mxu0 0
    %802 = vmatpush1.bf16.msra.mxu0 0
    %803 = vmatprep.subr.bf16.mxu0 0
    %804 = vmatpush1.bf16.msra.mxu0 0
    %805 = vmatprep.subr.bf16.mxu0 0
    %806 = vmatpush1.bf16.msra.mxu0 0
    %807 = vmatprep.subr.bf16.mxu0 0
    %808 = vmatpush1.bf16.msra.mxu0 0
    %809 = vmatprep.subr.bf16.mxu0 0
    %810 = vmatpush1.bf16.msra.mxu0 0
    %811 = vmatprep.subr.bf16.mxu0 0
    %812 = vmatpush1.bf16.msra.mxu0 0
    %813 = vmatprep.subr.bf16.mxu0 0
    %814 = vmatpush1.bf16.msra.mxu0 0
    %815 = vmatprep.subr.bf16.mxu0 0
    %816 = vmatpush1.bf16.msra.mxu0 0
    %817 = vmatprep.subr.bf16.mxu0 0
    %818 = vmatpush1.bf16.msra.mxu0 0
    %819 = vmatprep.subr.bf16.mxu0 0
    %820 = vmatpush1.bf16.msra.mxu0 0
    %821 = vmatprep.subr.bf16.mxu0 0
    %822 = vmatpush1.bf16.msra.mxu0 0
    %823 = vmatprep.subr.bf16.mxu0 0
    %824 = vmatpush1.bf16.msra.mxu0 0
    %825 = vmatprep.subr.bf16.mxu0 0
    %826 = vmatpush1.bf16.msra.mxu0 0
    %827 = vmatprep.mubr.bf16.mxu0 0
    %828 = vmatmul.mubr.bf16.gmra.mrb[0].mxu0 %v793
    %v829 = vpop.f32.mrb[0].mxu0
    %v830 = vadd.f32 0.0, %v829
    %v831 = vpop.f32.mrb[0].mxu0
    %v832 = vpop.f32.mrb[0].mxu0
    %v833 = vpop.f32.mrb[0].mxu0
    %834 = vdwg.mxu0
    %v835 = vadd.f32 %v524, %v830
    %v836 = vxor.u32 %v835, 2147483648
    %v837 = vmul.f32 %v836, 1.442695
    %v838 = vpow.pop %v837
    %v839 = vadd.f32 %v838, 1.0
    %v840 = vrcp.pop %v839
    %v841 = vmul.f32 1.0, %v840
    %v842 = vtanh.pop %v835
    %v843 = vmul.f32 %v841, %v781
    %845 = vrot.lane.b32.xlu0 %v842, 64
    %v846 = vpop.permute.xlu0 %845
    %v848 = vmul.f32 %v841, %v846
    %850 = vrot.lane.b32.xlu0 %v848, 32
    %v851 = vpop.permute.xlu0 %850
    %v853 = vadd.f32 %v843, %v851
    %v854 = vtanh.pop %v853
    %856 = vrot.lane.b32.xlu0 %v854, 64
    %v857 = vpop.permute.xlu0 %856
    %v859 = vmul.f32 %v841, %v857
    %v860 = vpack.c.bf16 %v859, %v859
    %862 = vrot.lane.b32.xlu0 %v860, 32
    %v863 = vpop.permute.xlu0 %862
    %v865 = vsel %vm575, %v863, 0
    %867 = vmatprep.subr.bf16.mxu0 0
    %868 = vmatpush1.bf16.msra.mxu0 %v571
    %869 = vmatprep.subr.bf16.mxu0 0
    %870 = vmatpush1.bf16.msra.mxu0 %v572
    %871 = vmatprep.subr.bf16.mxu0 0
    %872 = vmatpush1.bf16.msra.mxu0 0
    %873 = vmatprep.subr.bf16.mxu0 0
    %874 = vmatpush1.bf16.msra.mxu0 0
    %875 = vmatprep.subr.bf16.mxu0 0
    %876 = vmatpush1.bf16.msra.mxu0 0
    %877 = vmatprep.subr.bf16.mxu0 0
    %878 = vmatpush1.bf16.msra.mxu0 0
    %879 = vmatprep.subr.bf16.mxu0 0
    %880 = vmatpush1.bf16.msra.mxu0 0
    %881 = vmatprep.subr.bf16.mxu0 0
    %882 = vmatpush1.bf16.msra.mxu0 0
    %883 = vmatprep.subr.bf16.mxu0 0
    %884 = vmatpush1.bf16.msra.mxu0 0
    %885 = vmatprep.subr.bf16.mxu0 0
    %886 = vmatpush1.bf16.msra.mxu0 0
    %887 = vmatprep.subr.bf16.mxu0 0
    %888 = vmatpush1.bf16.msra.mxu0 0
    %889 = vmatprep.subr.bf16.mxu0 0
    %890 = vmatpush1.bf16.msra.mxu0 0
    %891 = vmatprep.subr.bf16.mxu0 0
    %892 = vmatpush1.bf16.msra.mxu0 0
    %893 = vmatprep.subr.bf16.mxu0 0
    %894 = vmatpush1.bf16.msra.mxu0 0
    %895 = vmatprep.subr.bf16.mxu0 0
    %896 = vmatpush1.bf16.msra.mxu0 0
    %897 = vmatprep.subr.bf16.mxu0 0
    %898 = vmatpush1.bf16.msra.mxu0 0
    %899 = vmatprep.mubr.bf16.mxu0 0
    %900 = vmatmul.mubr.bf16.gmra.mrb[0].mxu0 %v865
    %v901 = vpop.f32.mrb[0].mxu0
    %v902 = vadd.f32 0.0, %v901
    %v903 = vpop.f32.mrb[0].mxu0
    %v904 = vpop.f32.mrb[0].mxu0
    %v905 = vpop.f32.mrb[0].mxu0
    %906 = vdwg.mxu0
    %v907 = vadd.f32 %v526, %v902
    %v908 = vxor.u32 %v907, 2147483648
    %v909 = vmul.f32 %v908, 1.442695
    %v910 = vpow.pop %v909
    %v911 = vadd.f32 %v910, 1.0
    %v912 = vrcp.pop %v911
    %v913 = vmul.f32 1.0, %v912
    %v914 = vtanh.pop %v907
    %v915 = vmul.f32 %v913, %v853
    %917 = vrot.lane.b32.xlu0 %v914, 64
    %v918 = vpop.permute.xlu0 %917
    %v920 = vmul.f32 %v913, %v918
    %922 = vrot.lane.b32.xlu0 %v920, 32
    %v923 = vpop.permute.xlu0 %922
    %v925 = vadd.f32 %v915, %v923
    %v926 = vtanh.pop %v925
    %928 = vrot.lane.b32.xlu0 %v926, 64
    %v929 = vpop.permute.xlu0 %928
    %v931 = vmul.f32 %v913, %v929
    %v932 = vpack.c.bf16 %v931, %v931
    %934 = vrot.lane.b32.xlu0 %v932, 32
    %v935 = vpop.permute.xlu0 %934
    %v937 = vsel %vm575, %v935, 0
    %939 = vmatprep.subr.bf16.mxu0 0
    %940 = vmatpush1.bf16.msra.mxu0 %v571
    %941 = vmatprep.subr.bf16.mxu0 0
    %942 = vmatpush1.bf16.msra.mxu0 %v572
    %943 = vmatprep.subr.bf16.mxu0 0
    %944 = vmatpush1.bf16.msra.mxu0 0
    %945 = vmatprep.subr.bf16.mxu0 0
    %946 = vmatpush1.bf16.msra.mxu0 0
    %947 = vmatprep.subr.bf16.mxu0 0
    %948 = vmatpush1.bf16.msra.mxu0 0
    %949 = vmatprep.subr.bf16.mxu0 0
    %950 = vmatpush1.bf16.msra.mxu0 0
    %951 = vmatprep.subr.bf16.mxu0 0
    %952 = vmatpush1.bf16.msra.mxu0 0
    %953 = vmatprep.subr.bf16.mxu0 0
    %954 = vmatpush1.bf16.msra.mxu0 0
    %955 = vmatprep.subr.bf16.mxu0 0
    %956 = vmatpush1.bf16.msra.mxu0 0
    %957 = vmatprep.subr.bf16.mxu0 0
    %958 = vmatpush1.bf16.msra.mxu0 0
    %959 = vmatprep.subr.bf16.mxu0 0
    %960 = vmatpush1.bf16.msra.mxu0 0
    %961 = vmatprep.subr.bf16.mxu0 0
    %962 = vmatpush1.bf16.msra.mxu0 0
    %963 = vmatprep.subr.bf16.mxu0 0
    %964 = vmatpush1.bf16.msra.mxu0 0
    %965 = vmatprep.subr.bf16.mxu0 0
    %966 = vmatpush1.bf16.msra.mxu0 0
    %967 = vmatprep.subr.bf16.mxu0 0
    %968 = vmatpush1.bf16.msra.mxu0 0
    %969 = vmatprep.subr.bf16.mxu0 0
    %970 = vmatpush1.bf16.msra.mxu0 0
    %971 = vmatprep.mubr.bf16.mxu0 0
    %972 = vmatmul.mubr.bf16.gmra.mrb[0].mxu0 %v937
    %v973 = vpop.f32.mrb[0].mxu0
    %v974 = vadd.f32 0.0, %v973
    %v975 = vpop.f32.mrb[0].mxu0
    %v976 = vpop.f32.mrb[0].mxu0
    %v977 = vpop.f32.mrb[0].mxu0
    %978 = vdwg.mxu0
    %v979 = vadd.f32 %v528, %v974
    %v980 = vxor.u32 %v979, 2147483648
    %v981 = vmul.f32 %v980, 1.442695
    %v982 = vpow.pop %v981
    %v983 = vadd.f32 %v982, 1.0
    %v984 = vrcp.pop %v983
    %v985 = vmul.f32 1.0, %v984
    %v986 = vtanh.pop %v979
    %v987 = vmul.f32 %v985, %v925
    %989 = vrot.lane.b32.xlu0 %v986, 64
    %v990 = vpop.permute.xlu0 %989
    %v992 = vmul.f32 %v985, %v990
    %994 = vrot.lane.b32.xlu0 %v992, 32
    %v995 = vpop.permute.xlu0 %994
    %v997 = vadd.f32 %v987, %v995
    %v998 = vtanh.pop %v997
    %1000 = vrot.lane.b32.xlu0 %v998, 64
    %v1001 = vpop.permute.xlu0 %1000
    %v1003 = vmul.f32 %v985, %v1001
    %v1004 = vpack.c.bf16 %v1003, %v1003
    %1006 = vrot.lane.b32.xlu0 %v1004, 32
    %v1007 = vpop.permute.xlu0 %1006
    %v1009 = vsel %vm575, %v1007, 0
    %1011 = vmatprep.subr.bf16.mxu0 0
    %1012 = vmatpush1.bf16.msra.mxu0 %v571
    %1013 = vmatprep.subr.bf16.mxu0 0
    %1014 = vmatpush1.bf16.msra.mxu0 %v572
    %1015 = vmatprep.subr.bf16.mxu0 0
    %1016 = vmatpush1.bf16.msra.mxu0 0
    %1017 = vmatprep.subr.bf16.mxu0 0
    %1018 = vmatpush1.bf16.msra.mxu0 0
    %1019 = vmatprep.subr.bf16.mxu0 0
    %1020 = vmatpush1.bf16.msra.mxu0 0
    %1021 = vmatprep.subr.bf16.mxu0 0
    %1022 = vmatpush1.bf16.msra.mxu0 0
    %1023 = vmatprep.subr.bf16.mxu0 0
    %1024 = vmatpush1.bf16.msra.mxu0 0
    %1025 = vmatprep.subr.bf16.mxu0 0
    %1026 = vmatpush1.bf16.msra.mxu0 0
    %1027 = vmatprep.subr.bf16.mxu0 0
    %1028 = vmatpush1.bf16.msra.mxu0 0
    %1029 = vmatprep.subr.bf16.mxu0 0
    %1030 = vmatpush1.bf16.msra.mxu0 0
    %1031 = vmatprep.subr.bf16.mxu0 0
    %1032 = vmatpush1.bf16.msra.mxu0 0
    %1033 = vmatprep.subr.bf16.mxu0 0
    %1034 = vmatpush1.bf16.msra.mxu0 0
    %1035 = vmatprep.subr.bf16.mxu0 0
    %1036 = vmatpush1.bf16.msra.mxu0 0
    %1037 = vmatprep.subr.bf16.mxu0 0
    %1038 = vmatpush1.bf16.msra.mxu0 0
    %1039 = vmatprep.subr.bf16.mxu0 0
    %1040 = vmatpush1.bf16.msra.mxu0 0
    %1041 = vmatprep.subr.bf16.mxu0 0
    %1042 = vmatpush1.bf16.msra.mxu0 0
    %1043 = vmatprep.mubr.bf16.mxu0 0
    %1044 = vmatmul.mubr.bf16.gmra.mrb[0].mxu0 %v1009
    %v1045 = vpop.f32.mrb[0].mxu0
    %v1046 = vadd.f32 0.0, %v1045
    %v1047 = vpop.f32.mrb[0].mxu0
    %v1048 = vpop.f32.mrb[0].mxu0
    %v1049 = vpop.f32.mrb[0].mxu0
    %1050 = vdwg.mxu0
    %v1051 = vadd.f32 %v530, %v1046
    %v1052 = vxor.u32 %v1051, 2147483648
    %v1053 = vmul.f32 %v1052, 1.442695
    %v1054 = vpow.pop %v1053
    %v1055 = vadd.f32 %v1054, 1.0
    %v1056 = vrcp.pop %v1055
    %v1057 = vmul.f32 1.0, %v1056
    %v1058 = vtanh.pop %v1051
    %v1059 = vmul.f32 %v1057, %v997
    %1061 = vrot.lane.b32.xlu0 %v1058, 64
    %v1062 = vpop.permute.xlu0 %1061
    %v1064 = vmul.f32 %v1057, %v1062
    %1066 = vrot.lane.b32.xlu0 %v1064, 32
    %v1067 = vpop.permute.xlu0 %1066
    %v1069 = vadd.f32 %v1059, %v1067
    %v1070 = vtanh.pop %v1069
    %1072 = vrot.lane.b32.xlu0 %v1070, 64
    %v1073 = vpop.permute.xlu0 %1072
    %v1075 = vmul.f32 %v1057, %v1073
    %1077 = vrot.lane.b32.xlu0 %v558, 32
    %v1078 = vpop.permute.xlu0 %1077
    %1081 = vrot.lane.b32.xlu0 %v1075, 32
    %v1082 = vpop.permute.xlu0 %1081
    %v1084 = vsel %vm77, %v1078, %v1082
    %1086 = vrot.lane.b32.xlu0 %v643, 32
    %v1087 = vpop.permute.xlu0 %1086
    %1090 = vrot.lane.b32.xlu0 %v1003, 32
    %v1091 = vpop.permute.xlu0 %1090
    %v1093 = vsel %vm77, %v1087, %v1091
    %1095 = vrot.lane.b32.xlu0 %v715, 32
    %v1096 = vpop.permute.xlu0 %1095
    %1099 = vrot.lane.b32.xlu0 %v931, 32
    %v1100 = vpop.permute.xlu0 %1099
    %v1102 = vsel %vm77, %v1096, %v1100
    %1104 = vrot.lane.b32.xlu0 %v787, 32
    %v1105 = vpop.permute.xlu0 %1104
    %1108 = vrot.lane.b32.xlu0 %v859, 32
    %v1109 = vpop.permute.xlu0 %1108
    %v1111 = vsel %vm77, %v1105, %v1109
    %v1112 = vsel %vm77, %v1109, %v1105
    %v1113 = vsel %vm77, %v1100, %v1096
    %v1114 = vsel %vm77, %v1091, %v1087
    %v1115 = vsel %vm77, %v1082, %v1078
    %v1116 = vld [vmem:[%s4] sm:$0xf]
    %v1117 = vld [vmem:[%s4 + $0x4] sm:$0xf]
    %v1118 = vld [vmem:[%s4 + $0x8] sm:$0xf]
    %v1119 = vld [vmem:[%s4 + $0xc] sm:$0xf]
    %v1120 = vpack.c.bf16 %v1084, %v1084
    %v1125 = vunpack.c.l.b16 %v1116
    %v1126 = vunpack.c.l.b16 %v1117
    %v1127 = vunpack.c.l.b16 %v1118
    %v1128 = vunpack.c.l.b16 %v1119
    %v1129 = vpack.c.b16 %v1126, %v1125
    %v1130 = vpack.c.b16 %v1128, %v1127
    %v1134 = vsel %vm575, %v1120, 0
    %1136 = vmatprep.subr.bf16.mxu0 0
    %1137 = vmatpush1.bf16.msra.mxu0 %v1129
    %1138 = vmatprep.subr.bf16.mxu0 0
    %1139 = vmatpush1.bf16.msra.mxu0 %v1130
    %1140 = vmatprep.subr.bf16.mxu0 0
    %1141 = vmatpush1.bf16.msra.mxu0 0
    %1142 = vmatprep.subr.bf16.mxu0 0
    %1143 = vmatpush1.bf16.msra.mxu0 0
    %1144 = vmatprep.subr.bf16.mxu0 0
    %1145 = vmatpush1.bf16.msra.mxu0 0
    %1146 = vmatprep.subr.bf16.mxu0 0
    %1147 = vmatpush1.bf16.msra.mxu0 0
    %1148 = vmatprep.subr.bf16.mxu0 0
    %1149 = vmatpush1.bf16.msra.mxu0 0
    %1150 = vmatprep.subr.bf16.mxu0 0
    %1151 = vmatpush1.bf16.msra.mxu0 0
    %1152 = vmatprep.subr.bf16.mxu0 0
    %1153 = vmatpush1.bf16.msra.mxu0 0
    %1154 = vmatprep.subr.bf16.mxu0 0
    %1155 = vmatpush1.bf16.msra.mxu0 0
    %1156 = vmatprep.subr.bf16.mxu0 0
    %1157 = vmatpush1.bf16.msra.mxu0 0
    %1158 = vmatprep.subr.bf16.mxu0 0
    %1159 = vmatpush1.bf16.msra.mxu0 0
    %1160 = vmatprep.subr.bf16.mxu0 0
    %1161 = vmatpush1.bf16.msra.mxu0 0
    %1162 = vmatprep.subr.bf16.mxu0 0
    %1163 = vmatpush1.bf16.msra.mxu0 0
    %1164 = vmatprep.subr.bf16.mxu0 0
    %1165 = vmatpush1.bf16.msra.mxu0 0
    %1166 = vmatprep.subr.bf16.mxu0 0
    %1167 = vmatpush1.bf16.msra.mxu0 0
    %1168 = vmatprep.mubr.bf16.mxu0 0
    %1169 = vmatmul.mubr.bf16.gmra.mrb[0].mxu0 %v1134
    %v1170 = vpop.f32.mrb[0].mxu0
    %v1171 = vadd.f32 0.0, %v1170
    %v1172 = vpop.f32.mrb[0].mxu0
    %v1173 = vpop.f32.mrb[0].mxu0
    %v1174 = vpop.f32.mrb[0].mxu0
    %1175 = vdwg.mxu0
    %v1176 = vpack.c.bf16 %v1093, %v1093
    %v1178 = vsel %vm575, %v1176, 0
    %1180 = vmatprep.subr.bf16.mxu0 0
    %1181 = vmatpush1.bf16.msra.mxu0 %v1129
    %1182 = vmatprep.subr.bf16.mxu0 0
    %1183 = vmatpush1.bf16.msra.mxu0 %v1130
    %1184 = vmatprep.subr.bf16.mxu0 0
    %1185 = vmatpush1.bf16.msra.mxu0 0
    %1186 = vmatprep.subr.bf16.mxu0 0
    %1187 = vmatpush1.bf16.msra.mxu0 0
    %1188 = vmatprep.subr.bf16.mxu0 0
    %1189 = vmatpush1.bf16.msra.mxu0 0
    %1190 = vmatprep.subr.bf16.mxu0 0
    %1191 = vmatpush1.bf16.msra.mxu0 0
    %1192 = vmatprep.subr.bf16.mxu0 0
    %1193 = vmatpush1.bf16.msra.mxu0 0
    %1194 = vmatprep.subr.bf16.mxu0 0
    %1195 = vmatpush1.bf16.msra.mxu0 0
    %1196 = vmatprep.subr.bf16.mxu0 0
    %1197 = vmatpush1.bf16.msra.mxu0 0
    %1198 = vmatprep.subr.bf16.mxu0 0
    %1199 = vmatpush1.bf16.msra.mxu0 0
    %1200 = vmatprep.subr.bf16.mxu0 0
    %1201 = vmatpush1.bf16.msra.mxu0 0
    %1202 = vmatprep.subr.bf16.mxu0 0
    %1203 = vmatpush1.bf16.msra.mxu0 0
    %1204 = vmatprep.subr.bf16.mxu0 0
    %1205 = vmatpush1.bf16.msra.mxu0 0
    %1206 = vmatprep.subr.bf16.mxu0 0
    %1207 = vmatpush1.bf16.msra.mxu0 0
    %1208 = vmatprep.subr.bf16.mxu0 0
    %1209 = vmatpush1.bf16.msra.mxu0 0
    %1210 = vmatprep.subr.bf16.mxu0 0
    %1211 = vmatpush1.bf16.msra.mxu0 0
    %1212 = vmatprep.mubr.bf16.mxu0 0
    %1213 = vmatmul.mubr.bf16.gmra.mrb[0].mxu0 %v1178
    %v1214 = vpop.f32.mrb[0].mxu0
    %v1215 = vadd.f32 0.0, %v1214
    %v1216 = vpop.f32.mrb[0].mxu0
    %v1217 = vpop.f32.mrb[0].mxu0
    %v1218 = vpop.f32.mrb[0].mxu0
    %1219 = vdwg.mxu0
    %v1220 = vpack.c.bf16 %v1102, %v1102
    %v1222 = vsel %vm575, %v1220, 0
    %1224 = vmatprep.subr.bf16.mxu0 0
    %1225 = vmatpush1.bf16.msra.mxu0 %v1129
    %1226 = vmatprep.subr.bf16.mxu0 0
    %1227 = vmatpush1.bf16.msra.mxu0 %v1130
    %1228 = vmatprep.subr.bf16.mxu0 0
    %1229 = vmatpush1.bf16.msra.mxu0 0
    %1230 = vmatprep.subr.bf16.mxu0 0
    %1231 = vmatpush1.bf16.msra.mxu0 0
    %1232 = vmatprep.subr.bf16.mxu0 0
    %1233 = vmatpush1.bf16.msra.mxu0 0
    %1234 = vmatprep.subr.bf16.mxu0 0
    %1235 = vmatpush1.bf16.msra.mxu0 0
    %1236 = vmatprep.subr.bf16.mxu0 0
    %1237 = vmatpush1.bf16.msra.mxu0 0
    %1238 = vmatprep.subr.bf16.mxu0 0
    %1239 = vmatpush1.bf16.msra.mxu0 0
    %1240 = vmatprep.subr.bf16.mxu0 0
    %1241 = vmatpush1.bf16.msra.mxu0 0
    %1242 = vmatprep.subr.bf16.mxu0 0
    %1243 = vmatpush1.bf16.msra.mxu0 0
    %1244 = vmatprep.subr.bf16.mxu0 0
    %1245 = vmatpush1.bf16.msra.mxu0 0
    %1246 = vmatprep.subr.bf16.mxu0 0
    %1247 = vmatpush1.bf16.msra.mxu0 0
    %1248 = vmatprep.subr.bf16.mxu0 0
    %1249 = vmatpush1.bf16.msra.mxu0 0
    %1250 = vmatprep.subr.bf16.mxu0 0
    %1251 = vmatpush1.bf16.msra.mxu0 0
    %1252 = vmatprep.subr.bf16.mxu0 0
    %1253 = vmatpush1.bf16.msra.mxu0 0
    %1254 = vmatprep.subr.bf16.mxu0 0
    %1255 = vmatpush1.bf16.msra.mxu0 0
    %1256 = vmatprep.mubr.bf16.mxu0 0
    %1257 = vmatmul.mubr.bf16.gmra.mrb[0].mxu0 %v1222
    %v1258 = vpop.f32.mrb[0].mxu0
    %v1259 = vadd.f32 0.0, %v1258
    %v1260 = vpop.f32.mrb[0].mxu0
    %v1261 = vpop.f32.mrb[0].mxu0
    %v1262 = vpop.f32.mrb[0].mxu0
    %1263 = vdwg.mxu0
    %v1264 = vpack.c.bf16 %v1111, %v1111
    %v1266 = vsel %vm575, %v1264, 0
    %1268 = vmatprep.subr.bf16.mxu0 0
    %1269 = vmatpush1.bf16.msra.mxu0 %v1129
    %1270 = vmatprep.subr.bf16.mxu0 0
    %1271 = vmatpush1.bf16.msra.mxu0 %v1130
    %1272 = vmatprep.subr.bf16.mxu0 0
    %1273 = vmatpush1.bf16.msra.mxu0 0
    %1274 = vmatprep.subr.bf16.mxu0 0
    %1275 = vmatpush1.bf16.msra.mxu0 0
    %1276 = vmatprep.subr.bf16.mxu0 0
    %1277 = vmatpush1.bf16.msra.mxu0 0
    %1278 = vmatprep.subr.bf16.mxu0 0
    %1279 = vmatpush1.bf16.msra.mxu0 0
    %1280 = vmatprep.subr.bf16.mxu0 0
    %1281 = vmatpush1.bf16.msra.mxu0 0
    %1282 = vmatprep.subr.bf16.mxu0 0
    %1283 = vmatpush1.bf16.msra.mxu0 0
    %1284 = vmatprep.subr.bf16.mxu0 0
    %1285 = vmatpush1.bf16.msra.mxu0 0
    %1286 = vmatprep.subr.bf16.mxu0 0
    %1287 = vmatpush1.bf16.msra.mxu0 0
    %1288 = vmatprep.subr.bf16.mxu0 0
    %1289 = vmatpush1.bf16.msra.mxu0 0
    %1290 = vmatprep.subr.bf16.mxu0 0
    %1291 = vmatpush1.bf16.msra.mxu0 0
    %1292 = vmatprep.subr.bf16.mxu0 0
    %1293 = vmatpush1.bf16.msra.mxu0 0
    %1294 = vmatprep.subr.bf16.mxu0 0
    %1295 = vmatpush1.bf16.msra.mxu0 0
    %1296 = vmatprep.subr.bf16.mxu0 0
    %1297 = vmatpush1.bf16.msra.mxu0 0
    %1298 = vmatprep.subr.bf16.mxu0 0
    %1299 = vmatpush1.bf16.msra.mxu0 0
    %1300 = vmatprep.mubr.bf16.mxu0 0
    %1301 = vmatmul.mubr.bf16.gmra.mrb[0].mxu0 %v1266
    %v1302 = vpop.f32.mrb[0].mxu0
    %v1303 = vadd.f32 0.0, %v1302
    %v1304 = vpop.f32.mrb[0].mxu0
    %v1305 = vpop.f32.mrb[0].mxu0
    %v1306 = vpop.f32.mrb[0].mxu0
    %1307 = vdwg.mxu0
    %v1308 = vpack.c.bf16 %v1112, %v1112
    %v1310 = vsel %vm575, %v1308, 0
    %1312 = vmatprep.subr.bf16.mxu0 0
    %1313 = vmatpush1.bf16.msra.mxu0 %v1129
    %1314 = vmatprep.subr.bf16.mxu0 0
    %1315 = vmatpush1.bf16.msra.mxu0 %v1130
    %1316 = vmatprep.subr.bf16.mxu0 0
    %1317 = vmatpush1.bf16.msra.mxu0 0
    %1318 = vmatprep.subr.bf16.mxu0 0
    %1319 = vmatpush1.bf16.msra.mxu0 0
    %1320 = vmatprep.subr.bf16.mxu0 0
    %1321 = vmatpush1.bf16.msra.mxu0 0
    %1322 = vmatprep.subr.bf16.mxu0 0
    %1323 = vmatpush1.bf16.msra.mxu0 0
    %1324 = vmatprep.subr.bf16.mxu0 0
    %1325 = vmatpush1.bf16.msra.mxu0 0
    %1326 = vmatprep.subr.bf16.mxu0 0
    %1327 = vmatpush1.bf16.msra.mxu0 0
    %1328 = vmatprep.subr.bf16.mxu0 0
    %1329 = vmatpush1.bf16.msra.mxu0 0
    %1330 = vmatprep.subr.bf16.mxu0 0
    %1331 = vmatpush1.bf16.msra.mxu0 0
    %1332 = vmatprep.subr.bf16.mxu0 0
    %1333 = vmatpush1.bf16.msra.mxu0 0
    %1334 = vmatprep.subr.bf16.mxu0 0
    %1335 = vmatpush1.bf16.msra.mxu0 0
    %1336 = vmatprep.subr.bf16.mxu0 0
    %1337 = vmatpush1.bf16.msra.mxu0 0
    %1338 = vmatprep.subr.bf16.mxu0 0
    %1339 = vmatpush1.bf16.msra.mxu0 0
    %1340 = vmatprep.subr.bf16.mxu0 0
    %1341 = vmatpush1.bf16.msra.mxu0 0
    %1342 = vmatprep.subr.bf16.mxu0 0
    %1343 = vmatpush1.bf16.msra.mxu0 0
    %1344 = vmatprep.mubr.bf16.mxu0 0
    %1345 = vmatmul.mubr.bf16.gmra.mrb[0].mxu0 %v1310
    %v1346 = vpop.f32.mrb[0].mxu0
    %v1347 = vadd.f32 0.0, %v1346
    %v1348 = vpop.f32.mrb[0].mxu0
    %v1349 = vpop.f32.mrb[0].mxu0
    %v1350 = vpop.f32.mrb[0].mxu0
    %1351 = vdwg.mxu0
    %v1352 = vpack.c.bf16 %v1113, %v1113
    %v1354 = vsel %vm575, %v1352, 0
    %1356 = vmatprep.subr.bf16.mxu0 0
    %1357 = vmatpush1.bf16.msra.mxu0 %v1129
    %1358 = vmatprep.subr.bf16.mxu0 0
    %1359 = vmatpush1.bf16.msra.mxu0 %v1130
    %1360 = vmatprep.subr.bf16.mxu0 0
    %1361 = vmatpush1.bf16.msra.mxu0 0
    %1362 = vmatprep.subr.bf16.mxu0 0
    %1363 = vmatpush1.bf16.msra.mxu0 0
    %1364 = vmatprep.subr.bf16.mxu0 0
    %1365 = vmatpush1.bf16.msra.mxu0 0
    %1366 = vmatprep.subr.bf16.mxu0 0
    %1367 = vmatpush1.bf16.msra.mxu0 0
    %1368 = vmatprep.subr.bf16.mxu0 0
    %1369 = vmatpush1.bf16.msra.mxu0 0
    %1370 = vmatprep.subr.bf16.mxu0 0
    %1371 = vmatpush1.bf16.msra.mxu0 0
    %1372 = vmatprep.subr.bf16.mxu0 0
    %1373 = vmatpush1.bf16.msra.mxu0 0
    %1374 = vmatprep.subr.bf16.mxu0 0
    %1375 = vmatpush1.bf16.msra.mxu0 0
    %1376 = vmatprep.subr.bf16.mxu0 0
    %1377 = vmatpush1.bf16.msra.mxu0 0
    %1378 = vmatprep.subr.bf16.mxu0 0
    %1379 = vmatpush1.bf16.msra.mxu0 0
    %1380 = vmatprep.subr.bf16.mxu0 0
    %1381 = vmatpush1.bf16.msra.mxu0 0
    %1382 = vmatprep.subr.bf16.mxu0 0
    %1383 = vmatpush1.bf16.msra.mxu0 0
    %1384 = vmatprep.subr.bf16.mxu0 0
    %1385 = vmatpush1.bf16.msra.mxu0 0
    %1386 = vmatprep.subr.bf16.mxu0 0
    %1387 = vmatpush1.bf16.msra.mxu0 0
    %1388 = vmatprep.mubr.bf16.mxu0 0
    %1389 = vmatmul.mubr.bf16.gmra.mrb[0].mxu0 %v1354
    %v1390 = vpop.f32.mrb[0].mxu0
    %v1391 = vadd.f32 0.0, %v1390
    %v1392 = vpop.f32.mrb[0].mxu0
    %v1393 = vpop.f32.mrb[0].mxu0
    %v1394 = vpop.f32.mrb[0].mxu0
    %1395 = vdwg.mxu0
    %v1396 = vpack.c.bf16 %v1114, %v1114
    %v1398 = vsel %vm575, %v1396, 0
    %1400 = vmatprep.subr.bf16.mxu0 0
    %1401 = vmatpush1.bf16.msra.mxu0 %v1129
    %1402 = vmatprep.subr.bf16.mxu0 0
    %1403 = vmatpush1.bf16.msra.mxu0 %v1130
    %1404 = vmatprep.subr.bf16.mxu0 0
    %1405 = vmatpush1.bf16.msra.mxu0 0
    %1406 = vmatprep.subr.bf16.mxu0 0
    %1407 = vmatpush1.bf16.msra.mxu0 0
    %1408 = vmatprep.subr.bf16.mxu0 0
    %1409 = vmatpush1.bf16.msra.mxu0 0
    %1410 = vmatprep.subr.bf16.mxu0 0
    %1411 = vmatpush1.bf16.msra.mxu0 0
    %1412 = vmatprep.subr.bf16.mxu0 0
    %1413 = vmatpush1.bf16.msra.mxu0 0
    %1414 = vmatprep.subr.bf16.mxu0 0
    %1415 = vmatpush1.bf16.msra.mxu0 0
    %1416 = vmatprep.subr.bf16.mxu0 0
    %1417 = vmatpush1.bf16.msra.mxu0 0
    %1418 = vmatprep.subr.bf16.mxu0 0
    %1419 = vmatpush1.bf16.msra.mxu0 0
    %1420 = vmatprep.subr.bf16.mxu0 0
    %1421 = vmatpush1.bf16.msra.mxu0 0
    %1422 = vmatprep.subr.bf16.mxu0 0
    %1423 = vmatpush1.bf16.msra.mxu0 0
    %1424 = vmatprep.subr.bf16.mxu0 0
    %1425 = vmatpush1.bf16.msra.mxu0 0
    %1426 = vmatprep.subr.bf16.mxu0 0
    %1427 = vmatpush1.bf16.msra.mxu0 0
    %1428 = vmatprep.subr.bf16.mxu0 0
    %1429 = vmatpush1.bf16.msra.mxu0 0
    %1430 = vmatprep.subr.bf16.mxu0 0
    %1431 = vmatpush1.bf16.msra.mxu0 0
    %1432 = vmatprep.mubr.bf16.mxu0 0
    %1433 = vmatmul.mubr.bf16.gmra.mrb[0].mxu0 %v1398
    %v1434 = vpop.f32.mrb[0].mxu0
    %v1435 = vadd.f32 0.0, %v1434
    %v1436 = vpop.f32.mrb[0].mxu0
    %v1437 = vpop.f32.mrb[0].mxu0
    %v1438 = vpop.f32.mrb[0].mxu0
    %1439 = vdwg.mxu0
    %v1440 = vpack.c.bf16 %v1115, %v1115
    %v1442 = vsel %vm575, %v1440, 0
    %1444 = vmatprep.subr.bf16.mxu0 0
    %1445 = vmatpush1.bf16.msra.mxu0 %v1129
    %1446 = vmatprep.subr.bf16.mxu0 0
    %1447 = vmatpush1.bf16.msra.mxu0 %v1130
    %1448 = vmatprep.subr.bf16.mxu0 0
    %1449 = vmatpush1.bf16.msra.mxu0 0
    %1450 = vmatprep.subr.bf16.mxu0 0
    %1451 = vmatpush1.bf16.msra.mxu0 0
    %1452 = vmatprep.subr.bf16.mxu0 0
    %1453 = vmatpush1.bf16.msra.mxu0 0
    %1454 = vmatprep.subr.bf16.mxu0 0
    %1455 = vmatpush1.bf16.msra.mxu0 0
    %1456 = vmatprep.subr.bf16.mxu0 0
    %1457 = vmatpush1.bf16.msra.mxu0 0
    %1458 = vmatprep.subr.bf16.mxu0 0
    %1459 = vmatpush1.bf16.msra.mxu0 0
    %1460 = vmatprep.subr.bf16.mxu0 0
    %1461 = vmatpush1.bf16.msra.mxu0 0
    %1462 = vmatprep.subr.bf16.mxu0 0
    %1463 = vmatpush1.bf16.msra.mxu0 0
    %1464 = vmatprep.subr.bf16.mxu0 0
    %1465 = vmatpush1.bf16.msra.mxu0 0
    %1466 = vmatprep.subr.bf16.mxu0 0
    %1467 = vmatpush1.bf16.msra.mxu0 0
    %1468 = vmatprep.subr.bf16.mxu0 0
    %1469 = vmatpush1.bf16.msra.mxu0 0
    %1470 = vmatprep.subr.bf16.mxu0 0
    %1471 = vmatpush1.bf16.msra.mxu0 0
    %1472 = vmatprep.subr.bf16.mxu0 0
    %1473 = vmatpush1.bf16.msra.mxu0 0
    %1474 = vmatprep.subr.bf16.mxu0 0
    %1475 = vmatpush1.bf16.msra.mxu0 0
    %1476 = vmatprep.mubr.bf16.mxu0 0
    %1477 = vmatmul.mubr.bf16.gmra.mrb[0].mxu0 %v1442
    %v1478 = vpop.f32.mrb[0].mxu0
    %v1479 = vadd.f32 0.0, %v1478
    %v1480 = vpop.f32.mrb[0].mxu0
    %v1481 = vpop.f32.mrb[0].mxu0
    %v1482 = vpop.f32.mrb[0].mxu0
    %1483 = vdwg.mxu0
    %v1484 = vsel %vm76, %v1171, %v1479
    %v1485 = vlaneseq
    %v1486 = vshrl.u32 %v1485, 7
    %v1487 = vsub.s32 1, %v1486
    %v1488 = vrot.slane %v61, %v1487
    %v1489 = vadd.f32 %v1484, %v1488
    %v1490 = vsel %vm76, %v1215, %v1435
    %v1491 = vadd.f32 %v1490, %v1488
    %v1492 = vsel %vm76, %v1259, %v1391
    %v1493 = vadd.f32 %v1492, %v1488
    %v1494 = vsel %vm76, %v1303, %v1347
    %v1495 = vadd.f32 %v1494, %v1488
    %v1496 = vsel %vm76, %v1347, %v1303
    %v1497 = vadd.f32 %v1496, %v1488
    %v1498 = vsel %vm76, %v1391, %v1259
    %v1499 = vadd.f32 %v1498, %v1488
    %v1500 = vsel %vm76, %v1435, %v1215
    %v1501 = vadd.f32 %v1500, %v1488
    %v1502 = vsel %vm76, %v1479, %v1171
    %v1503 = vadd.f32 %v1502, %v1488
    %v1504 = vld [vmem:[%s5] sm:$0xf]
    %v1505 = vld [vmem:[%s5 + $0x4] sm:$0xf]
    %v1506 = vld [vmem:[%s5 + $0x8] sm:$0xf]
    %v1507 = vld [vmem:[%s5 + $0xc] sm:$0xf]
    %v1508 = vxor.u32 %v1489, 2147483648
    %v1509 = vmul.f32 %v1508, 1.442695
    %v1510 = vpow.pop %v1509
    %v1511 = vadd.f32 %v1510, 1.0
    %v1512 = vrcp.pop %v1511
    %v1513 = vmul.f32 1.0, %v1512
    %v1514 = vtanh.pop %v1489
    %v1515 = vmul.f32 %v1513, 0.0
    %1517 = vrot.lane.b32.xlu0 %v1514, 64
    %v1518 = vpop.permute.xlu0 %1517
    %v1520 = vmul.f32 %v1513, %v1518
    %1522 = vrot.lane.b32.xlu0 %v1520, 32
    %v1523 = vpop.permute.xlu0 %1522
    %v1525 = vadd.f32 %v1515, %v1523
    %v1526 = vtanh.pop %v1525
    %1528 = vrot.lane.b32.xlu0 %v1526, 64
    %v1529 = vpop.permute.xlu0 %1528
    %v1531 = vmul.f32 %v1513, %v1529
    %v1532 = vpack.c.bf16 %v1531, %v1531
    %1534 = vrot.lane.b32.xlu0 %v1532, 32
    %v1535 = vpop.permute.xlu0 %1534
    %v1540 = vunpack.c.l.b16 %v1504
    %v1541 = vunpack.c.l.b16 %v1505
    %v1542 = vunpack.c.l.b16 %v1506
    %v1543 = vunpack.c.l.b16 %v1507
    %v1544 = vpack.c.b16 %v1541, %v1540
    %v1545 = vpack.c.b16 %v1543, %v1542
    %v1549 = vsel %vm575, %v1535, 0
    %1551 = vmatprep.subr.bf16.mxu0 0
    %1552 = vmatpush1.bf16.msra.mxu0 %v1544
    %1553 = vmatprep.subr.bf16.mxu0 0
    %1554 = vmatpush1.bf16.msra.mxu0 %v1545
    %1555 = vmatprep.subr.bf16.mxu0 0
    %1556 = vmatpush1.bf16.msra.mxu0 0
    %1557 = vmatprep.subr.bf16.mxu0 0
    %1558 = vmatpush1.bf16.msra.mxu0 0
    %1559 = vmatprep.subr.bf16.mxu0 0
    %1560 = vmatpush1.bf16.msra.mxu0 0
    %1561 = vmatprep.subr.bf16.mxu0 0
    %1562 = vmatpush1.bf16.msra.mxu0 0
    %1563 = vmatprep.subr.bf16.mxu0 0
    %1564 = vmatpush1.bf16.msra.mxu0 0
    %1565 = vmatprep.subr.bf16.mxu0 0
    %1566 = vmatpush1.bf16.msra.mxu0 0
    %1567 = vmatprep.subr.bf16.mxu0 0
    %1568 = vmatpush1.bf16.msra.mxu0 0
    %1569 = vmatprep.subr.bf16.mxu0 0
    %1570 = vmatpush1.bf16.msra.mxu0 0
    %1571 = vmatprep.subr.bf16.mxu0 0
    %1572 = vmatpush1.bf16.msra.mxu0 0
    %1573 = vmatprep.subr.bf16.mxu0 0
    %1574 = vmatpush1.bf16.msra.mxu0 0
    %1575 = vmatprep.subr.bf16.mxu0 0
    %1576 = vmatpush1.bf16.msra.mxu0 0
    %1577 = vmatprep.subr.bf16.mxu0 0
    %1578 = vmatpush1.bf16.msra.mxu0 0
    %1579 = vmatprep.subr.bf16.mxu0 0
    %1580 = vmatpush1.bf16.msra.mxu0 0
    %1581 = vmatprep.subr.bf16.mxu0 0
    %1582 = vmatpush1.bf16.msra.mxu0 0
    %1583 = vmatprep.mubr.bf16.mxu0 0
    %1584 = vmatmul.mubr.bf16.gmra.mrb[0].mxu0 %v1549
    %v1585 = vpop.f32.mrb[0].mxu0
    %v1586 = vadd.f32 0.0, %v1585
    %v1587 = vpop.f32.mrb[0].mxu0
    %v1588 = vpop.f32.mrb[0].mxu0
    %v1589 = vpop.f32.mrb[0].mxu0
    %1590 = vdwg.mxu0
    %v1591 = vadd.f32 %v1491, %v1586
    %v1592 = vxor.u32 %v1591, 2147483648
    %v1593 = vmul.f32 %v1592, 1.442695
    %v1594 = vpow.pop %v1593
    %v1595 = vadd.f32 %v1594, 1.0
    %v1596 = vrcp.pop %v1595
    %v1597 = vmul.f32 1.0, %v1596
    %v1598 = vtanh.pop %v1591
    %v1599 = vmul.f32 %v1597, %v1525
    %1601 = vrot.lane.b32.xlu0 %v1598, 64
    %v1602 = vpop.permute.xlu0 %1601
    %v1604 = vmul.f32 %v1597, %v1602
    %1606 = vrot.lane.b32.xlu0 %v1604, 32
    %v1607 = vpop.permute.xlu0 %1606
    %v1609 = vadd.f32 %v1599, %v1607
    %v1610 = vtanh.pop %v1609
    %1612 = vrot.lane.b32.xlu0 %v1610, 64
    %v1613 = vpop.permute.xlu0 %1612
    %v1615 = vmul.f32 %v1597, %v1613
    %v1616 = vpack.c.bf16 %v1615, %v1615
    %1618 = vrot.lane.b32.xlu0 %v1616, 32
    %v1619 = vpop.permute.xlu0 %1618
    %v1621 = vsel %vm575, %v1619, 0
    %1623 = vmatprep.subr.bf16.mxu0 0
    %1624 = vmatpush1.bf16.msra.mxu0 %v1544
    %1625 = vmatprep.subr.bf16.mxu0 0
    %1626 = vmatpush1.bf16.msra.mxu0 %v1545
    %1627 = vmatprep.subr.bf16.mxu0 0
    %1628 = vmatpush1.bf16.msra.mxu0 0
    %1629 = vmatprep.subr.bf16.mxu0 0
    %1630 = vmatpush1.bf16.msra.mxu0 0
    %1631 = vmatprep.subr.bf16.mxu0 0
    %1632 = vmatpush1.bf16.msra.mxu0 0
    %1633 = vmatprep.subr.bf16.mxu0 0
    %1634 = vmatpush1.bf16.msra.mxu0 0
    %1635 = vmatprep.subr.bf16.mxu0 0
    %1636 = vmatpush1.bf16.msra.mxu0 0
    %1637 = vmatprep.subr.bf16.mxu0 0
    %1638 = vmatpush1.bf16.msra.mxu0 0
    %1639 = vmatprep.subr.bf16.mxu0 0
    %1640 = vmatpush1.bf16.msra.mxu0 0
    %1641 = vmatprep.subr.bf16.mxu0 0
    %1642 = vmatpush1.bf16.msra.mxu0 0
    %1643 = vmatprep.subr.bf16.mxu0 0
    %1644 = vmatpush1.bf16.msra.mxu0 0
    %1645 = vmatprep.subr.bf16.mxu0 0
    %1646 = vmatpush1.bf16.msra.mxu0 0
    %1647 = vmatprep.subr.bf16.mxu0 0
    %1648 = vmatpush1.bf16.msra.mxu0 0
    %1649 = vmatprep.subr.bf16.mxu0 0
    %1650 = vmatpush1.bf16.msra.mxu0 0
    %1651 = vmatprep.subr.bf16.mxu0 0
    %1652 = vmatpush1.bf16.msra.mxu0 0
    %1653 = vmatprep.subr.bf16.mxu0 0
    %1654 = vmatpush1.bf16.msra.mxu0 0
    %1655 = vmatprep.mubr.bf16.mxu0 0
    %1656 = vmatmul.mubr.bf16.gmra.mrb[0].mxu0 %v1621
    %v1657 = vpop.f32.mrb[0].mxu0
    %v1658 = vadd.f32 0.0, %v1657
    %v1659 = vpop.f32.mrb[0].mxu0
    %v1660 = vpop.f32.mrb[0].mxu0
    %v1661 = vpop.f32.mrb[0].mxu0
    %1662 = vdwg.mxu0
    %v1663 = vadd.f32 %v1493, %v1658
    %v1664 = vxor.u32 %v1663, 2147483648
    %v1665 = vmul.f32 %v1664, 1.442695
    %v1666 = vpow.pop %v1665
    %v1667 = vadd.f32 %v1666, 1.0
    %v1668 = vrcp.pop %v1667
    %v1669 = vmul.f32 1.0, %v1668
    %v1670 = vtanh.pop %v1663
    %v1671 = vmul.f32 %v1669, %v1609
    %1673 = vrot.lane.b32.xlu0 %v1670, 64
    %v1674 = vpop.permute.xlu0 %1673
    %v1676 = vmul.f32 %v1669, %v1674
    %1678 = vrot.lane.b32.xlu0 %v1676, 32
    %v1679 = vpop.permute.xlu0 %1678
    %v1681 = vadd.f32 %v1671, %v1679
    %v1682 = vtanh.pop %v1681
    %1684 = vrot.lane.b32.xlu0 %v1682, 64
    %v1685 = vpop.permute.xlu0 %1684
    %v1687 = vmul.f32 %v1669, %v1685
    %v1688 = vpack.c.bf16 %v1687, %v1687
    %1690 = vrot.lane.b32.xlu0 %v1688, 32
    %v1691 = vpop.permute.xlu0 %1690
    %v1693 = vsel %vm575, %v1691, 0
    %1695 = vmatprep.subr.bf16.mxu0 0
    %1696 = vmatpush1.bf16.msra.mxu0 %v1544
    %1697 = vmatprep.subr.bf16.mxu0 0
    %1698 = vmatpush1.bf16.msra.mxu0 %v1545
    %1699 = vmatprep.subr.bf16.mxu0 0
    %1700 = vmatpush1.bf16.msra.mxu0 0
    %1701 = vmatprep.subr.bf16.mxu0 0
    %1702 = vmatpush1.bf16.msra.mxu0 0
    %1703 = vmatprep.subr.bf16.mxu0 0
    %1704 = vmatpush1.bf16.msra.mxu0 0
    %1705 = vmatprep.subr.bf16.mxu0 0
    %1706 = vmatpush1.bf16.msra.mxu0 0
    %1707 = vmatprep.subr.bf16.mxu0 0
    %1708 = vmatpush1.bf16.msra.mxu0 0
    %1709 = vmatprep.subr.bf16.mxu0 0
    %1710 = vmatpush1.bf16.msra.mxu0 0
    %1711 = vmatprep.subr.bf16.mxu0 0
    %1712 = vmatpush1.bf16.msra.mxu0 0
    %1713 = vmatprep.subr.bf16.mxu0 0
    %1714 = vmatpush1.bf16.msra.mxu0 0
    %1715 = vmatprep.subr.bf16.mxu0 0
    %1716 = vmatpush1.bf16.msra.mxu0 0
    %1717 = vmatprep.subr.bf16.mxu0 0
    %1718 = vmatpush1.bf16.msra.mxu0 0
    %1719 = vmatprep.subr.bf16.mxu0 0
    %1720 = vmatpush1.bf16.msra.mxu0 0
    %1721 = vmatprep.subr.bf16.mxu0 0
    %1722 = vmatpush1.bf16.msra.mxu0 0
    %1723 = vmatprep.subr.bf16.mxu0 0
    %1724 = vmatpush1.bf16.msra.mxu0 0
    %1725 = vmatprep.subr.bf16.mxu0 0
    %1726 = vmatpush1.bf16.msra.mxu0 0
    %1727 = vmatprep.mubr.bf16.mxu0 0
    %1728 = vmatmul.mubr.bf16.gmra.mrb[0].mxu0 %v1693
    %v1729 = vpop.f32.mrb[0].mxu0
    %v1730 = vadd.f32 0.0, %v1729
    %v1731 = vpop.f32.mrb[0].mxu0
    %v1732 = vpop.f32.mrb[0].mxu0
    %v1733 = vpop.f32.mrb[0].mxu0
    %1734 = vdwg.mxu0
    %v1735 = vadd.f32 %v1495, %v1730
    %v1736 = vxor.u32 %v1735, 2147483648
    %v1737 = vmul.f32 %v1736, 1.442695
    %v1738 = vpow.pop %v1737
    %v1739 = vadd.f32 %v1738, 1.0
    %v1740 = vrcp.pop %v1739
    %v1741 = vmul.f32 1.0, %v1740
    %v1742 = vtanh.pop %v1735
    %v1743 = vmul.f32 %v1741, %v1681
    %1745 = vrot.lane.b32.xlu0 %v1742, 64
    %v1746 = vpop.permute.xlu0 %1745
    %v1748 = vmul.f32 %v1741, %v1746
    %1750 = vrot.lane.b32.xlu0 %v1748, 32
    %v1751 = vpop.permute.xlu0 %1750
    %v1753 = vadd.f32 %v1743, %v1751
    %v1754 = vtanh.pop %v1753
    %1756 = vrot.lane.b32.xlu0 %v1754, 64
    %v1757 = vpop.permute.xlu0 %1756
    %v1759 = vmul.f32 %v1741, %v1757
    %v1760 = vpack.c.bf16 %v1759, %v1759
    %1762 = vrot.lane.b32.xlu0 %v1760, 32
    %v1763 = vpop.permute.xlu0 %1762
    %v1765 = vsel %vm575, %v1763, 0
    %1767 = vmatprep.subr.bf16.mxu0 0
    %1768 = vmatpush1.bf16.msra.mxu0 %v1544
    %1769 = vmatprep.subr.bf16.mxu0 0
    %1770 = vmatpush1.bf16.msra.mxu0 %v1545
    %1771 = vmatprep.subr.bf16.mxu0 0
    %1772 = vmatpush1.bf16.msra.mxu0 0
    %1773 = vmatprep.subr.bf16.mxu0 0
    %1774 = vmatpush1.bf16.msra.mxu0 0
    %1775 = vmatprep.subr.bf16.mxu0 0
    %1776 = vmatpush1.bf16.msra.mxu0 0
    %1777 = vmatprep.subr.bf16.mxu0 0
    %1778 = vmatpush1.bf16.msra.mxu0 0
    %1779 = vmatprep.subr.bf16.mxu0 0
    %1780 = vmatpush1.bf16.msra.mxu0 0
    %1781 = vmatprep.subr.bf16.mxu0 0
    %1782 = vmatpush1.bf16.msra.mxu0 0
    %1783 = vmatprep.subr.bf16.mxu0 0
    %1784 = vmatpush1.bf16.msra.mxu0 0
    %1785 = vmatprep.subr.bf16.mxu0 0
    %1786 = vmatpush1.bf16.msra.mxu0 0
    %1787 = vmatprep.subr.bf16.mxu0 0
    %1788 = vmatpush1.bf16.msra.mxu0 0
    %1789 = vmatprep.subr.bf16.mxu0 0
    %1790 = vmatpush1.bf16.msra.mxu0 0
    %1791 = vmatprep.subr.bf16.mxu0 0
    %1792 = vmatpush1.bf16.msra.mxu0 0
    %1793 = vmatprep.subr.bf16.mxu0 0
    %1794 = vmatpush1.bf16.msra.mxu0 0
    %1795 = vmatprep.subr.bf16.mxu0 0
    %1796 = vmatpush1.bf16.msra.mxu0 0
    %1797 = vmatprep.subr.bf16.mxu0 0
    %1798 = vmatpush1.bf16.msra.mxu0 0
    %1799 = vmatprep.mubr.bf16.mxu0 0
    %1800 = vmatmul.mubr.bf16.gmra.mrb[0].mxu0 %v1765
    %v1801 = vpop.f32.mrb[0].mxu0
    %v1802 = vadd.f32 0.0, %v1801
    %v1803 = vpop.f32.mrb[0].mxu0
    %v1804 = vpop.f32.mrb[0].mxu0
    %v1805 = vpop.f32.mrb[0].mxu0
    %1806 = vdwg.mxu0
    %v1807 = vadd.f32 %v1497, %v1802
    %v1808 = vxor.u32 %v1807, 2147483648
    %v1809 = vmul.f32 %v1808, 1.442695
    %v1810 = vpow.pop %v1809
    %v1811 = vadd.f32 %v1810, 1.0
    %v1812 = vrcp.pop %v1811
    %v1813 = vmul.f32 1.0, %v1812
    %v1814 = vtanh.pop %v1807
    %v1815 = vmul.f32 %v1813, %v1753
    %1817 = vrot.lane.b32.xlu0 %v1814, 64
    %v1818 = vpop.permute.xlu0 %1817
    %v1820 = vmul.f32 %v1813, %v1818
    %1822 = vrot.lane.b32.xlu0 %v1820, 32
    %v1823 = vpop.permute.xlu0 %1822
    %v1825 = vadd.f32 %v1815, %v1823
    %v1826 = vtanh.pop %v1825
    %1828 = vrot.lane.b32.xlu0 %v1826, 64
    %v1829 = vpop.permute.xlu0 %1828
    %v1831 = vmul.f32 %v1813, %v1829
    %v1832 = vpack.c.bf16 %v1831, %v1831
    %1834 = vrot.lane.b32.xlu0 %v1832, 32
    %v1835 = vpop.permute.xlu0 %1834
    %v1837 = vsel %vm575, %v1835, 0
    %1839 = vmatprep.subr.bf16.mxu0 0
    %1840 = vmatpush1.bf16.msra.mxu0 %v1544
    %1841 = vmatprep.subr.bf16.mxu0 0
    %1842 = vmatpush1.bf16.msra.mxu0 %v1545
    %1843 = vmatprep.subr.bf16.mxu0 0
    %1844 = vmatpush1.bf16.msra.mxu0 0
    %1845 = vmatprep.subr.bf16.mxu0 0
    %1846 = vmatpush1.bf16.msra.mxu0 0
    %1847 = vmatprep.subr.bf16.mxu0 0
    %1848 = vmatpush1.bf16.msra.mxu0 0
    %1849 = vmatprep.subr.bf16.mxu0 0
    %1850 = vmatpush1.bf16.msra.mxu0 0
    %1851 = vmatprep.subr.bf16.mxu0 0
    %1852 = vmatpush1.bf16.msra.mxu0 0
    %1853 = vmatprep.subr.bf16.mxu0 0
    %1854 = vmatpush1.bf16.msra.mxu0 0
    %1855 = vmatprep.subr.bf16.mxu0 0
    %1856 = vmatpush1.bf16.msra.mxu0 0
    %1857 = vmatprep.subr.bf16.mxu0 0
    %1858 = vmatpush1.bf16.msra.mxu0 0
    %1859 = vmatprep.subr.bf16.mxu0 0
    %1860 = vmatpush1.bf16.msra.mxu0 0
    %1861 = vmatprep.subr.bf16.mxu0 0
    %1862 = vmatpush1.bf16.msra.mxu0 0
    %1863 = vmatprep.subr.bf16.mxu0 0
    %1864 = vmatpush1.bf16.msra.mxu0 0
    %1865 = vmatprep.subr.bf16.mxu0 0
    %1866 = vmatpush1.bf16.msra.mxu0 0
    %1867 = vmatprep.subr.bf16.mxu0 0
    %1868 = vmatpush1.bf16.msra.mxu0 0
    %1869 = vmatprep.subr.bf16.mxu0 0
    %1870 = vmatpush1.bf16.msra.mxu0 0
    %1871 = vmatprep.mubr.bf16.mxu0 0
    %1872 = vmatmul.mubr.bf16.gmra.mrb[0].mxu0 %v1837
    %v1873 = vpop.f32.mrb[0].mxu0
    %v1874 = vadd.f32 0.0, %v1873
    %v1875 = vpop.f32.mrb[0].mxu0
    %v1876 = vpop.f32.mrb[0].mxu0
    %v1877 = vpop.f32.mrb[0].mxu0
    %1878 = vdwg.mxu0
    %v1879 = vadd.f32 %v1499, %v1874
    %v1880 = vxor.u32 %v1879, 2147483648
    %v1881 = vmul.f32 %v1880, 1.442695
    %v1882 = vpow.pop %v1881
    %v1883 = vadd.f32 %v1882, 1.0
    %v1884 = vrcp.pop %v1883
    %v1885 = vmul.f32 1.0, %v1884
    %v1886 = vtanh.pop %v1879
    %v1887 = vmul.f32 %v1885, %v1825
    %1889 = vrot.lane.b32.xlu0 %v1886, 64
    %v1890 = vpop.permute.xlu0 %1889
    %v1892 = vmul.f32 %v1885, %v1890
    %1894 = vrot.lane.b32.xlu0 %v1892, 32
    %v1895 = vpop.permute.xlu0 %1894
    %v1897 = vadd.f32 %v1887, %v1895
    %v1898 = vtanh.pop %v1897
    %1900 = vrot.lane.b32.xlu0 %v1898, 64
    %v1901 = vpop.permute.xlu0 %1900
    %v1903 = vmul.f32 %v1885, %v1901
    %v1904 = vpack.c.bf16 %v1903, %v1903
    %1906 = vrot.lane.b32.xlu0 %v1904, 32
    %v1907 = vpop.permute.xlu0 %1906
    %v1909 = vsel %vm575, %v1907, 0
    %1911 = vmatprep.subr.bf16.mxu0 0
    %1912 = vmatpush1.bf16.msra.mxu0 %v1544
    %1913 = vmatprep.subr.bf16.mxu0 0
    %1914 = vmatpush1.bf16.msra.mxu0 %v1545
    %1915 = vmatprep.subr.bf16.mxu0 0
    %1916 = vmatpush1.bf16.msra.mxu0 0
    %1917 = vmatprep.subr.bf16.mxu0 0
    %1918 = vmatpush1.bf16.msra.mxu0 0
    %1919 = vmatprep.subr.bf16.mxu0 0
    %1920 = vmatpush1.bf16.msra.mxu0 0
    %1921 = vmatprep.subr.bf16.mxu0 0
    %1922 = vmatpush1.bf16.msra.mxu0 0
    %1923 = vmatprep.subr.bf16.mxu0 0
    %1924 = vmatpush1.bf16.msra.mxu0 0
    %1925 = vmatprep.subr.bf16.mxu0 0
    %1926 = vmatpush1.bf16.msra.mxu0 0
    %1927 = vmatprep.subr.bf16.mxu0 0
    %1928 = vmatpush1.bf16.msra.mxu0 0
    %1929 = vmatprep.subr.bf16.mxu0 0
    %1930 = vmatpush1.bf16.msra.mxu0 0
    %1931 = vmatprep.subr.bf16.mxu0 0
    %1932 = vmatpush1.bf16.msra.mxu0 0
    %1933 = vmatprep.subr.bf16.mxu0 0
    %1934 = vmatpush1.bf16.msra.mxu0 0
    %1935 = vmatprep.subr.bf16.mxu0 0
    %1936 = vmatpush1.bf16.msra.mxu0 0
    %1937 = vmatprep.subr.bf16.mxu0 0
    %1938 = vmatpush1.bf16.msra.mxu0 0
    %1939 = vmatprep.subr.bf16.mxu0 0
    %1940 = vmatpush1.bf16.msra.mxu0 0
    %1941 = vmatprep.subr.bf16.mxu0 0
    %1942 = vmatpush1.bf16.msra.mxu0 0
    %1943 = vmatprep.mubr.bf16.mxu0 0
    %1944 = vmatmul.mubr.bf16.gmra.mrb[0].mxu0 %v1909
    %v1945 = vpop.f32.mrb[0].mxu0
    %v1946 = vadd.f32 0.0, %v1945
    %v1947 = vpop.f32.mrb[0].mxu0
    %v1948 = vpop.f32.mrb[0].mxu0
    %v1949 = vpop.f32.mrb[0].mxu0
    %1950 = vdwg.mxu0
    %v1951 = vadd.f32 %v1501, %v1946
    %v1952 = vxor.u32 %v1951, 2147483648
    %v1953 = vmul.f32 %v1952, 1.442695
    %v1954 = vpow.pop %v1953
    %v1955 = vadd.f32 %v1954, 1.0
    %v1956 = vrcp.pop %v1955
    %v1957 = vmul.f32 1.0, %v1956
    %v1958 = vtanh.pop %v1951
    %v1959 = vmul.f32 %v1957, %v1897
    %1961 = vrot.lane.b32.xlu0 %v1958, 64
    %v1962 = vpop.permute.xlu0 %1961
    %v1964 = vmul.f32 %v1957, %v1962
    %1966 = vrot.lane.b32.xlu0 %v1964, 32
    %v1967 = vpop.permute.xlu0 %1966
    %v1969 = vadd.f32 %v1959, %v1967
    %v1970 = vtanh.pop %v1969
    %1972 = vrot.lane.b32.xlu0 %v1970, 64
    %v1973 = vpop.permute.xlu0 %1972
    %v1975 = vmul.f32 %v1957, %v1973
    %v1976 = vpack.c.bf16 %v1975, %v1975
    %1978 = vrot.lane.b32.xlu0 %v1976, 32
    %v1979 = vpop.permute.xlu0 %1978
    %v1981 = vsel %vm575, %v1979, 0
    %1983 = vmatprep.subr.bf16.mxu0 0
    %1984 = vmatpush1.bf16.msra.mxu0 %v1544
    %1985 = vmatprep.subr.bf16.mxu0 0
    %1986 = vmatpush1.bf16.msra.mxu0 %v1545
    %1987 = vmatprep.subr.bf16.mxu0 0
    %1988 = vmatpush1.bf16.msra.mxu0 0
    %1989 = vmatprep.subr.bf16.mxu0 0
    %1990 = vmatpush1.bf16.msra.mxu0 0
    %1991 = vmatprep.subr.bf16.mxu0 0
    %1992 = vmatpush1.bf16.msra.mxu0 0
    %1993 = vmatprep.subr.bf16.mxu0 0
    %1994 = vmatpush1.bf16.msra.mxu0 0
    %1995 = vmatprep.subr.bf16.mxu0 0
    %1996 = vmatpush1.bf16.msra.mxu0 0
    %1997 = vmatprep.subr.bf16.mxu0 0
    %1998 = vmatpush1.bf16.msra.mxu0 0
    %1999 = vmatprep.subr.bf16.mxu0 0
    %2000 = vmatpush1.bf16.msra.mxu0 0
    %2001 = vmatprep.subr.bf16.mxu0 0
    %2002 = vmatpush1.bf16.msra.mxu0 0
    %2003 = vmatprep.subr.bf16.mxu0 0
    %2004 = vmatpush1.bf16.msra.mxu0 0
    %2005 = vmatprep.subr.bf16.mxu0 0
    %2006 = vmatpush1.bf16.msra.mxu0 0
    %2007 = vmatprep.subr.bf16.mxu0 0
    %2008 = vmatpush1.bf16.msra.mxu0 0
    %2009 = vmatprep.subr.bf16.mxu0 0
    %2010 = vmatpush1.bf16.msra.mxu0 0
    %2011 = vmatprep.subr.bf16.mxu0 0
    %2012 = vmatpush1.bf16.msra.mxu0 0
    %2013 = vmatprep.subr.bf16.mxu0 0
    %2014 = vmatpush1.bf16.msra.mxu0 0
    %2015 = vmatprep.mubr.bf16.mxu0 0
    %2016 = vmatmul.mubr.bf16.gmra.mrb[0].mxu0 %v1981
    %v2017 = vpop.f32.mrb[0].mxu0
    %v2018 = vadd.f32 0.0, %v2017
    %v2019 = vpop.f32.mrb[0].mxu0
    %v2020 = vpop.f32.mrb[0].mxu0
    %v2021 = vpop.f32.mrb[0].mxu0
    %2022 = vdwg.mxu0
    %v2023 = vadd.f32 %v1503, %v2018
    %v2024 = vxor.u32 %v2023, 2147483648
    %v2025 = vmul.f32 %v2024, 1.442695
    %v2026 = vpow.pop %v2025
    %v2027 = vadd.f32 %v2026, 1.0
    %v2028 = vrcp.pop %v2027
    %v2029 = vmul.f32 1.0, %v2028
    %v2030 = vtanh.pop %v2023
    %v2031 = vmul.f32 %v2029, %v1969
    %2033 = vrot.lane.b32.xlu0 %v2030, 64
    %v2034 = vpop.permute.xlu0 %2033
    %v2036 = vmul.f32 %v2029, %v2034
    %2038 = vrot.lane.b32.xlu0 %v2036, 32
    %v2039 = vpop.permute.xlu0 %2038
    %v2041 = vadd.f32 %v2031, %v2039
    %v2042 = vtanh.pop %v2041
    %2044 = vrot.lane.b32.xlu0 %v2042, 64
    %v2045 = vpop.permute.xlu0 %2044
    %v2047 = vmul.f32 %v2029, %v2045
    %2049 = vrot.lane.b32.xlu0 %v1531, 32
    %v2050 = vpop.permute.xlu0 %2049
    %2053 = vrot.lane.b32.xlu0 %v2047, 32
    %v2054 = vpop.permute.xlu0 %2053
    %v2056 = vsel %vm77, %v2050, %v2054
    %2058 = vrot.lane.b32.xlu0 %v1615, 32
    %v2059 = vpop.permute.xlu0 %2058
    %2062 = vrot.lane.b32.xlu0 %v1975, 32
    %v2063 = vpop.permute.xlu0 %2062
    %v2065 = vsel %vm77, %v2059, %v2063
    %2067 = vrot.lane.b32.xlu0 %v1687, 32
    %v2068 = vpop.permute.xlu0 %2067
    %2071 = vrot.lane.b32.xlu0 %v1903, 32
    %v2072 = vpop.permute.xlu0 %2071
    %v2074 = vsel %vm77, %v2068, %v2072
    %2076 = vrot.lane.b32.xlu0 %v1759, 32
    %v2077 = vpop.permute.xlu0 %2076
    %2080 = vrot.lane.b32.xlu0 %v1831, 32
    %v2081 = vpop.permute.xlu0 %2080
    %v2083 = vsel %vm77, %v2077, %v2081
    %v2084 = vsel %vm77, %v2081, %v2077
    %v2085 = vsel %vm77, %v2072, %v2068
    %v2086 = vsel %vm77, %v2063, %v2059
    %v2087 = vsel %vm77, %v2054, %v2050
    %v2088 = vlaneseq
    %v2089 = vshrl.u32 %v2088, 7
    %v2090 = vsub.s32 2, %v2089
    %v2091 = vrot.slane %v61, %v2090
    %v2092 = vmul.f32 %v2056, %v2091
    %v2093 = vsel %vm575, %v2092, 0.0
    %2094 = vadd.xlane.f32.xlu0 %v2093
    %v2095 = vpop.xlane.xlu0 %2094
    %v2096 = vlaneseq
    %v2097 = vshrl.u32 %v2096, 7
    %v2098 = vsub.s32 3, %v2097
    %v2099 = vrot.slane %v61, %v2098
    %v2100 = vadd.f32 %v2095, %v2099
    %vm2101 = vcmp.eq.s32.totalorder %v63, 0
    %2103 = vset.pattern.permute.xlu0 0
    %2104 = vperm.xlu0 %2103, %v2100
    %v2105 = vpop.permute.xlu0 %2104
    %v2107 = vsel %vm2101, %v2105, 0.0
    %v2108 = vmul.f32 %v2065, %v2091
    %v2109 = vsel %vm575, %v2108, 0.0
    %2110 = vadd.xlane.f32.xlu0 %v2109
    %v2111 = vpop.xlane.xlu0 %2110
    %v2112 = vadd.f32 %v2111, %v2099
    %vm2113 = vcmp.eq.s32.totalorder %v63, 1
    %2115 = vset.pattern.permute.xlu0 0
    %2116 = vperm.xlu0 %2115, %v2112
    %v2117 = vpop.permute.xlu0 %2116
    %v2119 = vsel %vm2113, %v2117, %v2107
    %v2120 = vmul.f32 %v2074, %v2091
    %v2121 = vsel %vm575, %v2120, 0.0
    %2122 = vadd.xlane.f32.xlu0 %v2121
    %v2123 = vpop.xlane.xlu0 %2122
    %v2124 = vadd.f32 %v2123, %v2099
    %vm2125 = vcmp.eq.s32.totalorder %v63, 2
    %2127 = vset.pattern.permute.xlu0 0
    %2128 = vperm.xlu0 %2127, %v2124
    %v2129 = vpop.permute.xlu0 %2128
    %v2131 = vsel %vm2125, %v2129, %v2119
    %v2132 = vmul.f32 %v2083, %v2091
    %v2133 = vsel %vm575, %v2132, 0.0
    %2134 = vadd.xlane.f32.xlu0 %v2133
    %v2135 = vpop.xlane.xlu0 %2134
    %v2136 = vadd.f32 %v2135, %v2099
    %vm2137 = vcmp.eq.s32.totalorder %v63, 3
    %2139 = vset.pattern.permute.xlu0 0
    %2140 = vperm.xlu0 %2139, %v2136
    %v2141 = vpop.permute.xlu0 %2140
    %v2143 = vsel %vm2137, %v2141, %v2131
    %v2144 = vmul.f32 %v2084, %v2091
    %v2145 = vsel %vm575, %v2144, 0.0
    %2146 = vadd.xlane.f32.xlu0 %v2145
    %v2147 = vpop.xlane.xlu0 %2146
    %v2148 = vadd.f32 %v2147, %v2099
    %vm2149 = vcmp.eq.s32.totalorder %v63, 4
    %2151 = vset.pattern.permute.xlu0 0
    %2152 = vperm.xlu0 %2151, %v2148
    %v2153 = vpop.permute.xlu0 %2152
    %v2155 = vsel %vm2149, %v2153, %v2143
    %v2156 = vmul.f32 %v2085, %v2091
    %v2157 = vsel %vm575, %v2156, 0.0
    %2158 = vadd.xlane.f32.xlu0 %v2157
    %v2159 = vpop.xlane.xlu0 %2158
    %v2160 = vadd.f32 %v2159, %v2099
    %vm2161 = vcmp.eq.s32.totalorder %v63, 5
    %2163 = vset.pattern.permute.xlu0 0
    %2164 = vperm.xlu0 %2163, %v2160
    %v2165 = vpop.permute.xlu0 %2164
    %v2167 = vsel %vm2161, %v2165, %v2155
    %v2168 = vmul.f32 %v2086, %v2091
    %v2169 = vsel %vm575, %v2168, 0.0
    %2170 = vadd.xlane.f32.xlu0 %v2169
    %v2171 = vpop.xlane.xlu0 %2170
    %v2172 = vadd.f32 %v2171, %v2099
    %vm2173 = vcmp.eq.s32.totalorder %v63, 6
    %2175 = vset.pattern.permute.xlu0 0
    %2176 = vperm.xlu0 %2175, %v2172
    %v2177 = vpop.permute.xlu0 %2176
    %v2179 = vsel %vm2173, %v2177, %v2167
    %v2180 = vmul.f32 %v2087, %v2091
    %v2181 = vsel %vm575, %v2180, 0.0
    %2182 = vadd.xlane.f32.xlu0 %v2181
    %v2183 = vpop.xlane.xlu0 %2182
    %v2184 = vadd.f32 %v2183, %v2099
    %vm2185 = vcmp.eq.s32.totalorder %v63, 7
    %2187 = vset.pattern.permute.xlu0 0
    %2188 = vperm.xlu0 %2187, %v2184
    %v2189 = vpop.permute.xlu0 %2188
    %v2191 = vsel %vm2185, %v2189, %v2179
    %v2192 = vld [vmem:[%s1] sm:$0xff]
    %vm2193 = vcmp.gt.s32.totalorder %v2192, 0
    %v2194 = vsel %vm2193, %v2191, -1e+30
    %vm2195 = vcmask 64512
    %v2196 = vsel %vm2195, %v2194, -inf
    %2197 = vmax.xlane.f32.xlu0 %v2196
    %v2198 = vpop.xlane.xlu0 %2197
    %v2199 = vsub.f32 %v2194, %v2198
    %v2200 = vmul.f32 %v2199, 1.442695
    %v2201 = vpow.pop %v2200
    %v2202 = vsel %vm2195, %v2201, 0.0
    %2203 = vadd.xlane.f32.xlu0 %v2202
    %v2204 = vpop.xlane.xlu0 %2203
    %v2205 = vrcp.pop %v2204
    %v2206 = vmul.f32 %v2201, %v2205
    %2208 = vset.pattern.permute.xlu0 0
    %2209 = vperm.xlu0 %2208, %v2206
    %v2210 = vpop.permute.xlu0 %2209
    %v2212 = vmul.f32 %v2210, %v2056
    %v2213 = vadd.f32 %v2212, 0.0
    %2214 = vset.pattern.permute.xlu0 1
    %2215 = vperm.xlu0 %2214, %v2206
    %v2216 = vpop.permute.xlu0 %2215
    %v2218 = vmul.f32 %v2216, %v2065
    %v2219 = vadd.f32 %v2213, %v2218
    %2220 = vset.pattern.permute.xlu0 2
    %2221 = vperm.xlu0 %2220, %v2206
    %v2222 = vpop.permute.xlu0 %2221
    %v2224 = vmul.f32 %v2222, %v2074
    %v2225 = vadd.f32 %v2219, %v2224
    %2226 = vset.pattern.permute.xlu0 3
    %2227 = vperm.xlu0 %2226, %v2206
    %v2228 = vpop.permute.xlu0 %2227
    %v2230 = vmul.f32 %v2228, %v2083
    %v2231 = vadd.f32 %v2225, %v2230
    %2232 = vset.pattern.permute.xlu0 4
    %2233 = vperm.xlu0 %2232, %v2206
    %v2234 = vpop.permute.xlu0 %2233
    %v2236 = vmul.f32 %v2234, %v2084
    %v2237 = vadd.f32 %v2231, %v2236
    %2238 = vset.pattern.permute.xlu0 5
    %2239 = vperm.xlu0 %2238, %v2206
    %v2240 = vpop.permute.xlu0 %2239
    %v2242 = vmul.f32 %v2240, %v2085
    %v2243 = vadd.f32 %v2237, %v2242
    %2244 = vset.pattern.permute.xlu0 6
    %2245 = vperm.xlu0 %2244, %v2206
    %v2246 = vpop.permute.xlu0 %2245
    %v2248 = vmul.f32 %v2246, %v2086
    %v2249 = vadd.f32 %v2243, %v2248
    %2250 = vset.pattern.permute.xlu0 7
    %2251 = vperm.xlu0 %2250, %v2206
    %v2252 = vpop.permute.xlu0 %2251
    %v2254 = vmul.f32 %v2252, %v2087
    %v2255 = vadd.f32 %v2249, %v2254
    %v2256 = vpack.c.bf16 %v2255, %v2255
    %v2257 = vld [vmem:[%s6] sm:$0xf]
    %v2258 = vld [vmem:[%s6 + $0x4] sm:$0xf]
    %v2259 = vld [vmem:[%s6 + $0x8] sm:$0xf]
    %v2260 = vld [vmem:[%s6 + $0xc] sm:$0xf]
    %v2261 = vlaneseq
    %v2262 = vshrl.u32 %v2261, 7
    %v2263 = vsub.s32 4, %v2262
    %v2264 = vrot.slane %v61, %v2263
    %v2269 = vunpack.c.l.b16 %v2257
    %v2270 = vunpack.c.l.b16 %v2258
    %v2271 = vunpack.c.l.b16 %v2259
    %v2272 = vunpack.c.l.b16 %v2260
    %v2273 = vpack.c.b16 %v2270, %v2269
    %v2274 = vpack.c.b16 %v2272, %v2271
    %v2278 = vsel %vm575, %v2256, 0
    %2280 = vmatprep.subr.bf16.mxu0 0
    %2281 = vmatpush1.bf16.msra.mxu0 %v2273
    %2282 = vmatprep.subr.bf16.mxu0 0
    %2283 = vmatpush1.bf16.msra.mxu0 %v2274
    %2284 = vmatprep.subr.bf16.mxu0 0
    %2285 = vmatpush1.bf16.msra.mxu0 0
    %2286 = vmatprep.subr.bf16.mxu0 0
    %2287 = vmatpush1.bf16.msra.mxu0 0
    %2288 = vmatprep.subr.bf16.mxu0 0
    %2289 = vmatpush1.bf16.msra.mxu0 0
    %2290 = vmatprep.subr.bf16.mxu0 0
    %2291 = vmatpush1.bf16.msra.mxu0 0
    %2292 = vmatprep.subr.bf16.mxu0 0
    %2293 = vmatpush1.bf16.msra.mxu0 0
    %2294 = vmatprep.subr.bf16.mxu0 0
    %2295 = vmatpush1.bf16.msra.mxu0 0
    %2296 = vmatprep.subr.bf16.mxu0 0
    %2297 = vmatpush1.bf16.msra.mxu0 0
    %2298 = vmatprep.subr.bf16.mxu0 0
    %2299 = vmatpush1.bf16.msra.mxu0 0
    %2300 = vmatprep.subr.bf16.mxu0 0
    %2301 = vmatpush1.bf16.msra.mxu0 0
    %2302 = vmatprep.subr.bf16.mxu0 0
    %2303 = vmatpush1.bf16.msra.mxu0 0
    %2304 = vmatprep.subr.bf16.mxu0 0
    %2305 = vmatpush1.bf16.msra.mxu0 0
    %2306 = vmatprep.subr.bf16.mxu0 0
    %2307 = vmatpush1.bf16.msra.mxu0 0
    %2308 = vmatprep.subr.bf16.mxu0 0
    %2309 = vmatpush1.bf16.msra.mxu0 0
    %2310 = vmatprep.subr.bf16.mxu0 0
    %2311 = vmatpush1.bf16.msra.mxu0 0
    %2312 = vmatprep.mubr.bf16.mxu0 0
    %2313 = vmatmul.mubr.bf16.gmra.mrb[0].mxu0 %v2278
    %v2314 = vpop.f32.mrb[0].mxu0
    %v2315 = vadd.f32 %v2264, %v2314
    %v2316 = vpop.f32.mrb[0].mxu0
    %v2317 = vpop.f32.mrb[0].mxu0
    %v2318 = vpop.f32.mrb[0].mxu0
    %2319 = vdwg.mxu0
    %v2320 = vmax.f32 %v2315, 0.0
    %vm2321 = vcmask 130048
    %v2322 = vsel %vm2321, %v2320, 0.0
    %2323 = vadd.xlane.f32.xlu0 %v2322
    %v2324 = vpop.xlane.xlu0 %2323
    %v2325 = vrcp.pop 16.0
    %v2326 = vmul.f32 %v2324, %v2325
    %v2327 = vsub.f32 %v2320, %v2326
    %v2328 = vmul.f32 %v2327, %v2327
    %v2329 = vsel %vm2321, %v2328, 0.0
    %2330 = vadd.xlane.f32.xlu0 %v2329
    %v2331 = vpop.xlane.xlu0 %2330
    %v2332 = vmul.f32 %v2331, %v2325
    %v2333 = vadd.f32 %v2332, 1e-05
    %v2334 = vrsqrt.pop %v2333
    %v2335 = vmul.f32 %v2327, %v2334
    %v2336 = vlaneseq
    %v2337 = vshrl.u32 %v2336, 7
    %v2338 = vsub.s32 5, %v2337
    %v2339 = vrot.slane %v61, %v2338
    %v2340 = vmul.f32 %v2335, %v2339
    %v2341 = vlaneseq
    %v2342 = vshrl.u32 %v2341, 7
    %v2343 = vsub.s32 6, %v2342
    %v2344 = vrot.slane %v61, %v2343
    %v2345 = vadd.f32 %v2340, %v2344
    %v2346 = vpack.c.bf16 %v2345, %v2345
    %v2347 = vld [vmem:[#allocation4] sm:$0xf]
    %v2348 = vld [vmem:[#allocation4 + $0x4] sm:$0xf]
    %v2349 = vlaneseq
    %v2350 = vshrl.u32 %v2349, 7
    %v2351 = vsub.s32 7, %v2350
    %v2352 = vrot.slane %v61, %v2351
    %v2355 = vunpack.c.l.b16 %v2347
    %v2356 = vunpack.c.l.b16 %v2348
    %v2357 = vpack.c.b16 %v2356, %v2355
    %v2360 = vsel %vm2321, %v2346, 0
    %2362 = vmatprep.subr.bf16.mxu0 0
    %2363 = vmatpush1.bf16.msra.mxu0 %v2357
    %2364 = vmatprep.subr.bf16.mxu0 0
    %2365 = vmatpush1.bf16.msra.mxu0 0
    %2366 = vmatprep.subr.bf16.mxu0 0
    %2367 = vmatpush1.bf16.msra.mxu0 0
    %2368 = vmatprep.subr.bf16.mxu0 0
    %2369 = vmatpush1.bf16.msra.mxu0 0
    %2370 = vmatprep.subr.bf16.mxu0 0
    %2371 = vmatpush1.bf16.msra.mxu0 0
    %2372 = vmatprep.subr.bf16.mxu0 0
    %2373 = vmatpush1.bf16.msra.mxu0 0
    %2374 = vmatprep.subr.bf16.mxu0 0
    %2375 = vmatpush1.bf16.msra.mxu0 0
    %2376 = vmatprep.subr.bf16.mxu0 0
    %2377 = vmatpush1.bf16.msra.mxu0 0
    %2378 = vmatprep.subr.bf16.mxu0 0
    %2379 = vmatpush1.bf16.msra.mxu0 0
    %2380 = vmatprep.subr.bf16.mxu0 0
    %2381 = vmatpush1.bf16.msra.mxu0 0
    %2382 = vmatprep.subr.bf16.mxu0 0
    %2383 = vmatpush1.bf16.msra.mxu0 0
    %2384 = vmatprep.subr.bf16.mxu0 0
    %2385 = vmatpush1.bf16.msra.mxu0 0
    %2386 = vmatprep.subr.bf16.mxu0 0
    %2387 = vmatpush1.bf16.msra.mxu0 0
    %2388 = vmatprep.subr.bf16.mxu0 0
    %2389 = vmatpush1.bf16.msra.mxu0 0
    %2390 = vmatprep.subr.bf16.mxu0 0
    %2391 = vmatpush1.bf16.msra.mxu0 0
    %2392 = vmatprep.subr.bf16.mxu0 0
    %2393 = vmatpush1.bf16.msra.mxu0 0
    %2394 = vmatprep.mubr.bf16.mxu0 0
    %2395 = vmatmul.mubr.bf16.gmra.mrb[0].mxu0 %v2360
    %v2396 = vpop.f32.mrb[0].mxu0
    %v2397 = vadd.f32 %v2352, %v2396
    %v2398 = vpop.f32.mrb[0].mxu0
    %v2399 = vpop.f32.mrb[0].mxu0
    %v2400 = vpop.f32.mrb[0].mxu0
    %2401 = vdwg.mxu0
    %2402 = vst [vmem:[%s9] sm:$0xff] %v2397
    // Predicated region
    $region46: #{lstm_model_forward.1} parent=1 // pred_check
      _
    $region47: #{lstm_model_forward.1} parent=1 // pred_check_branch
      %2404 = sbr.rel (0) target = $region49
    $region48: #{lstm_model_forward.1} parent=1 // pred_region
      _
    $region49: #{lstm_model_forward.1} parent=1 // pred_fallthru
      _
    // Predicated region
    $region50: #{lstm_model_forward.1} parent=1 // pred_check
      _
    $region51: #{lstm_model_forward.1} parent=1 // pred_check_branch
      %2406 = sbr.rel (0) target = $region53
    $region52: #{lstm_model_forward.1} parent=1 // pred_region
      _
    $region53: #{lstm_model_forward.1} parent=1 // pred_fallthru
      _
    %2407 = vsyncpa [#allocation3], 1
    %2408 = vsyncpa [#allocation5], 1

</llo_original>
